<compile_context>
chip_gen: v6e
topology: v6e:2x2x1
jax: 0.10.0
libtpu: 0.0.40
codegen_flags: <defaults>
</compile_context>

<pallas_src>
import math

import jax
import jax.numpy as jnp
from jax.experimental import pallas as pl
from jax.experimental.pallas import tpu as pltpu

# ---------------- small, deterministic config ----------------
VOCAB = 64
EOS_ID = 1
N_LAYER = 2
N_HEAD = 2
N_EMBD = 32
HEAD_DIM = N_EMBD // N_HEAD
BLOCK_SIZE = 16           # config.block_size (only bounds positions)


# ---------------- in-kernel helpers ----------------
def _layernorm(x, g, eps=1e-5):
    # LayerNorm(n_embd, bias=False): weight only, eps = 1e-5 (torch default).
    mu = jnp.mean(x, axis=-1, keepdims=True)
    xc = x - mu
    var = jnp.mean(xc * xc, axis=-1, keepdims=True)
    return xc * jax.lax.rsqrt(var + eps) * g


def _gelu_tanh(x):
    # TODO(synk): torch nn.GELU default is exact erf GELU; tanh approximation used here.
    return 0.5 * x * (1.0 + jnp.tanh(0.7978845608028654 * (x + 0.044715 * x * x * x)))


# ---------------- the fused encoder-stack kernel ----------------
def _bst_stack_kernel(x_ref, cos_ref, sin_ref, mask_ref,
                      ln1_ref, wqkvr_ref, wproj_ref,
                      ln2_ref, wfc_ref, wmlp_ref,
                      lnf_ref, o_ref):
    """Runs E encoders (E = leading dim of the encoder-indexed refs).

    v7x:     grid=(2,), E=1 -> each TensorCore runs one encoder (fwd / bwd).
    v5e/v6e: grid=(1,), E=2 -> both encoders unrolled inside a single grid step.
    Direction (tril/triu) + document + batch isolation are all encoded in the
    precomputed additive mask, so the body is direction-agnostic.
    """
    E, BT, C = o_ref.shape
    n_layer = ln1_ref.shape[1]
    hd = HEAD_DIM
    nh = C // hd
    scale = 1.0 / math.sqrt(hd)

    for e in range(E):                                   # statically unrolled encoders
        x = x_ref[...]                                   # [BT, C] f32, stays in VMEM
        cosC = cos_ref[e]                                # [BT, C] full-width cos (tiled per head)
        sinC = sin_ref[e]                                # [BT, C] signed sin (first half negated)
        neg = mask_ref[e]                                # [BT, BT] additive mask (0 / -1e30)

        for l in range(n_layer):                         # unrolled: weights indexed statically
            # ---------------- attention ----------------
            xn = _layernorm(x, ln1_ref[e, l])            # [BT, C] f32
            # [BT, 5C] = [q, k, v, q_half_swapped, k_half_swapped] (swap baked into weights)
            qkvr = jnp.dot(xn.astype(jnp.bfloat16), wqkvr_ref[e, l],
                           preferred_element_type=jnp.float32)
            # rotate-half RoPE as pure element-wise math (no slices/concats/rolls)
            q_all = qkvr[:, 0:C] * cosC + qkvr[:, 3 * C:4 * C] * sinC
            k_all = qkvr[:, C:2 * C] * cosC + qkvr[:, 4 * C:5 * C] * sinC
            v_all = qkvr[:, 2 * C:3 * C]

            w_p = wproj_ref[e, l]                        # [C, C] bf16
            att = jnp.zeros((BT, C), jnp.float32)        # per-head projection accumulator
            for h in range(nh):                          # unrolled heads (nh=2)
                sl = slice(h * hd, (h + 1) * hd)
                qh = q_all[:, sl].astype(jnp.bfloat16)   # [BT, hd]
                kh = k_all[:, sl].astype(jnp.bfloat16)
                vh = v_all[:, sl].astype(jnp.bfloat16)
                # flat [BT, BT] scores; batch/document/direction isolation via `neg`
                s = jnp.einsum('qd,kd->qk', qh, kh,
                               preferred_element_type=jnp.float32)
                s = s * scale + neg
                s = s - jnp.max(s, axis=-1, keepdims=True)
                p = jnp.exp(s)
                p = p * pl.reciprocal(jnp.sum(p, axis=-1, keepdims=True), approx=True)
                oh = jnp.dot(p.astype(jnp.bfloat16), vh,
                             preferred_element_type=jnp.float32)       # [BT, hd]
                att = att + jnp.dot(oh.astype(jnp.bfloat16), w_p[sl, :],
                                    preferred_element_type=jnp.float32)  # accumulate projection
            x = x + att

            # ---------------- MLP ----------------
            xn = _layernorm(x, ln2_ref[e, l])
            hmid = jnp.dot(xn.astype(jnp.bfloat16), wfc_ref[e, l],
                           preferred_element_type=jnp.float32)          # [BT, 4C]
            hmid = _gelu_tanh(hmid)
            x = x + jnp.dot(hmid.astype(jnp.bfloat16), wmlp_ref[e, l],
                            preferred_element_type=jnp.float32)         # [BT, C]

        o_ref[e] = _layernorm(x, lnf_ref[e])             # final LayerNorm


# ---------------- glue: document-relative positions (plain JAX, outside kernel) --------
def _doc_relative_positions(tokens, eos_id):
    # EOS -> 0; otherwise 1,2,3,... counted from the previous EOS.
    B, T = tokens.shape
    idx = jnp.arange(T)
    eos = tokens == eos_id
    marker = jnp.where(eos, idx[None, :], -1)
    last_eos = jax.lax.cummax(marker, axis=1)
    return idx[None, :] - last_eos


def create_position_indices(tokens, eos_id):
    pos_f = _doc_relative_positions(tokens, eos_id)
    pos_b = jnp.flip(_doc_relative_positions(jnp.flip(tokens, axis=1), eos_id), axis=1)
    return pos_f, pos_b


def _use_parallel_encoder_grid():
    # v7x has 2 TensorCores/chip: shard the fwd/bwd encoders across them via grid=(2,).
    # Single-TC chips (v5e/v6e): run both encoders in one grid step instead (a 2-step
    # grid would just be a serial loop paying per-step overhead).
    try:
        kind = jax.devices()[0].device_kind.lower()
    except Exception:
        return False
    return ("v7" in kind) or ("tpu7" in kind)


# ---------------- parameters (deterministic synthetic init, bf16 weights) ----------------
def init_params(key):
    k_e, k_qkv, k_proj, k_fc, k_mlp = jax.random.split(key, 5)
    C = N_EMBD
    half = HEAD_DIM // 2

    def draw(k, shape):
        return 0.02 * jax.random.normal(k, shape, jnp.float32)

    # nn.Linear(C, 3C) per layer/encoder, split into q/k/v column blocks.
    w_qkv = draw(k_qkv, (2, N_LAYER, C, 3 * C))
    w_q, w_k, w_v = w_qkv[..., :C], w_qkv[..., C:2 * C], w_qkv[..., 2 * C:]

    def swap_halves(w):
        # Swap the two halves of each head's output columns: bakes rotate-half's
        # lane permutation into the weight so in-kernel RoPE is pure element-wise math.
        w6 = w.reshape(2, N_LAYER, C, N_HEAD, 2, half)
        return jnp.flip(w6, axis=4).reshape(2, N_LAYER, C, C)

    # [2, L, C, 5C] = [Wq, Wk, Wv, Wq_halfswap, Wk_halfswap], bf16 (MXU-native).
    w_qkvr = jnp.concatenate([w_q, w_k, w_v, swap_halves(w_q), swap_halves(w_k)],
                             axis=-1).astype(jnp.bfloat16)

    # Leading axis of 2 = [forward encoder, backward encoder]; next axis = layer.
    return dict(
        wte=draw(k_e, (VOCAB, C)),
        ln1_g=jnp.ones((2, N_LAYER, 1, C), jnp.float32),
        w_qkvr=w_qkvr,
        w_attn_proj=draw(k_proj, (2, N_LAYER, C, C)).astype(jnp.bfloat16),
        ln2_g=jnp.ones((2, N_LAYER, 1, C), jnp.float32),
        w_fc=draw(k_fc, (2, N_LAYER, C, 4 * C)).astype(jnp.bfloat16),
        w_mlp_proj=draw(k_mlp, (2, N_LAYER, 4 * C, C)).astype(jnp.bfloat16),
        ln_f_g=jnp.ones((2, 1, C), jnp.float32),
    )


# ---------------- forward: both encoders in ONE pallas_call ----------------
def transformer_encoder_forward(params, tokens):
    B, T = tokens.shape
    C, hd = N_EMBD, HEAD_DIM
    BT = B * T

    # ---- cheap glue (runs once per call): embedding gather, masks, RoPE tables ----
    x_emb = jnp.take(params['wte'], tokens, axis=0).reshape(BT, C)

    # Additive masks [2, BT, BT] (~2 KB): document + direction + batch isolation,
    # so the kernel can use flat [BT, BT] attention with a single add.
    eos = (tokens == EOS_ID).astype(jnp.int32)
    doc_f = jnp.cumsum(eos, axis=1)                                    # forward doc ids
    doc_b = jnp.roll(doc_f, 1, axis=1).at[:, 0].set(0)                 # backward doc ids
    boff = jnp.arange(B, dtype=jnp.int32)[:, None] * (T + 2)           # batch offset >> max doc id
    gid_f = (doc_f + boff).reshape(BT)
    gid_b = (doc_b + boff).reshape(BT)
    pos_in_seq = jnp.tile(jnp.arange(T, dtype=jnp.int32), B)           # [BT]
    tril = pos_in_seq[:, None] >= pos_in_seq[None, :]
    triu = pos_in_seq[:, None] <= pos_in_seq[None, :]
    allow_f = (gid_f[:, None] == gid_f[None, :]) & tril
    allow_b = (gid_b[:, None] == gid_b[None, :]) & triu
    neg_mask = jnp.stack([jnp.where(allow_f, 0.0, -1e30),
                          jnp.where(allow_b, 0.0, -1e30)], axis=0).astype(jnp.float32)

    # Full-width signed RoPE tables [2, BT, C] (cos duplicated, sin with first half
    # negated, tiled across heads) -> in-kernel RoPE is a single fused mul-add.
    pos_f, pos_b = create_position_indices(tokens, EOS_ID)
    pos = jnp.stack([pos_f, pos_b], axis=0).astype(jnp.float32).reshape(2, BT, 1)
    inv_freq = 1.0 / (10000.0 ** (jnp.arange(0, hd, 2, dtype=jnp.float32) / hd))
    ang = pos * inv_freq[None, None, :]                                # [2, BT, hd/2]
    cos_h, sin_h = jnp.cos(ang), jnp.sin(ang)
    cos_hd = jnp.concatenate([cos_h, cos_h], axis=-1)                  # [2, BT, hd]
    sin_hd = jnp.concatenate([-sin_h, sin_h], axis=-1)                 # signed rotate-half
    cosC = jnp.tile(cos_hd, (1, 1, N_HEAD))                            # [2, BT, C]
    sinC = jnp.tile(sin_hd, (1, 1, N_HEAD))

    # Encoder grid: parallel across v7x's 2 TCs, collapsed on single-TC chips.
    e_blk = 1 if _use_parallel_encoder_grid() else 2
    grid = (2 // e_blk,)

    out = pl.pallas_call(
        _bst_stack_kernel,
        out_shape=jax.ShapeDtypeStruct((2, BT, C), jnp.float32),
        grid=grid,
        in_specs=[
            pl.BlockSpec((BT, C), lambda g: (0, 0)),                             # shared embeddings
            pl.BlockSpec((e_blk, BT, C), lambda g: (g, 0, 0)),                   # cos (full width)
            pl.BlockSpec((e_blk, BT, C), lambda g: (g, 0, 0)),                   # sin (signed)
            pl.BlockSpec((e_blk, BT, BT), lambda g: (g, 0, 0)),                  # additive mask
            pl.BlockSpec((e_blk, N_LAYER, 1, C), lambda g: (g, 0, 0, 0)),        # ln1 gamma
            pl.BlockSpec((e_blk, N_LAYER, C, 5 * C), lambda g: (g, 0, 0, 0)),    # W_qkv(+swapped) bf16
            pl.BlockSpec((e_blk, N_LAYER, C, C), lambda g: (g, 0, 0, 0)),        # W_attn_proj bf16
            pl.BlockSpec((e_blk, N_LAYER, 1, C), lambda g: (g, 0, 0, 0)),        # ln2 gamma
            pl.BlockSpec((e_blk, N_LAYER, C, 4 * C), lambda g: (g, 0, 0, 0)),    # W_fc bf16
            pl.BlockSpec((e_blk, N_LAYER, 4 * C, C), lambda g: (g, 0, 0, 0)),    # W_mlp_proj bf16
            pl.BlockSpec((e_blk, 1, C), lambda g: (g, 0, 0)),                    # final LN gamma
        ],
        out_specs=pl.BlockSpec((e_blk, BT, C), lambda g: (g, 0, 0)),
        compiler_params=pltpu.CompilerParams(
            dimension_semantics=("parallel",)),          # fwd/bwd encoders shard across v7x's 2 TCs
    )(x_emb, cosC, sinC, neg_mask,
      params['ln1_g'], params['w_qkvr'], params['w_attn_proj'],
      params['ln2_g'], params['w_fc'], params['w_mlp_proj'],
      params['ln_f_g'])

    fwd = out[0].reshape(B, T, C)
    bwd = out[1].reshape(B, T, C)
    return fwd, bwd


if __name__ == "__main__":
    key = jax.random.PRNGKey(0)
    k_tok, k_par = jax.random.split(key)

    params = init_params(k_par)

    B, T = 2, 8
    tokens = jax.random.randint(k_tok, (B, T), 0, VOCAB, dtype=jnp.int32)
    tokens = tokens.at[:, 3].set(EOS_ID)   # guarantee a packed-document boundary

    fwd, bwd = jax.jit(transformer_encoder_forward)(params, tokens)
    jax.block_until_ready((fwd, bwd))
    assert fwd.shape == (B, T, N_EMBD) and bwd.shape == (B, T, N_EMBD)
    assert bool(jnp.all(jnp.isfinite(fwd))) and bool(jnp.all(jnp.isfinite(bwd)))
    print("KERNEL_OK")
</pallas_src>

<mosaic_0001>
module attributes {stable_mosaic.version = 11 : i64} {
  func.func @_bst_stack_kernel(%arg0: i32, %arg1: memref<16x32xf32, #tpu.memory_space<vmem>>, %arg2: memref<2x16x32xf32, #tpu.memory_space<vmem>>, %arg3: memref<2x16x32xf32, #tpu.memory_space<vmem>>, %arg4: memref<2x16x16xf32, #tpu.memory_space<vmem>>, %arg5: memref<2x2x1x32xf32, #tpu.memory_space<vmem>>, %arg6: memref<2x2x32x160xbf16, #tpu.memory_space<vmem>>, %arg7: memref<2x2x32x32xbf16, #tpu.memory_space<vmem>>, %arg8: memref<2x2x1x32xf32, #tpu.memory_space<vmem>>, %arg9: memref<2x2x32x128xbf16, #tpu.memory_space<vmem>>, %arg10: memref<2x2x128x32xbf16, #tpu.memory_space<vmem>>, %arg11: memref<2x1x32xf32, #tpu.memory_space<vmem>>, %arg12: memref<2x16x32xf32, #tpu.memory_space<vmem>>) attributes {dimension_semantics = [#tpu.dimension_semantics<parallel>], iteration_bounds = array<i64: 1>, scalar_prefetch = 0 : i64, scratch_operands = 0 : i64, tpu.core_type = #tpu.core_type<tc>, window_params = [{pipeline_mode = #tpu.pipeline_mode<synchronous>, transform_indices = @transform_0, window_bounds = array<i64: 16, 32>}, {transform_indices = @transform_1, window_bounds = array<i64: 2, 16, 32>}, {transform_indices = @transform_2, window_bounds = array<i64: 2, 16, 32>}, {transform_indices = @transform_3, window_bounds = array<i64: 2, 16, 16>}, {transform_indices = @transform_4, window_bounds = array<i64: 2, 2, 1, 32>}, {transform_indices = @transform_5, window_bounds = array<i64: 2, 2, 32, 160>}, {transform_indices = @transform_6, window_bounds = array<i64: 2, 2, 32, 32>}, {transform_indices = @transform_7, window_bounds = array<i64: 2, 2, 1, 32>}, {transform_indices = @transform_8, window_bounds = array<i64: 2, 2, 32, 128>}, {transform_indices = @transform_9, window_bounds = array<i64: 2, 2, 128, 32>}, {transform_indices = @transform_10, window_bounds = array<i64: 2, 1, 32>}, {transform_indices = @transform_11, window_bounds = array<i64: 2, 16, 32>}]} {
    %c0 = arith.constant 0 : index
    %c0_0 = arith.constant 0 : index
    %0 = vector.load %arg1[%c0, %c0_0] : memref<16x32xf32, #tpu.memory_space<vmem>>, vector<16x32xf32>
    %c0_1 = arith.constant 0 : index
    %c0_2 = arith.constant 0 : index
    %c0_3 = arith.constant 0 : index
    %1 = vector.load %arg2[%c0_1, %c0_2, %c0_3] : memref<2x16x32xf32, #tpu.memory_space<vmem>>, vector<1x16x32xf32>
    %2 = vector.shape_cast %1 : vector<1x16x32xf32> to vector<16x32xf32>
    %c0_4 = arith.constant 0 : index
    %c0_5 = arith.constant 0 : index
    %c0_6 = arith.constant 0 : index
    %3 = vector.load %arg3[%c0_4, %c0_5, %c0_6] : memref<2x16x32xf32, #tpu.memory_space<vmem>>, vector<1x16x32xf32>
    %4 = vector.shape_cast %3 : vector<1x16x32xf32> to vector<16x32xf32>
    %c0_7 = arith.constant 0 : index
    %c0_8 = arith.constant 0 : index
    %c0_9 = arith.constant 0 : index
    %5 = vector.load %arg4[%c0_7, %c0_8, %c0_9] : memref<2x16x16xf32, #tpu.memory_space<vmem>>, vector<1x16x16xf32>
    %6 = vector.shape_cast %5 : vector<1x16x16xf32> to vector<16x16xf32>
    %c0_10 = arith.constant 0 : index
    %c0_11 = arith.constant 0 : index
    %c0_12 = arith.constant 0 : index
    %c0_13 = arith.constant 0 : index
    %7 = vector.load %arg5[%c0_10, %c0_11, %c0_12, %c0_13] : memref<2x2x1x32xf32, #tpu.memory_space<vmem>>, vector<1x1x1x32xf32>
    %8 = vector.shape_cast %7 : vector<1x1x1x32xf32> to vector<1x32xf32>
    %cst = arith.constant dense<0.000000e+00> : vector<16xf32>
    %9 = vector.multi_reduction <add>, %0, %cst [1] : vector<16x32xf32> to vector<16xf32>
    %10 = vector.shape_cast %9 : vector<16xf32> to vector<16x1xf32>
    %cst_14 = arith.constant 3.200000e+01 : f32
    %11 = vector.broadcast %cst_14 : f32 to vector<16x1xf32>
    %12 = arith.divf %10, %11 : vector<16x1xf32>
    %13 = vector.broadcast %12 : vector<16x1xf32> to vector<16x32xf32>
    %14 = arith.subf %0, %13 : vector<16x32xf32>
    %15 = arith.mulf %14, %14 : vector<16x32xf32>
    %cst_15 = arith.constant dense<0.000000e+00> : vector<16xf32>
    %16 = vector.multi_reduction <add>, %15, %cst_15 [1] : vector<16x32xf32> to vector<16xf32>
    %17 = vector.shape_cast %16 : vector<16xf32> to vector<16x1xf32>
    %cst_16 = arith.constant 3.200000e+01 : f32
    %18 = vector.broadcast %cst_16 : f32 to vector<16x1xf32>
    %19 = arith.divf %17, %18 : vector<16x1xf32>
    %cst_17 = arith.constant 9.99999974E-6 : f32
    %20 = vector.broadcast %cst_17 : f32 to vector<16x1xf32>
    %21 = arith.addf %19, %20 : vector<16x1xf32>
    %22 = math.rsqrt %21 : vector<16x1xf32>
    %23 = vector.broadcast %22 : vector<16x1xf32> to vector<16x32xf32>
    %24 = arith.mulf %14, %23 : vector<16x32xf32>
    %25 = vector.broadcast %8 : vector<1x32xf32> to vector<16x32xf32>
    %26 = arith.mulf %24, %25 : vector<16x32xf32>
    %27 = arith.truncf %26 : vector<16x32xf32> to vector<16x32xbf16>
    %c0_18 = arith.constant 0 : index
    %c0_19 = arith.constant 0 : index
    %c0_20 = arith.constant 0 : index
    %c0_21 = arith.constant 0 : index
    %28 = vector.load %arg6[%c0_18, %c0_19, %c0_20, %c0_21] : memref<2x2x32x160xbf16, #tpu.memory_space<vmem>>, vector<1x1x32x160xbf16>
    %29 = vector.shape_cast %28 : vector<1x1x32x160xbf16> to vector<32x160xbf16>
    %cst_22 = arith.constant dense<0.000000e+00> : vector<16x160xf32>
    %30 = tpu.matmul %27, %29, %cst_22 {dimension_numbers = #tpu.dot_dimension_numbers<[1], [0], [0], [1], [0, 0, 1, 1], [], []>} : vector<16x32xbf16>, vector<32x160xbf16>, vector<16x160xf32> -> vector<16x160xf32>
    %31 = vector.extract_strided_slice %30 {offsets = [0, 0], sizes = [16, 32], strides = [1, 1]} : vector<16x160xf32> to vector<16x32xf32>
    %32 = arith.mulf %31, %2 : vector<16x32xf32>
    %33 = vector.extract_strided_slice %30 {offsets = [0, 96], sizes = [16, 32], strides = [1, 1]} : vector<16x160xf32> to vector<16x32xf32>
    %34 = arith.mulf %33, %4 : vector<16x32xf32>
    %35 = arith.addf %32, %34 : vector<16x32xf32>
    %36 = vector.extract_strided_slice %30 {offsets = [0, 32], sizes = [16, 32], strides = [1, 1]} : vector<16x160xf32> to vector<16x32xf32>
    %37 = arith.mulf %36, %2 : vector<16x32xf32>
    %38 = vector.extract_strided_slice %30 {offsets = [0, 128], sizes = [16, 32], strides = [1, 1]} : vector<16x160xf32> to vector<16x32xf32>
    %39 = arith.mulf %38, %4 : vector<16x32xf32>
    %40 = arith.addf %37, %39 : vector<16x32xf32>
    %41 = vector.extract_strided_slice %30 {offsets = [0, 64], sizes = [16, 32], strides = [1, 1]} : vector<16x160xf32> to vector<16x32xf32>
    %c0_23 = arith.constant 0 : index
    %c0_24 = arith.constant 0 : index
    %c0_25 = arith.constant 0 : index
    %c0_26 = arith.constant 0 : index
    %42 = vector.load %arg7[%c0_23, %c0_24, %c0_25, %c0_26] : memref<2x2x32x32xbf16, #tpu.memory_space<vmem>>, vector<1x1x32x32xbf16>
    %43 = vector.shape_cast %42 : vector<1x1x32x32xbf16> to vector<32x32xbf16>
    %cst_27 = arith.constant 0.000000e+00 : f32
    %44 = vector.broadcast %cst_27 : f32 to vector<16x32xf32>
    %45 = vector.extract_strided_slice %35 {offsets = [0, 0], sizes = [16, 16], strides = [1, 1]} : vector<16x32xf32> to vector<16x16xf32>
    %46 = arith.truncf %45 : vector<16x16xf32> to vector<16x16xbf16>
    %47 = vector.extract_strided_slice %40 {offsets = [0, 0], sizes = [16, 16], strides = [1, 1]} : vector<16x32xf32> to vector<16x16xf32>
    %48 = arith.truncf %47 : vector<16x16xf32> to vector<16x16xbf16>
    %49 = vector.extract_strided_slice %41 {offsets = [0, 0], sizes = [16, 16], strides = [1, 1]} : vector<16x32xf32> to vector<16x16xf32>
    %50 = arith.truncf %49 : vector<16x16xf32> to vector<16x16xbf16>
    "tpu.trace_start"() <{level = 10 : i32, message = "qd,kd->qk"}> : () -> ()
    %cst_28 = arith.constant dense<0.000000e+00> : vector<16x16xf32>
    %51 = tpu.matmul %46, %48, %cst_28 {dimension_numbers = #tpu.dot_dimension_numbers<[1], [1], [0], [0], [0, 0, 1, 0], [], []>} : vector<16x16xbf16>, vector<16x16xbf16>, vector<16x16xf32> -> vector<16x16xf32>
    "tpu.trace_stop"() : () -> ()
    %cst_29 = arith.constant 2.500000e-01 : f32
    %52 = vector.broadcast %cst_29 : f32 to vector<16x16xf32>
    %53 = arith.mulf %51, %52 : vector<16x16xf32>
    %54 = arith.addf %53, %6 : vector<16x16xf32>
    %cst_30 = arith.constant dense<0xFF800000> : vector<16xf32>
    %55 = vector.multi_reduction <maximumf>, %54, %cst_30 [1] : vector<16x16xf32> to vector<16xf32>
    %56 = vector.shape_cast %55 : vector<16xf32> to vector<16x1xf32>
    %57 = vector.broadcast %56 : vector<16x1xf32> to vector<16x16xf32>
    %58 = arith.subf %54, %57 : vector<16x16xf32>
    %59 = math.exp %58 : vector<16x16xf32>
    %cst_31 = arith.constant dense<0.000000e+00> : vector<16xf32>
    %60 = vector.multi_reduction <add>, %59, %cst_31 [1] : vector<16x16xf32> to vector<16xf32>
    %61 = vector.shape_cast %60 : vector<16xf32> to vector<16x1xf32>
    %62 = tpu.reciprocal %61 {approx = true} : vector<16x1xf32> -> vector<16x1xf32>
    %63 = vector.broadcast %62 : vector<16x1xf32> to vector<16x16xf32>
    %64 = arith.mulf %59, %63 : vector<16x16xf32>
    %65 = arith.truncf %64 : vector<16x16xf32> to vector<16x16xbf16>
    %cst_32 = arith.constant dense<0.000000e+00> : vector<16x16xf32>
    %66 = tpu.matmul %65, %50, %cst_32 {dimension_numbers = #tpu.dot_dimension_numbers<[1], [0], [0], [1], [0, 0, 1, 1], [], []>} : vector<16x16xbf16>, vector<16x16xbf16>, vector<16x16xf32> -> vector<16x16xf32>
    %67 = arith.truncf %66 : vector<16x16xf32> to vector<16x16xbf16>
    %68 = vector.extract_strided_slice %43 {offsets = [0, 0], sizes = [16, 32], strides = [1, 1]} : vector<32x32xbf16> to vector<16x32xbf16>
    %cst_33 = arith.constant dense<0.000000e+00> : vector<16x32xf32>
    %69 = tpu.matmul %67, %68, %cst_33 {dimension_numbers = #tpu.dot_dimension_numbers<[1], [0], [0], [1], [0, 0, 1, 1], [], []>} : vector<16x16xbf16>, vector<16x32xbf16>, vector<16x32xf32> -> vector<16x32xf32>
    %70 = arith.addf %44, %69 : vector<16x32xf32>
    %71 = vector.extract_strided_slice %35 {offsets = [0, 16], sizes = [16, 16], strides = [1, 1]} : vector<16x32xf32> to vector<16x16xf32>
    %72 = arith.truncf %71 : vector<16x16xf32> to vector<16x16xbf16>
    %73 = vector.extract_strided_slice %40 {offsets = [0, 16], sizes = [16, 16], strides = [1, 1]} : vector<16x32xf32> to vector<16x16xf32>
    %74 = arith.truncf %73 : vector<16x16xf32> to vector<16x16xbf16>
    %75 = vector.extract_strided_slice %41 {offsets = [0, 16], sizes = [16, 16], strides = [1, 1]} : vector<16x32xf32> to vector<16x16xf32>
    %76 = arith.truncf %75 : vector<16x16xf32> to vector<16x16xbf16>
    "tpu.trace_start"() <{level = 10 : i32, message = "qd,kd->qk"}> : () -> ()
    %cst_34 = arith.constant dense<0.000000e+00> : vector<16x16xf32>
    %77 = tpu.matmul %72, %74, %cst_34 {dimension_numbers = #tpu.dot_dimension_numbers<[1], [1], [0], [0], [0, 0, 1, 0], [], []>} : vector<16x16xbf16>, vector<16x16xbf16>, vector<16x16xf32> -> vector<16x16xf32>
    "tpu.trace_stop"() : () -> ()
    %cst_35 = arith.constant 2.500000e-01 : f32
    %78 = vector.broadcast %cst_35 : f32 to vector<16x16xf32>
    %79 = arith.mulf %77, %78 : vector<16x16xf32>
    %80 = arith.addf %79, %6 : vector<16x16xf32>
    %cst_36 = arith.constant dense<0xFF800000> : vector<16xf32>
    %81 = vector.multi_reduction <maximumf>, %80, %cst_36 [1] : vector<16x16xf32> to vector<16xf32>
    %82 = vector.shape_cast %81 : vector<16xf32> to vector<16x1xf32>
    %83 = vector.broadcast %82 : vector<16x1xf32> to vector<16x16xf32>
    %84 = arith.subf %80, %83 : vector<16x16xf32>
    %85 = math.exp %84 : vector<16x16xf32>
    %cst_37 = arith.constant dense<0.000000e+00> : vector<16xf32>
    %86 = vector.multi_reduction <add>, %85, %cst_37 [1] : vector<16x16xf32> to vector<16xf32>
    %87 = vector.shape_cast %86 : vector<16xf32> to vector<16x1xf32>
    %88 = tpu.reciprocal %87 {approx = true} : vector<16x1xf32> -> vector<16x1xf32>
    %89 = vector.broadcast %88 : vector<16x1xf32> to vector<16x16xf32>
    %90 = arith.mulf %85, %89 : vector<16x16xf32>
    %91 = arith.truncf %90 : vector<16x16xf32> to vector<16x16xbf16>
    %cst_38 = arith.constant dense<0.000000e+00> : vector<16x16xf32>
    %92 = tpu.matmul %91, %76, %cst_38 {dimension_numbers = #tpu.dot_dimension_numbers<[1], [0], [0], [1], [0, 0, 1, 1], [], []>} : vector<16x16xbf16>, vector<16x16xbf16>, vector<16x16xf32> -> vector<16x16xf32>
    %93 = arith.truncf %92 : vector<16x16xf32> to vector<16x16xbf16>
    %94 = vector.extract_strided_slice %43 {offsets = [16, 0], sizes = [16, 32], strides = [1, 1]} : vector<32x32xbf16> to vector<16x32xbf16>
    %cst_39 = arith.constant dense<0.000000e+00> : vector<16x32xf32>
    %95 = tpu.matmul %93, %94, %cst_39 {dimension_numbers = #tpu.dot_dimension_numbers<[1], [0], [0], [1], [0, 0, 1, 1], [], []>} : vector<16x16xbf16>, vector<16x32xbf16>, vector<16x32xf32> -> vector<16x32xf32>
    %96 = arith.addf %70, %95 : vector<16x32xf32>
    %97 = arith.addf %0, %96 : vector<16x32xf32>
    %c0_40 = arith.constant 0 : index
    %c0_41 = arith.constant 0 : index
    %c0_42 = arith.constant 0 : index
    %c0_43 = arith.constant 0 : index
    %98 = vector.load %arg8[%c0_40, %c0_41, %c0_42, %c0_43] : memref<2x2x1x32xf32, #tpu.memory_space<vmem>>, vector<1x1x1x32xf32>
    %99 = vector.shape_cast %98 : vector<1x1x1x32xf32> to vector<1x32xf32>
    %cst_44 = arith.constant dense<0.000000e+00> : vector<16xf32>
    %100 = vector.multi_reduction <add>, %97, %cst_44 [1] : vector<16x32xf32> to vector<16xf32>
    %101 = vector.shape_cast %100 : vector<16xf32> to vector<16x1xf32>
    %cst_45 = arith.constant 3.200000e+01 : f32
    %102 = vector.broadcast %cst_45 : f32 to vector<16x1xf32>
    %103 = arith.divf %101, %102 : vector<16x1xf32>
    %104 = vector.broadcast %103 : vector<16x1xf32> to vector<16x32xf32>
    %105 = arith.subf %97, %104 : vector<16x32xf32>
    %106 = arith.mulf %105, %105 : vector<16x32xf32>
    %cst_46 = arith.constant dense<0.000000e+00> : vector<16xf32>
    %107 = vector.multi_reduction <add>, %106, %cst_46 [1] : vector<16x32xf32> to vector<16xf32>
    %108 = vector.shape_cast %107 : vector<16xf32> to vector<16x1xf32>
    %cst_47 = arith.constant 3.200000e+01 : f32
    %109 = vector.broadcast %cst_47 : f32 to vector<16x1xf32>
    %110 = arith.divf %108, %109 : vector<16x1xf32>
    %cst_48 = arith.constant 9.99999974E-6 : f32
    %111 = vector.broadcast %cst_48 : f32 to vector<16x1xf32>
    %112 = arith.addf %110, %111 : vector<16x1xf32>
    %113 = math.rsqrt %112 : vector<16x1xf32>
    %114 = vector.broadcast %113 : vector<16x1xf32> to vector<16x32xf32>
    %115 = arith.mulf %105, %114 : vector<16x32xf32>
    %116 = vector.broadcast %99 : vector<1x32xf32> to vector<16x32xf32>
    %117 = arith.mulf %115, %116 : vector<16x32xf32>
    %118 = arith.truncf %117 : vector<16x32xf32> to vector<16x32xbf16>
    %c0_49 = arith.constant 0 : index
    %c0_50 = arith.constant 0 : index
    %c0_51 = arith.constant 0 : index
    %c0_52 = arith.constant 0 : index
    %119 = vector.load %arg9[%c0_49, %c0_50, %c0_51, %c0_52] : memref<2x2x32x128xbf16, #tpu.memory_space<vmem>>, vector<1x1x32x128xbf16>
    %120 = vector.shape_cast %119 : vector<1x1x32x128xbf16> to vector<32x128xbf16>
    %cst_53 = arith.constant dense<0.000000e+00> : vector<16x128xf32>
    %121 = tpu.matmul %118, %120, %cst_53 {dimension_numbers = #tpu.dot_dimension_numbers<[1], [0], [0], [1], [0, 0, 1, 1], [], []>} : vector<16x32xbf16>, vector<32x128xbf16>, vector<16x128xf32> -> vector<16x128xf32>
    %cst_54 = arith.constant 5.000000e-01 : f32
    %122 = vector.broadcast %cst_54 : f32 to vector<16x128xf32>
    %123 = arith.mulf %122, %121 : vector<16x128xf32>
    %cst_55 = arith.constant 4.471500e-02 : f32
    %124 = vector.broadcast %cst_55 : f32 to vector<16x128xf32>
    %125 = arith.mulf %124, %121 : vector<16x128xf32>
    %126 = arith.mulf %125, %121 : vector<16x128xf32>
    %127 = arith.mulf %126, %121 : vector<16x128xf32>
    %128 = arith.addf %121, %127 : vector<16x128xf32>
    %cst_56 = arith.constant 0.797884583 : f32
    %129 = vector.broadcast %cst_56 : f32 to vector<16x128xf32>
    %130 = arith.mulf %129, %128 : vector<16x128xf32>
    %131 = math.tanh %130 : vector<16x128xf32>
    %cst_57 = arith.constant 1.000000e+00 : f32
    %132 = vector.broadcast %cst_57 : f32 to vector<16x128xf32>
    %133 = arith.addf %132, %131 : vector<16x128xf32>
    %134 = arith.mulf %123, %133 : vector<16x128xf32>
    %135 = arith.truncf %134 : vector<16x128xf32> to vector<16x128xbf16>
    %c0_58 = arith.constant 0 : index
    %c0_59 = arith.constant 0 : index
    %c0_60 = arith.constant 0 : index
    %c0_61 = arith.constant 0 : index
    %136 = vector.load %arg10[%c0_58, %c0_59, %c0_60, %c0_61] : memref<2x2x128x32xbf16, #tpu.memory_space<vmem>>, vector<1x1x128x32xbf16>
    %137 = vector.shape_cast %136 : vector<1x1x128x32xbf16> to vector<128x32xbf16>
    %cst_62 = arith.constant dense<0.000000e+00> : vector<16x32xf32>
    %138 = tpu.matmul %135, %137, %cst_62 {dimension_numbers = #tpu.dot_dimension_numbers<[1], [0], [0], [1], [0, 0, 1, 1], [], []>} : vector<16x128xbf16>, vector<128x32xbf16>, vector<16x32xf32> -> vector<16x32xf32>
    %139 = arith.addf %97, %138 : vector<16x32xf32>
    %c0_63 = arith.constant 0 : index
    %c1 = arith.constant 1 : index
    %c0_64 = arith.constant 0 : index
    %c0_65 = arith.constant 0 : index
    %140 = vector.load %arg5[%c0_63, %c1, %c0_64, %c0_65] : memref<2x2x1x32xf32, #tpu.memory_space<vmem>>, vector<1x1x1x32xf32>
    %141 = vector.shape_cast %140 : vector<1x1x1x32xf32> to vector<1x32xf32>
    %cst_66 = arith.constant dense<0.000000e+00> : vector<16xf32>
    %142 = vector.multi_reduction <add>, %139, %cst_66 [1] : vector<16x32xf32> to vector<16xf32>
    %143 = vector.shape_cast %142 : vector<16xf32> to vector<16x1xf32>
    %cst_67 = arith.constant 3.200000e+01 : f32
    %144 = vector.broadcast %cst_67 : f32 to vector<16x1xf32>
    %145 = arith.divf %143, %144 : vector<16x1xf32>
    %146 = vector.broadcast %145 : vector<16x1xf32> to vector<16x32xf32>
    %147 = arith.subf %139, %146 : vector<16x32xf32>
    %148 = arith.mulf %147, %147 : vector<16x32xf32>
    %cst_68 = arith.constant dense<0.000000e+00> : vector<16xf32>
    %149 = vector.multi_reduction <add>, %148, %cst_68 [1] : vector<16x32xf32> to vector<16xf32>
    %150 = vector.shape_cast %149 : vector<16xf32> to vector<16x1xf32>
    %cst_69 = arith.constant 3.200000e+01 : f32
    %151 = vector.broadcast %cst_69 : f32 to vector<16x1xf32>
    %152 = arith.divf %150, %151 : vector<16x1xf32>
    %cst_70 = arith.constant 9.99999974E-6 : f32
    %153 = vector.broadcast %cst_70 : f32 to vector<16x1xf32>
    %154 = arith.addf %152, %153 : vector<16x1xf32>
    %155 = math.rsqrt %154 : vector<16x1xf32>
    %156 = vector.broadcast %155 : vector<16x1xf32> to vector<16x32xf32>
    %157 = arith.mulf %147, %156 : vector<16x32xf32>
    %158 = vector.broadcast %141 : vector<1x32xf32> to vector<16x32xf32>
    %159 = arith.mulf %157, %158 : vector<16x32xf32>
    %160 = arith.truncf %159 : vector<16x32xf32> to vector<16x32xbf16>
    %c0_71 = arith.constant 0 : index
    %c1_72 = arith.constant 1 : index
    %c0_73 = arith.constant 0 : index
    %c0_74 = arith.constant 0 : index
    %161 = vector.load %arg6[%c0_71, %c1_72, %c0_73, %c0_74] : memref<2x2x32x160xbf16, #tpu.memory_space<vmem>>, vector<1x1x32x160xbf16>
    %162 = vector.shape_cast %161 : vector<1x1x32x160xbf16> to vector<32x160xbf16>
    %cst_75 = arith.constant dense<0.000000e+00> : vector<16x160xf32>
    %163 = tpu.matmul %160, %162, %cst_75 {dimension_numbers = #tpu.dot_dimension_numbers<[1], [0], [0], [1], [0, 0, 1, 1], [], []>} : vector<16x32xbf16>, vector<32x160xbf16>, vector<16x160xf32> -> vector<16x160xf32>
    %164 = vector.extract_strided_slice %163 {offsets = [0, 0], sizes = [16, 32], strides = [1, 1]} : vector<16x160xf32> to vector<16x32xf32>
    %165 = arith.mulf %164, %2 : vector<16x32xf32>
    %166 = vector.extract_strided_slice %163 {offsets = [0, 96], sizes = [16, 32], strides = [1, 1]} : vector<16x160xf32> to vector<16x32xf32>
    %167 = arith.mulf %166, %4 : vector<16x32xf32>
    %168 = arith.addf %165, %167 : vector<16x32xf32>
    %169 = vector.extract_strided_slice %163 {offsets = [0, 32], sizes = [16, 32], strides = [1, 1]} : vector<16x160xf32> to vector<16x32xf32>
    %170 = arith.mulf %169, %2 : vector<16x32xf32>
    %171 = vector.extract_strided_slice %163 {offsets = [0, 128], sizes = [16, 32], strides = [1, 1]} : vector<16x160xf32> to vector<16x32xf32>
    %172 = arith.mulf %171, %4 : vector<16x32xf32>
    %173 = arith.addf %170, %172 : vector<16x32xf32>
    %174 = vector.extract_strided_slice %163 {offsets = [0, 64], sizes = [16, 32], strides = [1, 1]} : vector<16x160xf32> to vector<16x32xf32>
    %c0_76 = arith.constant 0 : index
    %c1_77 = arith.constant 1 : index
    %c0_78 = arith.constant 0 : index
    %c0_79 = arith.constant 0 : index
    %175 = vector.load %arg7[%c0_76, %c1_77, %c0_78, %c0_79] : memref<2x2x32x32xbf16, #tpu.memory_space<vmem>>, vector<1x1x32x32xbf16>
    %176 = vector.shape_cast %175 : vector<1x1x32x32xbf16> to vector<32x32xbf16>
    %cst_80 = arith.constant 0.000000e+00 : f32
    %177 = vector.broadcast %cst_80 : f32 to vector<16x32xf32>
    %178 = vector.extract_strided_slice %168 {offsets = [0, 0], sizes = [16, 16], strides = [1, 1]} : vector<16x32xf32> to vector<16x16xf32>
    %179 = arith.truncf %178 : vector<16x16xf32> to vector<16x16xbf16>
    %180 = vector.extract_strided_slice %173 {offsets = [0, 0], sizes = [16, 16], strides = [1, 1]} : vector<16x32xf32> to vector<16x16xf32>
    %181 = arith.truncf %180 : vector<16x16xf32> to vector<16x16xbf16>
    %182 = vector.extract_strided_slice %174 {offsets = [0, 0], sizes = [16, 16], strides = [1, 1]} : vector<16x32xf32> to vector<16x16xf32>
    %183 = arith.truncf %182 : vector<16x16xf32> to vector<16x16xbf16>
    "tpu.trace_start"() <{level = 10 : i32, message = "qd,kd->qk"}> : () -> ()
    %cst_81 = arith.constant dense<0.000000e+00> : vector<16x16xf32>
    %184 = tpu.matmul %179, %181, %cst_81 {dimension_numbers = #tpu.dot_dimension_numbers<[1], [1], [0], [0], [0, 0, 1, 0], [], []>} : vector<16x16xbf16>, vector<16x16xbf16>, vector<16x16xf32> -> vector<16x16xf32>
    "tpu.trace_stop"() : () -> ()
    %cst_82 = arith.constant 2.500000e-01 : f32
    %185 = vector.broadcast %cst_82 : f32 to vector<16x16xf32>
    %186 = arith.mulf %184, %185 : vector<16x16xf32>
    %187 = arith.addf %186, %6 : vector<16x16xf32>
    %cst_83 = arith.constant dense<0xFF800000> : vector<16xf32>
    %188 = vector.multi_reduction <maximumf>, %187, %cst_83 [1] : vector<16x16xf32> to vector<16xf32>
    %189 = vector.shape_cast %188 : vector<16xf32> to vector<16x1xf32>
    %190 = vector.broadcast %189 : vector<16x1xf32> to vector<16x16xf32>
    %191 = arith.subf %187, %190 : vector<16x16xf32>
    %192 = math.exp %191 : vector<16x16xf32>
    %cst_84 = arith.constant dense<0.000000e+00> : vector<16xf32>
    %193 = vector.multi_reduction <add>, %192, %cst_84 [1] : vector<16x16xf32> to vector<16xf32>
    %194 = vector.shape_cast %193 : vector<16xf32> to vector<16x1xf32>
    %195 = tpu.reciprocal %194 {approx = true} : vector<16x1xf32> -> vector<16x1xf32>
    %196 = vector.broadcast %195 : vector<16x1xf32> to vector<16x16xf32>
    %197 = arith.mulf %192, %196 : vector<16x16xf32>
    %198 = arith.truncf %197 : vector<16x16xf32> to vector<16x16xbf16>
    %cst_85 = arith.constant dense<0.000000e+00> : vector<16x16xf32>
    %199 = tpu.matmul %198, %183, %cst_85 {dimension_numbers = #tpu.dot_dimension_numbers<[1], [0], [0], [1], [0, 0, 1, 1], [], []>} : vector<16x16xbf16>, vector<16x16xbf16>, vector<16x16xf32> -> vector<16x16xf32>
    %200 = arith.truncf %199 : vector<16x16xf32> to vector<16x16xbf16>
    %201 = vector.extract_strided_slice %176 {offsets = [0, 0], sizes = [16, 32], strides = [1, 1]} : vector<32x32xbf16> to vector<16x32xbf16>
    %cst_86 = arith.constant dense<0.000000e+00> : vector<16x32xf32>
    %202 = tpu.matmul %200, %201, %cst_86 {dimension_numbers = #tpu.dot_dimension_numbers<[1], [0], [0], [1], [0, 0, 1, 1], [], []>} : vector<16x16xbf16>, vector<16x32xbf16>, vector<16x32xf32> -> vector<16x32xf32>
    %203 = arith.addf %177, %202 : vector<16x32xf32>
    %204 = vector.extract_strided_slice %168 {offsets = [0, 16], sizes = [16, 16], strides = [1, 1]} : vector<16x32xf32> to vector<16x16xf32>
    %205 = arith.truncf %204 : vector<16x16xf32> to vector<16x16xbf16>
    %206 = vector.extract_strided_slice %173 {offsets = [0, 16], sizes = [16, 16], strides = [1, 1]} : vector<16x32xf32> to vector<16x16xf32>
    %207 = arith.truncf %206 : vector<16x16xf32> to vector<16x16xbf16>
    %208 = vector.extract_strided_slice %174 {offsets = [0, 16], sizes = [16, 16], strides = [1, 1]} : vector<16x32xf32> to vector<16x16xf32>
    %209 = arith.truncf %208 : vector<16x16xf32> to vector<16x16xbf16>
    "tpu.trace_start"() <{level = 10 : i32, message = "qd,kd->qk"}> : () -> ()
    %cst_87 = arith.constant dense<0.000000e+00> : vector<16x16xf32>
    %210 = tpu.matmul %205, %207, %cst_87 {dimension_numbers = #tpu.dot_dimension_numbers<[1], [1], [0], [0], [0, 0, 1, 0], [], []>} : vector<16x16xbf16>, vector<16x16xbf16>, vector<16x16xf32> -> vector<16x16xf32>
    "tpu.trace_stop"() : () -> ()
    %cst_88 = arith.constant 2.500000e-01 : f32
    %211 = vector.broadcast %cst_88 : f32 to vector<16x16xf32>
    %212 = arith.mulf %210, %211 : vector<16x16xf32>
    %213 = arith.addf %212, %6 : vector<16x16xf32>
    %cst_89 = arith.constant dense<0xFF800000> : vector<16xf32>
    %214 = vector.multi_reduction <maximumf>, %213, %cst_89 [1] : vector<16x16xf32> to vector<16xf32>
    %215 = vector.shape_cast %214 : vector<16xf32> to vector<16x1xf32>
    %216 = vector.broadcast %215 : vector<16x1xf32> to vector<16x16xf32>
    %217 = arith.subf %213, %216 : vector<16x16xf32>
    %218 = math.exp %217 : vector<16x16xf32>
    %cst_90 = arith.constant dense<0.000000e+00> : vector<16xf32>
    %219 = vector.multi_reduction <add>, %218, %cst_90 [1] : vector<16x16xf32> to vector<16xf32>
    %220 = vector.shape_cast %219 : vector<16xf32> to vector<16x1xf32>
    %221 = tpu.reciprocal %220 {approx = true} : vector<16x1xf32> -> vector<16x1xf32>
    %222 = vector.broadcast %221 : vector<16x1xf32> to vector<16x16xf32>
    %223 = arith.mulf %218, %222 : vector<16x16xf32>
    %224 = arith.truncf %223 : vector<16x16xf32> to vector<16x16xbf16>
    %cst_91 = arith.constant dense<0.000000e+00> : vector<16x16xf32>
    %225 = tpu.matmul %224, %209, %cst_91 {dimension_numbers = #tpu.dot_dimension_numbers<[1], [0], [0], [1], [0, 0, 1, 1], [], []>} : vector<16x16xbf16>, vector<16x16xbf16>, vector<16x16xf32> -> vector<16x16xf32>
    %226 = arith.truncf %225 : vector<16x16xf32> to vector<16x16xbf16>
    %227 = vector.extract_strided_slice %176 {offsets = [16, 0], sizes = [16, 32], strides = [1, 1]} : vector<32x32xbf16> to vector<16x32xbf16>
    %cst_92 = arith.constant dense<0.000000e+00> : vector<16x32xf32>
    %228 = tpu.matmul %226, %227, %cst_92 {dimension_numbers = #tpu.dot_dimension_numbers<[1], [0], [0], [1], [0, 0, 1, 1], [], []>} : vector<16x16xbf16>, vector<16x32xbf16>, vector<16x32xf32> -> vector<16x32xf32>
    %229 = arith.addf %203, %228 : vector<16x32xf32>
    %230 = arith.addf %139, %229 : vector<16x32xf32>
    %c0_93 = arith.constant 0 : index
    %c1_94 = arith.constant 1 : index
    %c0_95 = arith.constant 0 : index
    %c0_96 = arith.constant 0 : index
    %231 = vector.load %arg8[%c0_93, %c1_94, %c0_95, %c0_96] : memref<2x2x1x32xf32, #tpu.memory_space<vmem>>, vector<1x1x1x32xf32>
    %232 = vector.shape_cast %231 : vector<1x1x1x32xf32> to vector<1x32xf32>
    %cst_97 = arith.constant dense<0.000000e+00> : vector<16xf32>
    %233 = vector.multi_reduction <add>, %230, %cst_97 [1] : vector<16x32xf32> to vector<16xf32>
    %234 = vector.shape_cast %233 : vector<16xf32> to vector<16x1xf32>
    %cst_98 = arith.constant 3.200000e+01 : f32
    %235 = vector.broadcast %cst_98 : f32 to vector<16x1xf32>
    %236 = arith.divf %234, %235 : vector<16x1xf32>
    %237 = vector.broadcast %236 : vector<16x1xf32> to vector<16x32xf32>
    %238 = arith.subf %230, %237 : vector<16x32xf32>
    %239 = arith.mulf %238, %238 : vector<16x32xf32>
    %cst_99 = arith.constant dense<0.000000e+00> : vector<16xf32>
    %240 = vector.multi_reduction <add>, %239, %cst_99 [1] : vector<16x32xf32> to vector<16xf32>
    %241 = vector.shape_cast %240 : vector<16xf32> to vector<16x1xf32>
    %cst_100 = arith.constant 3.200000e+01 : f32
    %242 = vector.broadcast %cst_100 : f32 to vector<16x1xf32>
    %243 = arith.divf %241, %242 : vector<16x1xf32>
    %cst_101 = arith.constant 9.99999974E-6 : f32
    %244 = vector.broadcast %cst_101 : f32 to vector<16x1xf32>
    %245 = arith.addf %243, %244 : vector<16x1xf32>
    %246 = math.rsqrt %245 : vector<16x1xf32>
    %247 = vector.broadcast %246 : vector<16x1xf32> to vector<16x32xf32>
    %248 = arith.mulf %238, %247 : vector<16x32xf32>
    %249 = vector.broadcast %232 : vector<1x32xf32> to vector<16x32xf32>
    %250 = arith.mulf %248, %249 : vector<16x32xf32>
    %251 = arith.truncf %250 : vector<16x32xf32> to vector<16x32xbf16>
    %c0_102 = arith.constant 0 : index
    %c1_103 = arith.constant 1 : index
    %c0_104 = arith.constant 0 : index
    %c0_105 = arith.constant 0 : index
    %252 = vector.load %arg9[%c0_102, %c1_103, %c0_104, %c0_105] : memref<2x2x32x128xbf16, #tpu.memory_space<vmem>>, vector<1x1x32x128xbf16>
    %253 = vector.shape_cast %252 : vector<1x1x32x128xbf16> to vector<32x128xbf16>
    %cst_106 = arith.constant dense<0.000000e+00> : vector<16x128xf32>
    %254 = tpu.matmul %251, %253, %cst_106 {dimension_numbers = #tpu.dot_dimension_numbers<[1], [0], [0], [1], [0, 0, 1, 1], [], []>} : vector<16x32xbf16>, vector<32x128xbf16>, vector<16x128xf32> -> vector<16x128xf32>
    %cst_107 = arith.constant 5.000000e-01 : f32
    %255 = vector.broadcast %cst_107 : f32 to vector<16x128xf32>
    %256 = arith.mulf %255, %254 : vector<16x128xf32>
    %cst_108 = arith.constant 4.471500e-02 : f32
    %257 = vector.broadcast %cst_108 : f32 to vector<16x128xf32>
    %258 = arith.mulf %257, %254 : vector<16x128xf32>
    %259 = arith.mulf %258, %254 : vector<16x128xf32>
    %260 = arith.mulf %259, %254 : vector<16x128xf32>
    %261 = arith.addf %254, %260 : vector<16x128xf32>
    %cst_109 = arith.constant 0.797884583 : f32
    %262 = vector.broadcast %cst_109 : f32 to vector<16x128xf32>
    %263 = arith.mulf %262, %261 : vector<16x128xf32>
    %264 = math.tanh %263 : vector<16x128xf32>
    %cst_110 = arith.constant 1.000000e+00 : f32
    %265 = vector.broadcast %cst_110 : f32 to vector<16x128xf32>
    %266 = arith.addf %265, %264 : vector<16x128xf32>
    %267 = arith.mulf %256, %266 : vector<16x128xf32>
    %268 = arith.truncf %267 : vector<16x128xf32> to vector<16x128xbf16>
    %c0_111 = arith.constant 0 : index
    %c1_112 = arith.constant 1 : index
    %c0_113 = arith.constant 0 : index
    %c0_114 = arith.constant 0 : index
    %269 = vector.load %arg10[%c0_111, %c1_112, %c0_113, %c0_114] : memref<2x2x128x32xbf16, #tpu.memory_space<vmem>>, vector<1x1x128x32xbf16>
    %270 = vector.shape_cast %269 : vector<1x1x128x32xbf16> to vector<128x32xbf16>
    %cst_115 = arith.constant dense<0.000000e+00> : vector<16x32xf32>
    %271 = tpu.matmul %268, %270, %cst_115 {dimension_numbers = #tpu.dot_dimension_numbers<[1], [0], [0], [1], [0, 0, 1, 1], [], []>} : vector<16x128xbf16>, vector<128x32xbf16>, vector<16x32xf32> -> vector<16x32xf32>
    %272 = arith.addf %230, %271 : vector<16x32xf32>
    %c0_116 = arith.constant 0 : index
    %c0_117 = arith.constant 0 : index
    %c0_118 = arith.constant 0 : index
    %273 = vector.load %arg11[%c0_116, %c0_117, %c0_118] : memref<2x1x32xf32, #tpu.memory_space<vmem>>, vector<1x1x32xf32>
    %274 = vector.shape_cast %273 : vector<1x1x32xf32> to vector<1x32xf32>
    %cst_119 = arith.constant dense<0.000000e+00> : vector<16xf32>
    %275 = vector.multi_reduction <add>, %272, %cst_119 [1] : vector<16x32xf32> to vector<16xf32>
    %276 = vector.shape_cast %275 : vector<16xf32> to vector<16x1xf32>
    %cst_120 = arith.constant 3.200000e+01 : f32
    %277 = vector.broadcast %cst_120 : f32 to vector<16x1xf32>
    %278 = arith.divf %276, %277 : vector<16x1xf32>
    %279 = vector.broadcast %278 : vector<16x1xf32> to vector<16x32xf32>
    %280 = arith.subf %272, %279 : vector<16x32xf32>
    %281 = arith.mulf %280, %280 : vector<16x32xf32>
    %cst_121 = arith.constant dense<0.000000e+00> : vector<16xf32>
    %282 = vector.multi_reduction <add>, %281, %cst_121 [1] : vector<16x32xf32> to vector<16xf32>
    %283 = vector.shape_cast %282 : vector<16xf32> to vector<16x1xf32>
    %cst_122 = arith.constant 3.200000e+01 : f32
    %284 = vector.broadcast %cst_122 : f32 to vector<16x1xf32>
    %285 = arith.divf %283, %284 : vector<16x1xf32>
    %cst_123 = arith.constant 9.99999974E-6 : f32
    %286 = vector.broadcast %cst_123 : f32 to vector<16x1xf32>
    %287 = arith.addf %285, %286 : vector<16x1xf32>
    %288 = math.rsqrt %287 : vector<16x1xf32>
    %289 = vector.broadcast %288 : vector<16x1xf32> to vector<16x32xf32>
    %290 = arith.mulf %280, %289 : vector<16x32xf32>
    %291 = vector.broadcast %274 : vector<1x32xf32> to vector<16x32xf32>
    %292 = arith.mulf %290, %291 : vector<16x32xf32>
    %c0_124 = arith.constant 0 : index
    %c0_125 = arith.constant 0 : index
    %c0_126 = arith.constant 0 : index
    %293 = vector.load %arg12[%c0_124, %c0_125, %c0_126] : memref<2x16x32xf32, #tpu.memory_space<vmem>>, vector<1x16x32xf32>
    %294 = vector.shape_cast %293 : vector<1x16x32xf32> to vector<16x32xf32>
    %295 = vector.shape_cast %292 : vector<16x32xf32> to vector<1x16x32xf32>
    tpu.vector_store %arg12[%c0_124, %c0_125, %c0_126], %295 {strides = array<i32>} : memref<2x16x32xf32, #tpu.memory_space<vmem>>, vector<1x16x32xf32>,
    %c0_127 = arith.constant 0 : index
    %c0_128 = arith.constant 0 : index
    %296 = vector.load %arg1[%c0_127, %c0_128] : memref<16x32xf32, #tpu.memory_space<vmem>>, vector<16x32xf32>
    %c1_129 = arith.constant 1 : index
    %c0_130 = arith.constant 0 : index
    %c0_131 = arith.constant 0 : index
    %297 = vector.load %arg2[%c1_129, %c0_130, %c0_131] : memref<2x16x32xf32, #tpu.memory_space<vmem>>, vector<1x16x32xf32>
    %298 = vector.shape_cast %297 : vector<1x16x32xf32> to vector<16x32xf32>
    %c1_132 = arith.constant 1 : index
    %c0_133 = arith.constant 0 : index
    %c0_134 = arith.constant 0 : index
    %299 = vector.load %arg3[%c1_132, %c0_133, %c0_134] : memref<2x16x32xf32, #tpu.memory_space<vmem>>, vector<1x16x32xf32>
    %300 = vector.shape_cast %299 : vector<1x16x32xf32> to vector<16x32xf32>
    %c1_135 = arith.constant 1 : index
    %c0_136 = arith.constant 0 : index
    %c0_137 = arith.constant 0 : index
    %301 = vector.load %arg4[%c1_135, %c0_136, %c0_137] : memref<2x16x16xf32, #tpu.memory_space<vmem>>, vector<1x16x16xf32>
    %302 = vector.shape_cast %301 : vector<1x16x16xf32> to vector<16x16xf32>
    %c1_138 = arith.constant 1 : index
    %c0_139 = arith.constant 0 : index
    %c0_140 = arith.constant 0 : index
    %c0_141 = arith.constant 0 : index
    %303 = vector.load %arg5[%c1_138, %c0_139, %c0_140, %c0_141] : memref<2x2x1x32xf32, #tpu.memory_space<vmem>>, vector<1x1x1x32xf32>
    %304 = vector.shape_cast %303 : vector<1x1x1x32xf32> to vector<1x32xf32>
    %cst_142 = arith.constant dense<0.000000e+00> : vector<16xf32>
    %305 = vector.multi_reduction <add>, %296, %cst_142 [1] : vector<16x32xf32> to vector<16xf32>
    %306 = vector.shape_cast %305 : vector<16xf32> to vector<16x1xf32>
    %cst_143 = arith.constant 3.200000e+01 : f32
    %307 = vector.broadcast %cst_143 : f32 to vector<16x1xf32>
    %308 = arith.divf %306, %307 : vector<16x1xf32>
    %309 = vector.broadcast %308 : vector<16x1xf32> to vector<16x32xf32>
    %310 = arith.subf %296, %309 : vector<16x32xf32>
    %311 = arith.mulf %310, %310 : vector<16x32xf32>
    %cst_144 = arith.constant dense<0.000000e+00> : vector<16xf32>
    %312 = vector.multi_reduction <add>, %311, %cst_144 [1] : vector<16x32xf32> to vector<16xf32>
    %313 = vector.shape_cast %312 : vector<16xf32> to vector<16x1xf32>
    %cst_145 = arith.constant 3.200000e+01 : f32
    %314 = vector.broadcast %cst_145 : f32 to vector<16x1xf32>
    %315 = arith.divf %313, %314 : vector<16x1xf32>
    %cst_146 = arith.constant 9.99999974E-6 : f32
    %316 = vector.broadcast %cst_146 : f32 to vector<16x1xf32>
    %317 = arith.addf %315, %316 : vector<16x1xf32>
    %318 = math.rsqrt %317 : vector<16x1xf32>
    %319 = vector.broadcast %318 : vector<16x1xf32> to vector<16x32xf32>
    %320 = arith.mulf %310, %319 : vector<16x32xf32>
    %321 = vector.broadcast %304 : vector<1x32xf32> to vector<16x32xf32>
    %322 = arith.mulf %320, %321 : vector<16x32xf32>
    %323 = arith.truncf %322 : vector<16x32xf32> to vector<16x32xbf16>
    %c1_147 = arith.constant 1 : index
    %c0_148 = arith.constant 0 : index
    %c0_149 = arith.constant 0 : index
    %c0_150 = arith.constant 0 : index
    %324 = vector.load %arg6[%c1_147, %c0_148, %c0_149, %c0_150] : memref<2x2x32x160xbf16, #tpu.memory_space<vmem>>, vector<1x1x32x160xbf16>
    %325 = vector.shape_cast %324 : vector<1x1x32x160xbf16> to vector<32x160xbf16>
    %cst_151 = arith.constant dense<0.000000e+00> : vector<16x160xf32>
    %326 = tpu.matmul %323, %325, %cst_151 {dimension_numbers = #tpu.dot_dimension_numbers<[1], [0], [0], [1], [0, 0, 1, 1], [], []>} : vector<16x32xbf16>, vector<32x160xbf16>, vector<16x160xf32> -> vector<16x160xf32>
    %327 = vector.extract_strided_slice %326 {offsets = [0, 0], sizes = [16, 32], strides = [1, 1]} : vector<16x160xf32> to vector<16x32xf32>
    %328 = arith.mulf %327, %298 : vector<16x32xf32>
    %329 = vector.extract_strided_slice %326 {offsets = [0, 96], sizes = [16, 32], strides = [1, 1]} : vector<16x160xf32> to vector<16x32xf32>
    %330 = arith.mulf %329, %300 : vector<16x32xf32>
    %331 = arith.addf %328, %330 : vector<16x32xf32>
    %332 = vector.extract_strided_slice %326 {offsets = [0, 32], sizes = [16, 32], strides = [1, 1]} : vector<16x160xf32> to vector<16x32xf32>
    %333 = arith.mulf %332, %298 : vector<16x32xf32>
    %334 = vector.extract_strided_slice %326 {offsets = [0, 128], sizes = [16, 32], strides = [1, 1]} : vector<16x160xf32> to vector<16x32xf32>
    %335 = arith.mulf %334, %300 : vector<16x32xf32>
    %336 = arith.addf %333, %335 : vector<16x32xf32>
    %337 = vector.extract_strided_slice %326 {offsets = [0, 64], sizes = [16, 32], strides = [1, 1]} : vector<16x160xf32> to vector<16x32xf32>
    %c1_152 = arith.constant 1 : index
    %c0_153 = arith.constant 0 : index
    %c0_154 = arith.constant 0 : index
    %c0_155 = arith.constant 0 : index
    %338 = vector.load %arg7[%c1_152, %c0_153, %c0_154, %c0_155] : memref<2x2x32x32xbf16, #tpu.memory_space<vmem>>, vector<1x1x32x32xbf16>
    %339 = vector.shape_cast %338 : vector<1x1x32x32xbf16> to vector<32x32xbf16>
    %cst_156 = arith.constant 0.000000e+00 : f32
    %340 = vector.broadcast %cst_156 : f32 to vector<16x32xf32>
    %341 = vector.extract_strided_slice %331 {offsets = [0, 0], sizes = [16, 16], strides = [1, 1]} : vector<16x32xf32> to vector<16x16xf32>
    %342 = arith.truncf %341 : vector<16x16xf32> to vector<16x16xbf16>
    %343 = vector.extract_strided_slice %336 {offsets = [0, 0], sizes = [16, 16], strides = [1, 1]} : vector<16x32xf32> to vector<16x16xf32>
    %344 = arith.truncf %343 : vector<16x16xf32> to vector<16x16xbf16>
    %345 = vector.extract_strided_slice %337 {offsets = [0, 0], sizes = [16, 16], strides = [1, 1]} : vector<16x32xf32> to vector<16x16xf32>
    %346 = arith.truncf %345 : vector<16x16xf32> to vector<16x16xbf16>
    "tpu.trace_start"() <{level = 10 : i32, message = "qd,kd->qk"}> : () -> ()
    %cst_157 = arith.constant dense<0.000000e+00> : vector<16x16xf32>
    %347 = tpu.matmul %342, %344, %cst_157 {dimension_numbers = #tpu.dot_dimension_numbers<[1], [1], [0], [0], [0, 0, 1, 0], [], []>} : vector<16x16xbf16>, vector<16x16xbf16>, vector<16x16xf32> -> vector<16x16xf32>
    "tpu.trace_stop"() : () -> ()
    %cst_158 = arith.constant 2.500000e-01 : f32
    %348 = vector.broadcast %cst_158 : f32 to vector<16x16xf32>
    %349 = arith.mulf %347, %348 : vector<16x16xf32>
    %350 = arith.addf %349, %302 : vector<16x16xf32>
    %cst_159 = arith.constant dense<0xFF800000> : vector<16xf32>
    %351 = vector.multi_reduction <maximumf>, %350, %cst_159 [1] : vector<16x16xf32> to vector<16xf32>
    %352 = vector.shape_cast %351 : vector<16xf32> to vector<16x1xf32>
    %353 = vector.broadcast %352 : vector<16x1xf32> to vector<16x16xf32>
    %354 = arith.subf %350, %353 : vector<16x16xf32>
    %355 = math.exp %354 : vector<16x16xf32>
    %cst_160 = arith.constant dense<0.000000e+00> : vector<16xf32>
    %356 = vector.multi_reduction <add>, %355, %cst_160 [1] : vector<16x16xf32> to vector<16xf32>
    %357 = vector.shape_cast %356 : vector<16xf32> to vector<16x1xf32>
    %358 = tpu.reciprocal %357 {approx = true} : vector<16x1xf32> -> vector<16x1xf32>
    %359 = vector.broadcast %358 : vector<16x1xf32> to vector<16x16xf32>
    %360 = arith.mulf %355, %359 : vector<16x16xf32>
    %361 = arith.truncf %360 : vector<16x16xf32> to vector<16x16xbf16>
    %cst_161 = arith.constant dense<0.000000e+00> : vector<16x16xf32>
    %362 = tpu.matmul %361, %346, %cst_161 {dimension_numbers = #tpu.dot_dimension_numbers<[1], [0], [0], [1], [0, 0, 1, 1], [], []>} : vector<16x16xbf16>, vector<16x16xbf16>, vector<16x16xf32> -> vector<16x16xf32>
    %363 = arith.truncf %362 : vector<16x16xf32> to vector<16x16xbf16>
    %364 = vector.extract_strided_slice %339 {offsets = [0, 0], sizes = [16, 32], strides = [1, 1]} : vector<32x32xbf16> to vector<16x32xbf16>
    %cst_162 = arith.constant dense<0.000000e+00> : vector<16x32xf32>
    %365 = tpu.matmul %363, %364, %cst_162 {dimension_numbers = #tpu.dot_dimension_numbers<[1], [0], [0], [1], [0, 0, 1, 1], [], []>} : vector<16x16xbf16>, vector<16x32xbf16>, vector<16x32xf32> -> vector<16x32xf32>
    %366 = arith.addf %340, %365 : vector<16x32xf32>
    %367 = vector.extract_strided_slice %331 {offsets = [0, 16], sizes = [16, 16], strides = [1, 1]} : vector<16x32xf32> to vector<16x16xf32>
    %368 = arith.truncf %367 : vector<16x16xf32> to vector<16x16xbf16>
    %369 = vector.extract_strided_slice %336 {offsets = [0, 16], sizes = [16, 16], strides = [1, 1]} : vector<16x32xf32> to vector<16x16xf32>
    %370 = arith.truncf %369 : vector<16x16xf32> to vector<16x16xbf16>
    %371 = vector.extract_strided_slice %337 {offsets = [0, 16], sizes = [16, 16], strides = [1, 1]} : vector<16x32xf32> to vector<16x16xf32>
    %372 = arith.truncf %371 : vector<16x16xf32> to vector<16x16xbf16>
    "tpu.trace_start"() <{level = 10 : i32, message = "qd,kd->qk"}> : () -> ()
    %cst_163 = arith.constant dense<0.000000e+00> : vector<16x16xf32>
    %373 = tpu.matmul %368, %370, %cst_163 {dimension_numbers = #tpu.dot_dimension_numbers<[1], [1], [0], [0], [0, 0, 1, 0], [], []>} : vector<16x16xbf16>, vector<16x16xbf16>, vector<16x16xf32> -> vector<16x16xf32>
    "tpu.trace_stop"() : () -> ()
    %cst_164 = arith.constant 2.500000e-01 : f32
    %374 = vector.broadcast %cst_164 : f32 to vector<16x16xf32>
    %375 = arith.mulf %373, %374 : vector<16x16xf32>
    %376 = arith.addf %375, %302 : vector<16x16xf32>
    %cst_165 = arith.constant dense<0xFF800000> : vector<16xf32>
    %377 = vector.multi_reduction <maximumf>, %376, %cst_165 [1] : vector<16x16xf32> to vector<16xf32>
    %378 = vector.shape_cast %377 : vector<16xf32> to vector<16x1xf32>
    %379 = vector.broadcast %378 : vector<16x1xf32> to vector<16x16xf32>
    %380 = arith.subf %376, %379 : vector<16x16xf32>
    %381 = math.exp %380 : vector<16x16xf32>
    %cst_166 = arith.constant dense<0.000000e+00> : vector<16xf32>
    %382 = vector.multi_reduction <add>, %381, %cst_166 [1] : vector<16x16xf32> to vector<16xf32>
    %383 = vector.shape_cast %382 : vector<16xf32> to vector<16x1xf32>
    %384 = tpu.reciprocal %383 {approx = true} : vector<16x1xf32> -> vector<16x1xf32>
    %385 = vector.broadcast %384 : vector<16x1xf32> to vector<16x16xf32>
    %386 = arith.mulf %381, %385 : vector<16x16xf32>
    %387 = arith.truncf %386 : vector<16x16xf32> to vector<16x16xbf16>
    %cst_167 = arith.constant dense<0.000000e+00> : vector<16x16xf32>
    %388 = tpu.matmul %387, %372, %cst_167 {dimension_numbers = #tpu.dot_dimension_numbers<[1], [0], [0], [1], [0, 0, 1, 1], [], []>} : vector<16x16xbf16>, vector<16x16xbf16>, vector<16x16xf32> -> vector<16x16xf32>
    %389 = arith.truncf %388 : vector<16x16xf32> to vector<16x16xbf16>
    %390 = vector.extract_strided_slice %339 {offsets = [16, 0], sizes = [16, 32], strides = [1, 1]} : vector<32x32xbf16> to vector<16x32xbf16>
    %cst_168 = arith.constant dense<0.000000e+00> : vector<16x32xf32>
    %391 = tpu.matmul %389, %390, %cst_168 {dimension_numbers = #tpu.dot_dimension_numbers<[1], [0], [0], [1], [0, 0, 1, 1], [], []>} : vector<16x16xbf16>, vector<16x32xbf16>, vector<16x32xf32> -> vector<16x32xf32>
    %392 = arith.addf %366, %391 : vector<16x32xf32>
    %393 = arith.addf %296, %392 : vector<16x32xf32>
    %c1_169 = arith.constant 1 : index
    %c0_170 = arith.constant 0 : index
    %c0_171 = arith.constant 0 : index
    %c0_172 = arith.constant 0 : index
    %394 = vector.load %arg8[%c1_169, %c0_170, %c0_171, %c0_172] : memref<2x2x1x32xf32, #tpu.memory_space<vmem>>, vector<1x1x1x32xf32>
    %395 = vector.shape_cast %394 : vector<1x1x1x32xf32> to vector<1x32xf32>
    %cst_173 = arith.constant dense<0.000000e+00> : vector<16xf32>
    %396 = vector.multi_reduction <add>, %393, %cst_173 [1] : vector<16x32xf32> to vector<16xf32>
    %397 = vector.shape_cast %396 : vector<16xf32> to vector<16x1xf32>
    %cst_174 = arith.constant 3.200000e+01 : f32
    %398 = vector.broadcast %cst_174 : f32 to vector<16x1xf32>
    %399 = arith.divf %397, %398 : vector<16x1xf32>
    %400 = vector.broadcast %399 : vector<16x1xf32> to vector<16x32xf32>
    %401 = arith.subf %393, %400 : vector<16x32xf32>
    %402 = arith.mulf %401, %401 : vector<16x32xf32>
    %cst_175 = arith.constant dense<0.000000e+00> : vector<16xf32>
    %403 = vector.multi_reduction <add>, %402, %cst_175 [1] : vector<16x32xf32> to vector<16xf32>
    %404 = vector.shape_cast %403 : vector<16xf32> to vector<16x1xf32>
    %cst_176 = arith.constant 3.200000e+01 : f32
    %405 = vector.broadcast %cst_176 : f32 to vector<16x1xf32>
    %406 = arith.divf %404, %405 : vector<16x1xf32>
    %cst_177 = arith.constant 9.99999974E-6 : f32
    %407 = vector.broadcast %cst_177 : f32 to vector<16x1xf32>
    %408 = arith.addf %406, %407 : vector<16x1xf32>
    %409 = math.rsqrt %408 : vector<16x1xf32>
    %410 = vector.broadcast %409 : vector<16x1xf32> to vector<16x32xf32>
    %411 = arith.mulf %401, %410 : vector<16x32xf32>
    %412 = vector.broadcast %395 : vector<1x32xf32> to vector<16x32xf32>
    %413 = arith.mulf %411, %412 : vector<16x32xf32>
    %414 = arith.truncf %413 : vector<16x32xf32> to vector<16x32xbf16>
    %c1_178 = arith.constant 1 : index
    %c0_179 = arith.constant 0 : index
    %c0_180 = arith.constant 0 : index
    %c0_181 = arith.constant 0 : index
    %415 = vector.load %arg9[%c1_178, %c0_179, %c0_180, %c0_181] : memref<2x2x32x128xbf16, #tpu.memory_space<vmem>>, vector<1x1x32x128xbf16>
    %416 = vector.shape_cast %415 : vector<1x1x32x128xbf16> to vector<32x128xbf16>
    %cst_182 = arith.constant dense<0.000000e+00> : vector<16x128xf32>
    %417 = tpu.matmul %414, %416, %cst_182 {dimension_numbers = #tpu.dot_dimension_numbers<[1], [0], [0], [1], [0, 0, 1, 1], [], []>} : vector<16x32xbf16>, vector<32x128xbf16>, vector<16x128xf32> -> vector<16x128xf32>
    %cst_183 = arith.constant 5.000000e-01 : f32
    %418 = vector.broadcast %cst_183 : f32 to vector<16x128xf32>
    %419 = arith.mulf %418, %417 : vector<16x128xf32>
    %cst_184 = arith.constant 4.471500e-02 : f32
    %420 = vector.broadcast %cst_184 : f32 to vector<16x128xf32>
    %421 = arith.mulf %420, %417 : vector<16x128xf32>
    %422 = arith.mulf %421, %417 : vector<16x128xf32>
    %423 = arith.mulf %422, %417 : vector<16x128xf32>
    %424 = arith.addf %417, %423 : vector<16x128xf32>
    %cst_185 = arith.constant 0.797884583 : f32
    %425 = vector.broadcast %cst_185 : f32 to vector<16x128xf32>
    %426 = arith.mulf %425, %424 : vector<16x128xf32>
    %427 = math.tanh %426 : vector<16x128xf32>
    %cst_186 = arith.constant 1.000000e+00 : f32
    %428 = vector.broadcast %cst_186 : f32 to vector<16x128xf32>
    %429 = arith.addf %428, %427 : vector<16x128xf32>
    %430 = arith.mulf %419, %429 : vector<16x128xf32>
    %431 = arith.truncf %430 : vector<16x128xf32> to vector<16x128xbf16>
    %c1_187 = arith.constant 1 : index
    %c0_188 = arith.constant 0 : index
    %c0_189 = arith.constant 0 : index
    %c0_190 = arith.constant 0 : index
    %432 = vector.load %arg10[%c1_187, %c0_188, %c0_189, %c0_190] : memref<2x2x128x32xbf16, #tpu.memory_space<vmem>>, vector<1x1x128x32xbf16>
    %433 = vector.shape_cast %432 : vector<1x1x128x32xbf16> to vector<128x32xbf16>
    %cst_191 = arith.constant dense<0.000000e+00> : vector<16x32xf32>
    %434 = tpu.matmul %431, %433, %cst_191 {dimension_numbers = #tpu.dot_dimension_numbers<[1], [0], [0], [1], [0, 0, 1, 1], [], []>} : vector<16x128xbf16>, vector<128x32xbf16>, vector<16x32xf32> -> vector<16x32xf32>
    %435 = arith.addf %393, %434 : vector<16x32xf32>
    %c1_192 = arith.constant 1 : index
    %c1_193 = arith.constant 1 : index
    %c0_194 = arith.constant 0 : index
    %c0_195 = arith.constant 0 : index
    %436 = vector.load %arg5[%c1_192, %c1_193, %c0_194, %c0_195] : memref<2x2x1x32xf32, #tpu.memory_space<vmem>>, vector<1x1x1x32xf32>
    %437 = vector.shape_cast %436 : vector<1x1x1x32xf32> to vector<1x32xf32>
    %cst_196 = arith.constant dense<0.000000e+00> : vector<16xf32>
    %438 = vector.multi_reduction <add>, %435, %cst_196 [1] : vector<16x32xf32> to vector<16xf32>
    %439 = vector.shape_cast %438 : vector<16xf32> to vector<16x1xf32>
    %cst_197 = arith.constant 3.200000e+01 : f32
    %440 = vector.broadcast %cst_197 : f32 to vector<16x1xf32>
    %441 = arith.divf %439, %440 : vector<16x1xf32>
    %442 = vector.broadcast %441 : vector<16x1xf32> to vector<16x32xf32>
    %443 = arith.subf %435, %442 : vector<16x32xf32>
    %444 = arith.mulf %443, %443 : vector<16x32xf32>
    %cst_198 = arith.constant dense<0.000000e+00> : vector<16xf32>
    %445 = vector.multi_reduction <add>, %444, %cst_198 [1] : vector<16x32xf32> to vector<16xf32>
    %446 = vector.shape_cast %445 : vector<16xf32> to vector<16x1xf32>
    %cst_199 = arith.constant 3.200000e+01 : f32
    %447 = vector.broadcast %cst_199 : f32 to vector<16x1xf32>
    %448 = arith.divf %446, %447 : vector<16x1xf32>
    %cst_200 = arith.constant 9.99999974E-6 : f32
    %449 = vector.broadcast %cst_200 : f32 to vector<16x1xf32>
    %450 = arith.addf %448, %449 : vector<16x1xf32>
    %451 = math.rsqrt %450 : vector<16x1xf32>
    %452 = vector.broadcast %451 : vector<16x1xf32> to vector<16x32xf32>
    %453 = arith.mulf %443, %452 : vector<16x32xf32>
    %454 = vector.broadcast %437 : vector<1x32xf32> to vector<16x32xf32>
    %455 = arith.mulf %453, %454 : vector<16x32xf32>
    %456 = arith.truncf %455 : vector<16x32xf32> to vector<16x32xbf16>
    %c1_201 = arith.constant 1 : index
    %c1_202 = arith.constant 1 : index
    %c0_203 = arith.constant 0 : index
    %c0_204 = arith.constant 0 : index
    %457 = vector.load %arg6[%c1_201, %c1_202, %c0_203, %c0_204] : memref<2x2x32x160xbf16, #tpu.memory_space<vmem>>, vector<1x1x32x160xbf16>
    %458 = vector.shape_cast %457 : vector<1x1x32x160xbf16> to vector<32x160xbf16>
    %cst_205 = arith.constant dense<0.000000e+00> : vector<16x160xf32>
    %459 = tpu.matmul %456, %458, %cst_205 {dimension_numbers = #tpu.dot_dimension_numbers<[1], [0], [0], [1], [0, 0, 1, 1], [], []>} : vector<16x32xbf16>, vector<32x160xbf16>, vector<16x160xf32> -> vector<16x160xf32>
    %460 = vector.extract_strided_slice %459 {offsets = [0, 0], sizes = [16, 32], strides = [1, 1]} : vector<16x160xf32> to vector<16x32xf32>
    %461 = arith.mulf %460, %298 : vector<16x32xf32>
    %462 = vector.extract_strided_slice %459 {offsets = [0, 96], sizes = [16, 32], strides = [1, 1]} : vector<16x160xf32> to vector<16x32xf32>
    %463 = arith.mulf %462, %300 : vector<16x32xf32>
    %464 = arith.addf %461, %463 : vector<16x32xf32>
    %465 = vector.extract_strided_slice %459 {offsets = [0, 32], sizes = [16, 32], strides = [1, 1]} : vector<16x160xf32> to vector<16x32xf32>
    %466 = arith.mulf %465, %298 : vector<16x32xf32>
    %467 = vector.extract_strided_slice %459 {offsets = [0, 128], sizes = [16, 32], strides = [1, 1]} : vector<16x160xf32> to vector<16x32xf32>
    %468 = arith.mulf %467, %300 : vector<16x32xf32>
    %469 = arith.addf %466, %468 : vector<16x32xf32>
    %470 = vector.extract_strided_slice %459 {offsets = [0, 64], sizes = [16, 32], strides = [1, 1]} : vector<16x160xf32> to vector<16x32xf32>
    %c1_206 = arith.constant 1 : index
    %c1_207 = arith.constant 1 : index
    %c0_208 = arith.constant 0 : index
    %c0_209 = arith.constant 0 : index
    %471 = vector.load %arg7[%c1_206, %c1_207, %c0_208, %c0_209] : memref<2x2x32x32xbf16, #tpu.memory_space<vmem>>, vector<1x1x32x32xbf16>
    %472 = vector.shape_cast %471 : vector<1x1x32x32xbf16> to vector<32x32xbf16>
    %cst_210 = arith.constant 0.000000e+00 : f32
    %473 = vector.broadcast %cst_210 : f32 to vector<16x32xf32>
    %474 = vector.extract_strided_slice %464 {offsets = [0, 0], sizes = [16, 16], strides = [1, 1]} : vector<16x32xf32> to vector<16x16xf32>
    %475 = arith.truncf %474 : vector<16x16xf32> to vector<16x16xbf16>
    %476 = vector.extract_strided_slice %469 {offsets = [0, 0], sizes = [16, 16], strides = [1, 1]} : vector<16x32xf32> to vector<16x16xf32>
    %477 = arith.truncf %476 : vector<16x16xf32> to vector<16x16xbf16>
    %478 = vector.extract_strided_slice %470 {offsets = [0, 0], sizes = [16, 16], strides = [1, 1]} : vector<16x32xf32> to vector<16x16xf32>
    %479 = arith.truncf %478 : vector<16x16xf32> to vector<16x16xbf16>
    "tpu.trace_start"() <{level = 10 : i32, message = "qd,kd->qk"}> : () -> ()
    %cst_211 = arith.constant dense<0.000000e+00> : vector<16x16xf32>
    %480 = tpu.matmul %475, %477, %cst_211 {dimension_numbers = #tpu.dot_dimension_numbers<[1], [1], [0], [0], [0, 0, 1, 0], [], []>} : vector<16x16xbf16>, vector<16x16xbf16>, vector<16x16xf32> -> vector<16x16xf32>
    "tpu.trace_stop"() : () -> ()
    %cst_212 = arith.constant 2.500000e-01 : f32
    %481 = vector.broadcast %cst_212 : f32 to vector<16x16xf32>
    %482 = arith.mulf %480, %481 : vector<16x16xf32>
    %483 = arith.addf %482, %302 : vector<16x16xf32>
    %cst_213 = arith.constant dense<0xFF800000> : vector<16xf32>
    %484 = vector.multi_reduction <maximumf>, %483, %cst_213 [1] : vector<16x16xf32> to vector<16xf32>
    %485 = vector.shape_cast %484 : vector<16xf32> to vector<16x1xf32>
    %486 = vector.broadcast %485 : vector<16x1xf32> to vector<16x16xf32>
    %487 = arith.subf %483, %486 : vector<16x16xf32>
    %488 = math.exp %487 : vector<16x16xf32>
    %cst_214 = arith.constant dense<0.000000e+00> : vector<16xf32>
    %489 = vector.multi_reduction <add>, %488, %cst_214 [1] : vector<16x16xf32> to vector<16xf32>
    %490 = vector.shape_cast %489 : vector<16xf32> to vector<16x1xf32>
    %491 = tpu.reciprocal %490 {approx = true} : vector<16x1xf32> -> vector<16x1xf32>
    %492 = vector.broadcast %491 : vector<16x1xf32> to vector<16x16xf32>
    %493 = arith.mulf %488, %492 : vector<16x16xf32>
    %494 = arith.truncf %493 : vector<16x16xf32> to vector<16x16xbf16>
    %cst_215 = arith.constant dense<0.000000e+00> : vector<16x16xf32>
    %495 = tpu.matmul %494, %479, %cst_215 {dimension_numbers = #tpu.dot_dimension_numbers<[1], [0], [0], [1], [0, 0, 1, 1], [], []>} : vector<16x16xbf16>, vector<16x16xbf16>, vector<16x16xf32> -> vector<16x16xf32>
    %496 = arith.truncf %495 : vector<16x16xf32> to vector<16x16xbf16>
    %497 = vector.extract_strided_slice %472 {offsets = [0, 0], sizes = [16, 32], strides = [1, 1]} : vector<32x32xbf16> to vector<16x32xbf16>
    %cst_216 = arith.constant dense<0.000000e+00> : vector<16x32xf32>
    %498 = tpu.matmul %496, %497, %cst_216 {dimension_numbers = #tpu.dot_dimension_numbers<[1], [0], [0], [1], [0, 0, 1, 1], [], []>} : vector<16x16xbf16>, vector<16x32xbf16>, vector<16x32xf32> -> vector<16x32xf32>
    %499 = arith.addf %473, %498 : vector<16x32xf32>
    %500 = vector.extract_strided_slice %464 {offsets = [0, 16], sizes = [16, 16], strides = [1, 1]} : vector<16x32xf32> to vector<16x16xf32>
    %501 = arith.truncf %500 : vector<16x16xf32> to vector<16x16xbf16>
    %502 = vector.extract_strided_slice %469 {offsets = [0, 16], sizes = [16, 16], strides = [1, 1]} : vector<16x32xf32> to vector<16x16xf32>
    %503 = arith.truncf %502 : vector<16x16xf32> to vector<16x16xbf16>
    %504 = vector.extract_strided_slice %470 {offsets = [0, 16], sizes = [16, 16], strides = [1, 1]} : vector<16x32xf32> to vector<16x16xf32>
    %505 = arith.truncf %504 : vector<16x16xf32> to vector<16x16xbf16>
    "tpu.trace_start"() <{level = 10 : i32, message = "qd,kd->qk"}> : () -> ()
    %cst_217 = arith.constant dense<0.000000e+00> : vector<16x16xf32>
    %506 = tpu.matmul %501, %503, %cst_217 {dimension_numbers = #tpu.dot_dimension_numbers<[1], [1], [0], [0], [0, 0, 1, 0], [], []>} : vector<16x16xbf16>, vector<16x16xbf16>, vector<16x16xf32> -> vector<16x16xf32>
    "tpu.trace_stop"() : () -> ()
    %cst_218 = arith.constant 2.500000e-01 : f32
    %507 = vector.broadcast %cst_218 : f32 to vector<16x16xf32>
    %508 = arith.mulf %506, %507 : vector<16x16xf32>
    %509 = arith.addf %508, %302 : vector<16x16xf32>
    %cst_219 = arith.constant dense<0xFF800000> : vector<16xf32>
    %510 = vector.multi_reduction <maximumf>, %509, %cst_219 [1] : vector<16x16xf32> to vector<16xf32>
    %511 = vector.shape_cast %510 : vector<16xf32> to vector<16x1xf32>
    %512 = vector.broadcast %511 : vector<16x1xf32> to vector<16x16xf32>
    %513 = arith.subf %509, %512 : vector<16x16xf32>
    %514 = math.exp %513 : vector<16x16xf32>
    %cst_220 = arith.constant dense<0.000000e+00> : vector<16xf32>
    %515 = vector.multi_reduction <add>, %514, %cst_220 [1] : vector<16x16xf32> to vector<16xf32>
    %516 = vector.shape_cast %515 : vector<16xf32> to vector<16x1xf32>
    %517 = tpu.reciprocal %516 {approx = true} : vector<16x1xf32> -> vector<16x1xf32>
    %518 = vector.broadcast %517 : vector<16x1xf32> to vector<16x16xf32>
    %519 = arith.mulf %514, %518 : vector<16x16xf32>
    %520 = arith.truncf %519 : vector<16x16xf32> to vector<16x16xbf16>
    %cst_221 = arith.constant dense<0.000000e+00> : vector<16x16xf32>
    %521 = tpu.matmul %520, %505, %cst_221 {dimension_numbers = #tpu.dot_dimension_numbers<[1], [0], [0], [1], [0, 0, 1, 1], [], []>} : vector<16x16xbf16>, vector<16x16xbf16>, vector<16x16xf32> -> vector<16x16xf32>
    %522 = arith.truncf %521 : vector<16x16xf32> to vector<16x16xbf16>
    %523 = vector.extract_strided_slice %472 {offsets = [16, 0], sizes = [16, 32], strides = [1, 1]} : vector<32x32xbf16> to vector<16x32xbf16>
    %cst_222 = arith.constant dense<0.000000e+00> : vector<16x32xf32>
    %524 = tpu.matmul %522, %523, %cst_222 {dimension_numbers = #tpu.dot_dimension_numbers<[1], [0], [0], [1], [0, 0, 1, 1], [], []>} : vector<16x16xbf16>, vector<16x32xbf16>, vector<16x32xf32> -> vector<16x32xf32>
    %525 = arith.addf %499, %524 : vector<16x32xf32>
    %526 = arith.addf %435, %525 : vector<16x32xf32>
    %c1_223 = arith.constant 1 : index
    %c1_224 = arith.constant 1 : index
    %c0_225 = arith.constant 0 : index
    %c0_226 = arith.constant 0 : index
    %527 = vector.load %arg8[%c1_223, %c1_224, %c0_225, %c0_226] : memref<2x2x1x32xf32, #tpu.memory_space<vmem>>, vector<1x1x1x32xf32>
    %528 = vector.shape_cast %527 : vector<1x1x1x32xf32> to vector<1x32xf32>
    %cst_227 = arith.constant dense<0.000000e+00> : vector<16xf32>
    %529 = vector.multi_reduction <add>, %526, %cst_227 [1] : vector<16x32xf32> to vector<16xf32>
    %530 = vector.shape_cast %529 : vector<16xf32> to vector<16x1xf32>
    %cst_228 = arith.constant 3.200000e+01 : f32
    %531 = vector.broadcast %cst_228 : f32 to vector<16x1xf32>
    %532 = arith.divf %530, %531 : vector<16x1xf32>
    %533 = vector.broadcast %532 : vector<16x1xf32> to vector<16x32xf32>
    %534 = arith.subf %526, %533 : vector<16x32xf32>
    %535 = arith.mulf %534, %534 : vector<16x32xf32>
    %cst_229 = arith.constant dense<0.000000e+00> : vector<16xf32>
    %536 = vector.multi_reduction <add>, %535, %cst_229 [1] : vector<16x32xf32> to vector<16xf32>
    %537 = vector.shape_cast %536 : vector<16xf32> to vector<16x1xf32>
    %cst_230 = arith.constant 3.200000e+01 : f32
    %538 = vector.broadcast %cst_230 : f32 to vector<16x1xf32>
    %539 = arith.divf %537, %538 : vector<16x1xf32>
    %cst_231 = arith.constant 9.99999974E-6 : f32
    %540 = vector.broadcast %cst_231 : f32 to vector<16x1xf32>
    %541 = arith.addf %539, %540 : vector<16x1xf32>
    %542 = math.rsqrt %541 : vector<16x1xf32>
    %543 = vector.broadcast %542 : vector<16x1xf32> to vector<16x32xf32>
    %544 = arith.mulf %534, %543 : vector<16x32xf32>
    %545 = vector.broadcast %528 : vector<1x32xf32> to vector<16x32xf32>
    %546 = arith.mulf %544, %545 : vector<16x32xf32>
    %547 = arith.truncf %546 : vector<16x32xf32> to vector<16x32xbf16>
    %c1_232 = arith.constant 1 : index
    %c1_233 = arith.constant 1 : index
    %c0_234 = arith.constant 0 : index
    %c0_235 = arith.constant 0 : index
    %548 = vector.load %arg9[%c1_232, %c1_233, %c0_234, %c0_235] : memref<2x2x32x128xbf16, #tpu.memory_space<vmem>>, vector<1x1x32x128xbf16>
    %549 = vector.shape_cast %548 : vector<1x1x32x128xbf16> to vector<32x128xbf16>
    %cst_236 = arith.constant dense<0.000000e+00> : vector<16x128xf32>
    %550 = tpu.matmul %547, %549, %cst_236 {dimension_numbers = #tpu.dot_dimension_numbers<[1], [0], [0], [1], [0, 0, 1, 1], [], []>} : vector<16x32xbf16>, vector<32x128xbf16>, vector<16x128xf32> -> vector<16x128xf32>
    %cst_237 = arith.constant 5.000000e-01 : f32
    %551 = vector.broadcast %cst_237 : f32 to vector<16x128xf32>
    %552 = arith.mulf %551, %550 : vector<16x128xf32>
    %cst_238 = arith.constant 4.471500e-02 : f32
    %553 = vector.broadcast %cst_238 : f32 to vector<16x128xf32>
    %554 = arith.mulf %553, %550 : vector<16x128xf32>
    %555 = arith.mulf %554, %550 : vector<16x128xf32>
    %556 = arith.mulf %555, %550 : vector<16x128xf32>
    %557 = arith.addf %550, %556 : vector<16x128xf32>
    %cst_239 = arith.constant 0.797884583 : f32
    %558 = vector.broadcast %cst_239 : f32 to vector<16x128xf32>
    %559 = arith.mulf %558, %557 : vector<16x128xf32>
    %560 = math.tanh %559 : vector<16x128xf32>
    %cst_240 = arith.constant 1.000000e+00 : f32
    %561 = vector.broadcast %cst_240 : f32 to vector<16x128xf32>
    %562 = arith.addf %561, %560 : vector<16x128xf32>
    %563 = arith.mulf %552, %562 : vector<16x128xf32>
    %564 = arith.truncf %563 : vector<16x128xf32> to vector<16x128xbf16>
    %c1_241 = arith.constant 1 : index
    %c1_242 = arith.constant 1 : index
    %c0_243 = arith.constant 0 : index
    %c0_244 = arith.constant 0 : index
    %565 = vector.load %arg10[%c1_241, %c1_242, %c0_243, %c0_244] : memref<2x2x128x32xbf16, #tpu.memory_space<vmem>>, vector<1x1x128x32xbf16>
    %566 = vector.shape_cast %565 : vector<1x1x128x32xbf16> to vector<128x32xbf16>
    %cst_245 = arith.constant dense<0.000000e+00> : vector<16x32xf32>
    %567 = tpu.matmul %564, %566, %cst_245 {dimension_numbers = #tpu.dot_dimension_numbers<[1], [0], [0], [1], [0, 0, 1, 1], [], []>} : vector<16x128xbf16>, vector<128x32xbf16>, vector<16x32xf32> -> vector<16x32xf32>
    %568 = arith.addf %526, %567 : vector<16x32xf32>
    %c1_246 = arith.constant 1 : index
    %c0_247 = arith.constant 0 : index
    %c0_248 = arith.constant 0 : index
    %569 = vector.load %arg11[%c1_246, %c0_247, %c0_248] : memref<2x1x32xf32, #tpu.memory_space<vmem>>, vector<1x1x32xf32>
    %570 = vector.shape_cast %569 : vector<1x1x32xf32> to vector<1x32xf32>
    %cst_249 = arith.constant dense<0.000000e+00> : vector<16xf32>
    %571 = vector.multi_reduction <add>, %568, %cst_249 [1] : vector<16x32xf32> to vector<16xf32>
    %572 = vector.shape_cast %571 : vector<16xf32> to vector<16x1xf32>
    %cst_250 = arith.constant 3.200000e+01 : f32
    %573 = vector.broadcast %cst_250 : f32 to vector<16x1xf32>
    %574 = arith.divf %572, %573 : vector<16x1xf32>
    %575 = vector.broadcast %574 : vector<16x1xf32> to vector<16x32xf32>
    %576 = arith.subf %568, %575 : vector<16x32xf32>
    %577 = arith.mulf %576, %576 : vector<16x32xf32>
    %cst_251 = arith.constant dense<0.000000e+00> : vector<16xf32>
    %578 = vector.multi_reduction <add>, %577, %cst_251 [1] : vector<16x32xf32> to vector<16xf32>
    %579 = vector.shape_cast %578 : vector<16xf32> to vector<16x1xf32>
    %cst_252 = arith.constant 3.200000e+01 : f32
    %580 = vector.broadcast %cst_252 : f32 to vector<16x1xf32>
    %581 = arith.divf %579, %580 : vector<16x1xf32>
    %cst_253 = arith.constant 9.99999974E-6 : f32
    %582 = vector.broadcast %cst_253 : f32 to vector<16x1xf32>
    %583 = arith.addf %581, %582 : vector<16x1xf32>
    %584 = math.rsqrt %583 : vector<16x1xf32>
    %585 = vector.broadcast %584 : vector<16x1xf32> to vector<16x32xf32>
    %586 = arith.mulf %576, %585 : vector<16x32xf32>
    %587 = vector.broadcast %570 : vector<1x32xf32> to vector<16x32xf32>
    %588 = arith.mulf %586, %587 : vector<16x32xf32>
    %c1_254 = arith.constant 1 : index
    %c0_255 = arith.constant 0 : index
    %c0_256 = arith.constant 0 : index
    %589 = vector.load %arg12[%c1_254, %c0_255, %c0_256] : memref<2x16x32xf32, #tpu.memory_space<vmem>>, vector<1x16x32xf32>
    %590 = vector.shape_cast %589 : vector<1x16x32xf32> to vector<16x32xf32>
    %591 = vector.shape_cast %588 : vector<16x32xf32> to vector<1x16x32xf32>
    tpu.vector_store %arg12[%c1_254, %c0_255, %c0_256], %591 {strides = array<i32>} : memref<2x16x32xf32, #tpu.memory_space<vmem>>, vector<1x16x32xf32>,
    return
  }
  func.func @transform_0(%arg0: i32) -> (i32, i32) {
    %c0_i32 = arith.constant 0 : i32
    %c0_i32_0 = arith.constant 0 : i32
    %c0_i32_1 = arith.constant 0 : i32
    return %c0_i32, %c0_i32_0 : i32, i32
  }
  func.func @transform_1(%arg0: i32) -> (i32, i32, i32) {
    %c0_i32 = arith.constant 0 : i32
    %c0_i32_0 = arith.constant 0 : i32
    %c0_i32_1 = arith.constant 0 : i32
    return %arg0, %c0_i32, %c0_i32_0 : i32, i32, i32
  }
  func.func @transform_2(%arg0: i32) -> (i32, i32, i32) {
    %c0_i32 = arith.constant 0 : i32
    %c0_i32_0 = arith.constant 0 : i32
    %c0_i32_1 = arith.constant 0 : i32
    return %arg0, %c0_i32, %c0_i32_0 : i32, i32, i32
  }
  func.func @transform_3(%arg0: i32) -> (i32, i32, i32) {
    %c0_i32 = arith.constant 0 : i32
    %c0_i32_0 = arith.constant 0 : i32
    %c0_i32_1 = arith.constant 0 : i32
    return %arg0, %c0_i32, %c0_i32_0 : i32, i32, i32
  }
  func.func @transform_4(%arg0: i32) -> (i32, i32, i32, i32) {
    %c0_i32 = arith.constant 0 : i32
    %c0_i32_0 = arith.constant 0 : i32
    %c0_i32_1 = arith.constant 0 : i32
    %c0_i32_2 = arith.constant 0 : i32
    return %arg0, %c0_i32, %c0_i32_0, %c0_i32_1 : i32, i32, i32, i32
  }
  func.func @transform_5(%arg0: i32) -> (i32, i32, i32, i32) {
    %c0_i32 = arith.constant 0 : i32
    %c0_i32_0 = arith.constant 0 : i32
    %c0_i32_1 = arith.constant 0 : i32
    %c0_i32_2 = arith.constant 0 : i32
    return %arg0, %c0_i32, %c0_i32_0, %c0_i32_1 : i32, i32, i32, i32
  }
  func.func @transform_6(%arg0: i32) -> (i32, i32, i32, i32) {
    %c0_i32 = arith.constant 0 : i32
    %c0_i32_0 = arith.constant 0 : i32
    %c0_i32_1 = arith.constant 0 : i32
    %c0_i32_2 = arith.constant 0 : i32
    return %arg0, %c0_i32, %c0_i32_0, %c0_i32_1 : i32, i32, i32, i32
  }
  func.func @transform_7(%arg0: i32) -> (i32, i32, i32, i32) {
    %c0_i32 = arith.constant 0 : i32
    %c0_i32_0 = arith.constant 0 : i32
    %c0_i32_1 = arith.constant 0 : i32
    %c0_i32_2 = arith.constant 0 : i32
    return %arg0, %c0_i32, %c0_i32_0, %c0_i32_1 : i32, i32, i32, i32
  }
  func.func @transform_8(%arg0: i32) -> (i32, i32, i32, i32) {
    %c0_i32 = arith.constant 0 : i32
    %c0_i32_0 = arith.constant 0 : i32
    %c0_i32_1 = arith.constant 0 : i32
    %c0_i32_2 = arith.constant 0 : i32
    return %arg0, %c0_i32, %c0_i32_0, %c0_i32_1 : i32, i32, i32, i32
  }
  func.func @transform_9(%arg0: i32) -> (i32, i32, i32, i32) {
    %c0_i32 = arith.constant 0 : i32
    %c0_i32_0 = arith.constant 0 : i32
    %c0_i32_1 = arith.constant 0 : i32
    %c0_i32_2 = arith.constant 0 : i32
    return %arg0, %c0_i32, %c0_i32_0, %c0_i32_1 : i32, i32, i32, i32
  }
  func.func @transform_10(%arg0: i32) -> (i32, i32, i32) {
    %c0_i32 = arith.constant 0 : i32
    %c0_i32_0 = arith.constant 0 : i32
    %c0_i32_1 = arith.constant 0 : i32
    return %arg0, %c0_i32, %c0_i32_0 : i32, i32, i32
  }
  func.func @transform_11(%arg0: i32) -> (i32, i32, i32) {
    %c0_i32 = arith.constant 0 : i32
    %c0_i32_0 = arith.constant 0 : i32
    %c0_i32_1 = arith.constant 0 : i32
    return %arg0, %c0_i32, %c0_i32_0 : i32, i32, i32
  }
}

</mosaic_0001>

<llo_original>
// kernel: sub.16
$region0: #{sub.16}
  #allocation0 [shape = 's32[1]{0}', space=sflag, size = 0x4, scoped, tag = 'scoped memory for sub.16']
  %s0 = inlined_call_operand.vmem [shape: s32[1,16], index: 0, kind: input, shape index: {}]
  %s1 = inlined_call_operand.vmem [shape: s32[1,16], index: 1, kind: input, shape index: {}]
  %s2 = inlined_call_operand.vmem [shape: s32[1,16], index: 2, kind: output, shape index: {}]
  %v3 = vld [vmem:[%s0] sm:$0x1]
  %v4 = vld [vmem:[%s1] sm:$0x1]
  %5 = xla_tuple %v3, %v4
  %6 = xla_tuple %5
  %v7 = vsub.s32 %v3, %v4
  %8 = xla_tuple %v7
  %9 = vst [vmem:[%s2] sm:$0x1] %v7

// kernel: tile.30
$region0: #{tile.30}
  %s0 = inlined_call_operand.vmem [shape: f32[2,16,2,16], index: 0, kind: input, shape index: {}]
  %s1 = inlined_call_operand.vmem [shape: f32[2,16,32], index: 1, kind: output, shape index: {}]
  $region1: #{tile.30} parent=0
    #allocation0 [shape = 'u8[131072]{0}', space=vmem, size = 0x20000, scoped, tag = 'scoped mem for input reshape']
    %s3 = sshll.u32 1, 2
    %s4 = ssub.s32 %s3, 1
    %s5 = smul.addr 2, 31
    %s6 = scalar_lea.vmem %s0, %s5
    %v7 = vld [vmem:[%s6] sm:%s4]
    %s8 = scalar_lea.vmem [#allocation0], 248
    %9 = vst [vmem:[%s8] sm:%s4] %v7
    %s10 = smul.addr 2, 30
    %s11 = scalar_lea.vmem %s0, %s10
    %v12 = vld [vmem:[%s11] sm:%s4]
    %s13 = scalar_lea.vmem [#allocation0], 240
    %14 = vst [vmem:[%s13] sm:%s4] %v12
    %s15 = smul.addr 2, 29
    %s16 = scalar_lea.vmem %s0, %s15
    %v17 = vld [vmem:[%s16] sm:%s4]
    %s18 = scalar_lea.vmem [#allocation0], 232
    %19 = vst [vmem:[%s18] sm:%s4] %v17
    %s20 = smul.addr 2, 28
    %s21 = scalar_lea.vmem %s0, %s20
    %v22 = vld [vmem:[%s21] sm:%s4]
    %s23 = scalar_lea.vmem [#allocation0], 224
    %24 = vst [vmem:[%s23] sm:%s4] %v22
    %s25 = smul.addr 2, 27
    %s26 = scalar_lea.vmem %s0, %s25
    %v27 = vld [vmem:[%s26] sm:%s4]
    %s28 = scalar_lea.vmem [#allocation0], 216
    %29 = vst [vmem:[%s28] sm:%s4] %v27
    %s30 = smul.addr 2, 26
    %s31 = scalar_lea.vmem %s0, %s30
    %v32 = vld [vmem:[%s31] sm:%s4]
    %s33 = scalar_lea.vmem [#allocation0], 208
    %34 = vst [vmem:[%s33] sm:%s4] %v32
    %s35 = smul.addr 2, 25
    %s36 = scalar_lea.vmem %s0, %s35
    %v37 = vld [vmem:[%s36] sm:%s4]
    %s38 = scalar_lea.vmem [#allocation0], 200
    %39 = vst [vmem:[%s38] sm:%s4] %v37
    %s40 = smul.addr 2, 24
    %s41 = scalar_lea.vmem %s0, %s40
    %v42 = vld [vmem:[%s41] sm:%s4]
    %s43 = scalar_lea.vmem [#allocation0], 192
    %44 = vst [vmem:[%s43] sm:%s4] %v42
    %s45 = smul.addr 2, 23
    %s46 = scalar_lea.vmem %s0, %s45
    %v47 = vld [vmem:[%s46] sm:%s4]
    %s48 = scalar_lea.vmem [#allocation0], 184
    %49 = vst [vmem:[%s48] sm:%s4] %v47
    %s50 = smul.addr 2, 22
    %s51 = scalar_lea.vmem %s0, %s50
    %v52 = vld [vmem:[%s51] sm:%s4]
    %s53 = scalar_lea.vmem [#allocation0], 176
    %54 = vst [vmem:[%s53] sm:%s4] %v52
    %s55 = smul.addr 2, 21
    %s56 = scalar_lea.vmem %s0, %s55
    %v57 = vld [vmem:[%s56] sm:%s4]
    %s58 = scalar_lea.vmem [#allocation0], 168
    %59 = vst [vmem:[%s58] sm:%s4] %v57
    %s60 = smul.addr 2, 20
    %s61 = scalar_lea.vmem %s0, %s60
    %v62 = vld [vmem:[%s61] sm:%s4]
    %s63 = scalar_lea.vmem [#allocation0], 160
    %64 = vst [vmem:[%s63] sm:%s4] %v62
    %s65 = smul.addr 2, 19
    %s66 = scalar_lea.vmem %s0, %s65
    %v67 = vld [vmem:[%s66] sm:%s4]
    %s68 = scalar_lea.vmem [#allocation0], 152
    %69 = vst [vmem:[%s68] sm:%s4] %v67
    %s70 = smul.addr 2, 18
    %s71 = scalar_lea.vmem %s0, %s70
    %v72 = vld [vmem:[%s71] sm:%s4]
    %s73 = scalar_lea.vmem [#allocation0], 144
    %74 = vst [vmem:[%s73] sm:%s4] %v72
    %s75 = smul.addr 2, 17
    %s76 = scalar_lea.vmem %s0, %s75
    %v77 = vld [vmem:[%s76] sm:%s4]
    %s78 = scalar_lea.vmem [#allocation0], 136
    %79 = vst [vmem:[%s78] sm:%s4] %v77
    %s80 = smul.addr 2, 16
    %s81 = scalar_lea.vmem %s0, %s80
    %v82 = vld [vmem:[%s81] sm:%s4]
    %s83 = scalar_lea.vmem [#allocation0], 128
    %84 = vst [vmem:[%s83] sm:%s4] %v82
    %s85 = smul.addr 2, 15
    %s86 = scalar_lea.vmem %s0, %s85
    %v87 = vld [vmem:[%s86] sm:%s4]
    %s88 = scalar_lea.vmem [#allocation0], 120
    %89 = vst [vmem:[%s88] sm:%s4] %v87
    %s90 = smul.addr 2, 14
    %s91 = scalar_lea.vmem %s0, %s90
    %v92 = vld [vmem:[%s91] sm:%s4]
    %s93 = scalar_lea.vmem [#allocation0], 112
    %94 = vst [vmem:[%s93] sm:%s4] %v92
    %s95 = smul.addr 2, 13
    %s96 = scalar_lea.vmem %s0, %s95
    %v97 = vld [vmem:[%s96] sm:%s4]
    %s98 = scalar_lea.vmem [#allocation0], 104
    %99 = vst [vmem:[%s98] sm:%s4] %v97
    %s100 = smul.addr 2, 12
    %s101 = scalar_lea.vmem %s0, %s100
    %v102 = vld [vmem:[%s101] sm:%s4]
    %s103 = scalar_lea.vmem [#allocation0], 96
    %104 = vst [vmem:[%s103] sm:%s4] %v102
    %s105 = smul.addr 2, 11
    %s106 = scalar_lea.vmem %s0, %s105
    %v107 = vld [vmem:[%s106] sm:%s4]
    %s108 = scalar_lea.vmem [#allocation0], 88
    %109 = vst [vmem:[%s108] sm:%s4] %v107
    %s110 = smul.addr 2, 10
    %s111 = scalar_lea.vmem %s0, %s110
    %v112 = vld [vmem:[%s111] sm:%s4]
    %s113 = scalar_lea.vmem [#allocation0], 80
    %114 = vst [vmem:[%s113] sm:%s4] %v112
    %s115 = smul.addr 2, 9
    %s116 = scalar_lea.vmem %s0, %s115
    %v117 = vld [vmem:[%s116] sm:%s4]
    %s118 = scalar_lea.vmem [#allocation0], 72
    %119 = vst [vmem:[%s118] sm:%s4] %v117
    %s120 = smul.addr 2, 8
    %s121 = scalar_lea.vmem %s0, %s120
    %v122 = vld [vmem:[%s121] sm:%s4]
    %s123 = scalar_lea.vmem [#allocation0], 64
    %124 = vst [vmem:[%s123] sm:%s4] %v122
    %s125 = smul.addr 2, 7
    %s126 = scalar_lea.vmem %s0, %s125
    %v127 = vld [vmem:[%s126] sm:%s4]
    %s128 = scalar_lea.vmem [#allocation0], 56
    %129 = vst [vmem:[%s128] sm:%s4] %v127
    %s130 = smul.addr 2, 6
    %s131 = scalar_lea.vmem %s0, %s130
    %v132 = vld [vmem:[%s131] sm:%s4]
    %s133 = scalar_lea.vmem [#allocation0], 48
    %134 = vst [vmem:[%s133] sm:%s4] %v132
    %s135 = smul.addr 2, 5
    %s136 = scalar_lea.vmem %s0, %s135
    %v137 = vld [vmem:[%s136] sm:%s4]
    %s138 = scalar_lea.vmem [#allocation0], 40
    %139 = vst [vmem:[%s138] sm:%s4] %v137
    %s140 = smul.addr 2, 4
    %s141 = scalar_lea.vmem %s0, %s140
    %v142 = vld [vmem:[%s141] sm:%s4]
    %s143 = scalar_lea.vmem [#allocation0], 32
    %144 = vst [vmem:[%s143] sm:%s4] %v142
    %s145 = smul.addr 2, 3
    %s146 = scalar_lea.vmem %s0, %s145
    %v147 = vld [vmem:[%s146] sm:%s4]
    %s148 = scalar_lea.vmem [#allocation0], 24
    %149 = vst [vmem:[%s148] sm:%s4] %v147
    %s150 = smul.addr 2, 2
    %s151 = scalar_lea.vmem %s0, %s150
    %v152 = vld [vmem:[%s151] sm:%s4]
    %s153 = scalar_lea.vmem [#allocation0], 16
    %154 = vst [vmem:[%s153] sm:%s4] %v152
    %s155 = scalar_lea.vmem %s0, 2
    %v156 = vld [vmem:[%s155] sm:%s4]
    %s157 = scalar_lea.vmem [#allocation0], 8
    %158 = vst [vmem:[%s157] sm:%s4] %v156
    %v159 = vld [vmem:[%s0] sm:%s4]
    %160 = vst [vmem:[#allocation0] sm:%s4] %v159
    %v161 = vld [vmem:[#allocation0] ss:$8 sm:$0xf]
    %v162 = vld [vmem:[#allocation0] ss:$8 sm:$0xf0]
    %vm163 = vcmask 1047556
    %v164 = vsel %vm163, %v162, %v161
    %vm165 = vcmask 130048
    %166 = vst.msk [vmem:[%s1] sm:$0xff] %vm165, %v164
    %s167 = scalar_lea.vmem [#allocation0], 64
    %v168 = vld [vmem:[%s167] ss:$8 sm:$0xf]
    %s169 = scalar_lea.vmem [#allocation0], 64
    %v170 = vld [vmem:[%s169] ss:$8 sm:$0xf0]
    %vm171 = vcmask 1047556
    %v172 = vsel %vm171, %v170, %v168
    %vm173 = vcmask 130048
    %s174 = scalar_lea.vmem %s1, 8
    %175 = vst.msk [vmem:[%s174] sm:$0xff] %vm173, %v172
    %s176 = scalar_lea.vmem [#allocation0], 128
    %v177 = vld [vmem:[%s176] ss:$8 sm:$0xf]
    %s178 = scalar_lea.vmem [#allocation0], 128
    %v179 = vld [vmem:[%s178] ss:$8 sm:$0xf0]
    %vm180 = vcmask 1047556
    %v181 = vsel %vm180, %v179, %v177
    %vm182 = vcmask 130048
    %s183 = scalar_lea.vmem %s1, 16
    %184 = vst.msk [vmem:[%s183] sm:$0xff] %vm182, %v181
    %s185 = scalar_lea.vmem [#allocation0], 192
    %v186 = vld [vmem:[%s185] ss:$8 sm:$0xf]
    %s187 = scalar_lea.vmem [#allocation0], 192
    %v188 = vld [vmem:[%s187] ss:$8 sm:$0xf0]
    %vm189 = vcmask 1047556
    %v190 = vsel %vm189, %v188, %v186
    %vm191 = vcmask 130048
    %s192 = scalar_lea.vmem %s1, 24
    %193 = vst.msk [vmem:[%s192] sm:$0xff] %vm191, %v190
    %s194 = scalar_lea.vmem [#allocation0], 1
    %v195 = vld [vmem:[%s194] ss:$8 sm:$0xf]
    %s196 = scalar_lea.vmem [#allocation0], 1
    %v197 = vld [vmem:[%s196] ss:$8 sm:$0xf0]
    %vm198 = vcmask 1047556
    %v199 = vsel %vm198, %v197, %v195
    %200 = vrot.lane.b32.xlu0 %v199, 16
    %v201 = vpop.permute.xlu0 %200
    %vm202 = vcmask 261248
    %203 = vst.msk [vmem:[%s1] sm:$0xff] %vm202, %v201
    %s204 = scalar_lea.vmem [#allocation0], 65
    %v205 = vld [vmem:[%s204] ss:$8 sm:$0xf]
    %s206 = scalar_lea.vmem [#allocation0], 65
    %v207 = vld [vmem:[%s206] ss:$8 sm:$0xf0]
    %vm208 = vcmask 1047556
    %v209 = vsel %vm208, %v207, %v205
    %210 = vrot.lane.b32.xlu0 %v209, 16
    %v211 = vpop.permute.xlu0 %210
    %vm212 = vcmask 261248
    %s213 = scalar_lea.vmem %s1, 8
    %214 = vst.msk [vmem:[%s213] sm:$0xff] %vm212, %v211
    %s215 = scalar_lea.vmem [#allocation0], 129
    %v216 = vld [vmem:[%s215] ss:$8 sm:$0xf]
    %s217 = scalar_lea.vmem [#allocation0], 129
    %v218 = vld [vmem:[%s217] ss:$8 sm:$0xf0]
    %vm219 = vcmask 1047556
    %v220 = vsel %vm219, %v218, %v216
    %221 = vrot.lane.b32.xlu0 %v220, 16
    %v222 = vpop.permute.xlu0 %221
    %vm223 = vcmask 261248
    %s224 = scalar_lea.vmem %s1, 16
    %225 = vst.msk [vmem:[%s224] sm:$0xff] %vm223, %v222
    %s226 = scalar_lea.vmem [#allocation0], 193
    %v227 = vld [vmem:[%s226] ss:$8 sm:$0xf]
    %s228 = scalar_lea.vmem [#allocation0], 193
    %v229 = vld [vmem:[%s228] ss:$8 sm:$0xf0]
    %vm230 = vcmask 1047556
    %v231 = vsel %vm230, %v229, %v227
    %232 = vrot.lane.b32.xlu0 %v231, 16
    %v233 = vpop.permute.xlu0 %232
    %vm234 = vcmask 261248
    %s235 = scalar_lea.vmem %s1, 24
    %236 = vst.msk [vmem:[%s235] sm:$0xff] %vm234, %v233

// kernel: transformer_encoder_forward.1
$region0: #{transformer_encoder_forward.1}
  #allocation0 [shape = 'u32[]', space=smem, size = 0x4, offset = 0x4, fixed_abs, tag = 'smem constant byte address 0x4 - core index']
  #allocation1 [shape = 'u32[144,128]{1,0:T(1,128)}', space=vmem, size = 0x12000, scoped, tag = 'internal scratch']
  %s0 = inlined_call_operand.vmem [shape: f32[16,32], index: 0, kind: input, shape index: {}]
  %s1 = inlined_call_operand.vmem [shape: f32[2,16,32], index: 1, kind: input, shape index: {}]
  %s2 = inlined_call_operand.vmem [shape: f32[2,16,32], index: 2, kind: input, shape index: {}]
  %s3 = inlined_call_operand.vmem [shape: f32[2,16,16], index: 3, kind: input, shape index: {}]
  %s4 = inlined_call_operand.vmem [shape: f32[2,2,1,32], index: 4, kind: input, shape index: {}]
  %s5 = inlined_call_operand.vmem [shape: bf16[2,2,32,160], index: 5, kind: input, shape index: {}]
  %s6 = inlined_call_operand.vmem [shape: bf16[2,2,32,32], index: 6, kind: input, shape index: {}]
  %s7 = inlined_call_operand.vmem [shape: f32[2,2,1,32], index: 7, kind: input, shape index: {}]
  %s8 = inlined_call_operand.vmem [shape: bf16[2,2,32,128], index: 8, kind: input, shape index: {}]
  %s9 = inlined_call_operand.vmem [shape: bf16[2,2,128,32], index: 9, kind: input, shape index: {}]
  %s10 = inlined_call_operand.vmem [shape: f32[2,1,32], index: 10, kind: input, shape index: {}]
  %s11 = inlined_call_operand.vmem [shape: f32[2,16,32], index: 11, kind: output, shape index: {}]
  %s12 = sld [smem:[#allocation0]]
  $region54: #{transformer_encoder_forward.1} parent=0
    _
  %s14 = ssub.s32 1, %s12
  %s15 = scalar_select 0, %s14, %s12
  // Predicated region
  $region2: #{transformer_encoder_forward.1} parent=0 // pred_check
    _
  $region3: #{transformer_encoder_forward.1} parent=0 // pred_check_branch
    %17 = sbr.rel (0) target = $region5
  $region4: #{transformer_encoder_forward.1} parent=0 // pred_region
    _
  $region5: #{transformer_encoder_forward.1} parent=0 // pred_fallthru
    _
  // Predicated region
  $region6: #{transformer_encoder_forward.1} parent=0 // pred_check
    _
  $region7: #{transformer_encoder_forward.1} parent=0 // pred_check_branch
    %19 = sbr.rel (0) target = $region9
  $region8: #{transformer_encoder_forward.1} parent=0 // pred_region
    _
  $region9: #{transformer_encoder_forward.1} parent=0 // pred_fallthru
    _
  // Predicated region
  $region10: #{transformer_encoder_forward.1} parent=0 // pred_check
    _
  $region11: #{transformer_encoder_forward.1} parent=0 // pred_check_branch
    %21 = sbr.rel (0) target = $region13
  $region12: #{transformer_encoder_forward.1} parent=0 // pred_region
    _
  $region13: #{transformer_encoder_forward.1} parent=0 // pred_fallthru
    _
  // Predicated region
  $region14: #{transformer_encoder_forward.1} parent=0 // pred_check
    _
  $region15: #{transformer_encoder_forward.1} parent=0 // pred_check_branch
    %23 = sbr.rel (0) target = $region17
  $region16: #{transformer_encoder_forward.1} parent=0 // pred_region
    _
  $region17: #{transformer_encoder_forward.1} parent=0 // pred_fallthru
    _
  // Predicated region
  $region18: #{transformer_encoder_forward.1} parent=0 // pred_check
    _
  $region19: #{transformer_encoder_forward.1} parent=0 // pred_check_branch
    %25 = sbr.rel (0) target = $region21
  $region20: #{transformer_encoder_forward.1} parent=0 // pred_region
    _
  $region21: #{transformer_encoder_forward.1} parent=0 // pred_fallthru
    _
  // Predicated region
  $region22: #{transformer_encoder_forward.1} parent=0 // pred_check
    _
  $region23: #{transformer_encoder_forward.1} parent=0 // pred_check_branch
    %27 = sbr.rel (0) target = $region25
  $region24: #{transformer_encoder_forward.1} parent=0 // pred_region
    _
  $region25: #{transformer_encoder_forward.1} parent=0 // pred_fallthru
    _
  // Predicated region
  $region26: #{transformer_encoder_forward.1} parent=0 // pred_check
    _
  $region27: #{transformer_encoder_forward.1} parent=0 // pred_check_branch
    %29 = sbr.rel (0) target = $region29
  $region28: #{transformer_encoder_forward.1} parent=0 // pred_region
    _
  $region29: #{transformer_encoder_forward.1} parent=0 // pred_fallthru
    _
  // Predicated region
  $region30: #{transformer_encoder_forward.1} parent=0 // pred_check
    _
  $region31: #{transformer_encoder_forward.1} parent=0 // pred_check_branch
    %31 = sbr.rel (0) target = $region33
  $region32: #{transformer_encoder_forward.1} parent=0 // pred_region
    _
  $region33: #{transformer_encoder_forward.1} parent=0 // pred_fallthru
    _
  // Predicated region
  $region34: #{transformer_encoder_forward.1} parent=0 // pred_check
    _
  $region35: #{transformer_encoder_forward.1} parent=0 // pred_check_branch
    %33 = sbr.rel (0) target = $region37
  $region36: #{transformer_encoder_forward.1} parent=0 // pred_region
    _
  $region37: #{transformer_encoder_forward.1} parent=0 // pred_fallthru
    _
  // Predicated region
  $region38: #{transformer_encoder_forward.1} parent=0 // pred_check
    _
  $region39: #{transformer_encoder_forward.1} parent=0 // pred_check_branch
    %35 = sbr.rel (0) target = $region41
  $region40: #{transformer_encoder_forward.1} parent=0 // pred_region
    _
  $region41: #{transformer_encoder_forward.1} parent=0 // pred_fallthru
    _
  // Predicated region
  $region42: #{transformer_encoder_forward.1} parent=0 // pred_check
    _
  $region43: #{transformer_encoder_forward.1} parent=0 // pred_check_branch
    %37 = sbr.rel (0) target = $region45
  $region44: #{transformer_encoder_forward.1} parent=0 // pred_region
    _
  $region45: #{transformer_encoder_forward.1} parent=0 // pred_fallthru
    _
  %v39 = vld [vmem:[%s0] sm:$0xff]
  %v40 = vld [vmem:[%s0 + $0x8] sm:$0xff]
  %v41 = vld [vmem:[%s1] sm:$0xff]
  %v42 = vld [vmem:[%s1 + $0x8] sm:$0xff]
  %v43 = vld [vmem:[%s2] sm:$0xff]
  %v44 = vld [vmem:[%s2 + $0x8] sm:$0xff]
  %v45 = vld [vmem:[%s3] sm:$0xff]
  %v46 = vld [vmem:[%s3 + $0x8] sm:$0xff]
  %v47 = vld [vmem:[%s4] sm:$0x1]
  %vm48 = vcmask 261120
  %v49 = vsel %vm48, %v39, 0.0
  %50 = vadd.xlane.f32.xlu0 %v49
  %v51 = vpop.xlane.xlu0 %50
  %v52 = vsel %vm48, %v40, 0.0
  %53 = vadd.xlane.f32.xlu0 %v52
  %v54 = vpop.xlane.xlu0 %53
  %v55 = vrcp.pop 32.0
  %v56 = vmul.f32 %v51, %v55
  %v57 = vmul.f32 %v54, %v55
  %v58 = vsub.f32 %v39, %v56
  %v59 = vsub.f32 %v40, %v57
  %v60 = vmul.f32 %v58, %v58
  %v61 = vmul.f32 %v59, %v59
  %v62 = vsel %vm48, %v60, 0.0
  %63 = vadd.xlane.f32.xlu0 %v62
  %v64 = vpop.xlane.xlu0 %63
  %v65 = vsel %vm48, %v61, 0.0
  %66 = vadd.xlane.f32.xlu0 %v65
  %v67 = vpop.xlane.xlu0 %66
  %v68 = vmul.f32 %v64, %v55
  %v69 = vmul.f32 %v67, %v55
  %v70 = vadd.f32 %v68, 1e-05
  %v71 = vadd.f32 %v69, 1e-05
  %v72 = vrsqrt.pop %v70
  %v73 = vrsqrt.pop %v71
  %v74 = vmul.f32 %v58, %v72
  %v75 = vmul.f32 %v59, %v73
  %v77 = vlaneseq
  %v78 = vshrl.u32 %v77, 7
  %v79 = vsub.s32 0, %v78
  %v80 = vrot.slane %v47, %v79
  %v82 = vmul.f32 %v74, %v80
  %v83 = vmul.f32 %v75, %v80
  %v84 = vpack.c.bf16 %v83, %v82
  %v85 = vld [vmem:[%s5] sm:$0xff]
  %v86 = vld [vmem:[%s5 + $0x8] sm:$0xff]
  %v87 = vld [vmem:[%s5 + $0x10] sm:$0xff]
  %v88 = vld [vmem:[%s5 + $0x18] sm:$0xff]
  %v93 = vunpack.c.l.b16 %v85
  %v94 = vunpack.c.h.b16 %v85
  %v95 = vunpack.c.l.b16 %v86
  %v96 = vunpack.c.h.b16 %v86
  %v97 = vunpack.c.l.b16 %v87
  %v98 = vunpack.c.h.b16 %v87
  %v99 = vunpack.c.l.b16 %v88
  %v100 = vunpack.c.h.b16 %v88
  %v101 = vpack.c.b16 %v95, %v93
  %v102 = vpack.c.b16 %v96, %v94
  %v103 = vpack.c.b16 %v99, %v97
  %v104 = vpack.c.b16 %v100, %v98
  %v110 = vsel %vm48, %v84, 0
  %112 = vmatprep.subr.bf16.mxu0 0
  %113 = vmatpush1.bf16.msra.mxu0 0
  %114 = vmatprep.subr.bf16.mxu0 0
  %115 = vmatpush1.bf16.msra.mxu0 0
  %116 = vmatprep.subr.bf16.mxu0 0
  %117 = vmatpush1.bf16.msra.mxu0 0
  %118 = vmatprep.subr.bf16.mxu0 0
  %119 = vmatpush1.bf16.msra.mxu0 0
  %120 = vmatprep.subr.bf16.mxu0 0
  %121 = vmatpush1.bf16.msra.mxu0 0
  %122 = vmatprep.subr.bf16.mxu0 0
  %123 = vmatpush1.bf16.msra.mxu0 0
  %124 = vmatprep.subr.bf16.mxu0 %v104
  %125 = vmatpush1.bf16.msra.mxu0 %v103
  %126 = vmatprep.subr.bf16.mxu0 %v102
  %127 = vmatpush1.bf16.msra.mxu0 %v101
  %128 = vmatprep.subr.bf16.mxu0 0
  %129 = vmatpush2.bf16.msra.mxu0 0
  %130 = vmatprep.subr.bf16.mxu0 0
  %131 = vmatpush2.bf16.msra.mxu0 0
  %132 = vmatprep.subr.bf16.mxu0 0
  %133 = vmatpush2.bf16.msra.mxu0 0
  %134 = vmatprep.subr.bf16.mxu0 0
  %135 = vmatpush2.bf16.msra.mxu0 0
  %136 = vmatprep.subr.bf16.mxu0 0
  %137 = vmatpush2.bf16.msra.mxu0 0
  %138 = vmatprep.subr.bf16.mxu0 0
  %139 = vmatpush2.bf16.msra.mxu0 0
  %140 = vmatprep.subr.bf16.mxu0 0
  %141 = vmatpush2.bf16.msra.mxu0 0
  %142 = vmatprep.subr.bf16.mxu0 0
  %143 = vmatpush2.bf16.msra.mxu0 0
  %144 = vmatprep.mubr.bf16.mxu0 0
  %145 = vmatmul.mubr.bf16.gmra.mxu0 %v110
  %v146 = vpop.f32.mrf.mxu0
  %v147 = vadd.f32 0.0, %v146
  %v148 = vpop.f32.mrf.mxu0
  %v149 = vadd.f32 0.0, %v148
  %v150 = vpop.f32.mrf.mxu0
  %v151 = vadd.f32 0.0, %v150
  %v152 = vpop.f32.mrf.mxu0
  %v153 = vadd.f32 0.0, %v152
  %154 = vdwg.mxu0
  %v155 = vmul.f32 %v147, %v41
  %v156 = vmul.f32 %v151, %v42
  %159 = vrot.lane.b32.xlu0 %v43, 96
  %v160 = vpop.permute.xlu0 %159
  %161 = vrot.lane.b32.xlu0 %v44, 96
  %v162 = vpop.permute.xlu0 %161
  %v165 = vmul.f32 %v147, %v160
  %v166 = vmul.f32 %v151, %v162
  %169 = vrot.lane.b32.xlu0 %v165, 32
  %v170 = vpop.permute.xlu0 %169
  %171 = vrot.lane.b32.xlu0 %v166, 32
  %v172 = vpop.permute.xlu0 %171
  %v175 = vadd.f32 %v155, %v170
  %v176 = vadd.f32 %v156, %v172
  %179 = vrot.lane.b32.xlu0 %v41, 32
  %v180 = vpop.permute.xlu0 %179
  %181 = vrot.lane.b32.xlu0 %v42, 32
  %v182 = vpop.permute.xlu0 %181
  %v185 = vmul.f32 %v147, %v180
  %v186 = vmul.f32 %v151, %v182
  %v187 = vmul.f32 %v149, %v43
  %v188 = vmul.f32 %v153, %v44
  %191 = vrot.lane.b32.xlu0 %v187, 32
  %v192 = vpop.permute.xlu0 %191
  %193 = vrot.lane.b32.xlu0 %v188, 32
  %v194 = vpop.permute.xlu0 %193
  %v197 = vadd.f32 %v185, %v192
  %v198 = vadd.f32 %v186, %v194
  %v199 = vld [vmem:[%s6] sm:$0xf]
  %v200 = vld [vmem:[%s6 + $0x4] sm:$0xf]
  %v201 = vld [vmem:[%s6 + $0x8] sm:$0xf]
  %v202 = vld [vmem:[%s6 + $0xc] sm:$0xf]
  %v203 = vpack.c.bf16 %v176, %v175
  %v204 = vpack.c.bf16 %v198, %v197
  %v205 = vpack.c.bf16 %v151, %v147
  %207 = vrot.lane.b32.xlu0 %v204, 96
  %v208 = vpop.permute.xlu0 %207
  %vm209 = vcmask 130048
  %v211 = vsel %vm209, %v203, 0
  %v214 = vsel %vm209, %v208, 0
  %216 = vmatprep.subr.bf16.mxu0 0
  %217 = vmatpush1.bf16.xpose.msra.mxu0 0
  %218 = vmatprep.subr.bf16.mxu0 0
  %219 = vmatpush1.bf16.xpose.msra.mxu0 0
  %220 = vmatprep.subr.bf16.mxu0 0
  %221 = vmatpush1.bf16.xpose.msra.mxu0 0
  %222 = vmatprep.subr.bf16.mxu0 0
  %223 = vmatpush1.bf16.xpose.msra.mxu0 0
  %224 = vmatprep.subr.bf16.mxu0 0
  %225 = vmatpush1.bf16.xpose.msra.mxu0 0
  %226 = vmatprep.subr.bf16.mxu0 0
  %227 = vmatpush1.bf16.xpose.msra.mxu0 0
  %228 = vmatprep.subr.bf16.mxu0 0
  %229 = vmatpush1.bf16.xpose.msra.mxu0 0
  %230 = vmatprep.subr.bf16.mxu0 0
  %231 = vmatpush1.bf16.xpose.msra.mxu0 %v214
  %232 = vmatprep.subr.bf16.mxu0 0
  %233 = vmatpush2.bf16.xpose.msra.mxu0 0
  %234 = vmatprep.subr.bf16.mxu0 0
  %235 = vmatpush2.bf16.xpose.msra.mxu0 0
  %236 = vmatprep.subr.bf16.mxu0 0
  %237 = vmatpush2.bf16.xpose.msra.mxu0 0
  %238 = vmatprep.subr.bf16.mxu0 0
  %239 = vmatpush2.bf16.xpose.msra.mxu0 0
  %240 = vmatprep.subr.bf16.mxu0 0
  %241 = vmatpush2.bf16.xpose.msra.mxu0 0
  %242 = vmatprep.subr.bf16.mxu0 0
  %243 = vmatpush2.bf16.xpose.msra.mxu0 0
  %244 = vmatprep.subr.bf16.mxu0 0
  %245 = vmatpush2.bf16.xpose.msra.mxu0 0
  %246 = vmatprep.subr.bf16.mxu0 0
  %247 = vmatpush2.bf16.xpose.msra.mxu0 0
  %248 = vmatprep.mubr.bf16.mxu0 0
  %249 = vmatmul.mubr.bf16.gmra.mxu0 %v211
  %v250 = vpop.f32.mrf.mxu0
  %v251 = vadd.f32 0.0, %v250
  %v252 = vpop.f32.mrf.mxu0
  %v253 = vpop.f32.mrf.mxu0
  %v254 = vadd.f32 0.0, %v253
  %v255 = vpop.f32.mrf.mxu0
  %256 = vdwg.mxu0
  %v257 = vmul.f32 %v251, 0.25
  %v258 = vmul.f32 %v254, 0.25
  %v259 = vadd.f32 %v257, %v45
  %v260 = vadd.f32 %v258, %v46
  %v261 = vsel %vm209, %v259, -inf
  %262 = vmax.xlane.f32.xlu0 %v261
  %v263 = vpop.xlane.xlu0 %262
  %v264 = vsel %vm209, %v260, -inf
  %265 = vmax.xlane.f32.xlu0 %v264
  %v266 = vpop.xlane.xlu0 %265
  %v267 = vsub.f32 %v259, %v263
  %v268 = vsub.f32 %v260, %v266
  %v269 = vmul.f32 %v267, 1.442695
  %v270 = vpow.pop %v269
  %v271 = vmul.f32 %v268, 1.442695
  %v272 = vpow.pop %v271
  %v273 = vsel %vm209, %v270, 0.0
  %274 = vadd.xlane.f32.xlu0 %v273
  %v275 = vpop.xlane.xlu0 %274
  %v276 = vsel %vm209, %v272, 0.0
  %277 = vadd.xlane.f32.xlu0 %v276
  %v278 = vpop.xlane.xlu0 %277
  %v279 = vrcp.pop %v275
  %v280 = vrcp.pop %v278
  %v281 = vmul.f32 %v270, %v279
  %v282 = vmul.f32 %v272, %v280
  %v283 = vpack.c.bf16 %v282, %v281
  %285 = vrot.lane.b32.xlu0 %v205, 64
  %v286 = vpop.permute.xlu0 %285
  %v289 = vsel %vm209, %v283, 0
  %291 = vmatprep.subr.bf16.mxu0 0
  %292 = vmatpush1.bf16.msra.mxu0 0
  %293 = vmatprep.subr.bf16.mxu0 0
  %294 = vmatpush1.bf16.msra.mxu0 0
  %295 = vmatprep.subr.bf16.mxu0 0
  %296 = vmatpush1.bf16.msra.mxu0 0
  %297 = vmatprep.subr.bf16.mxu0 0
  %298 = vmatpush1.bf16.msra.mxu0 0
  %299 = vmatprep.subr.bf16.mxu0 0
  %300 = vmatpush1.bf16.msra.mxu0 0
  %301 = vmatprep.subr.bf16.mxu0 0
  %302 = vmatpush1.bf16.msra.mxu0 0
  %303 = vmatprep.subr.bf16.mxu0 0
  %304 = vmatpush1.bf16.msra.mxu0 0
  %305 = vmatprep.subr.bf16.mxu0 0
  %306 = vmatpush1.bf16.msra.mxu0 %v286
  %307 = vmatprep.subr.bf16.mxu0 0
  %308 = vmatpush2.bf16.msra.mxu0 0
  %309 = vmatprep.subr.bf16.mxu0 0
  %310 = vmatpush2.bf16.msra.mxu0 0
  %311 = vmatprep.subr.bf16.mxu0 0
  %312 = vmatpush2.bf16.msra.mxu0 0
  %313 = vmatprep.subr.bf16.mxu0 0
  %314 = vmatpush2.bf16.msra.mxu0 0
  %315 = vmatprep.subr.bf16.mxu0 0
  %316 = vmatpush2.bf16.msra.mxu0 0
  %317 = vmatprep.subr.bf16.mxu0 0
  %318 = vmatpush2.bf16.msra.mxu0 0
  %319 = vmatprep.subr.bf16.mxu0 0
  %320 = vmatpush2.bf16.msra.mxu0 0
  %321 = vmatprep.subr.bf16.mxu0 0
  %322 = vmatpush2.bf16.msra.mxu0 0
  %323 = vmatprep.mubr.bf16.mxu0 0
  %324 = vmatmul.mubr.bf16.gmra.mxu0 %v289
  %v325 = vpop.f32.mrf.mxu0
  %v326 = vadd.f32 0.0, %v325
  %v327 = vpop.f32.mrf.mxu0
  %v328 = vpop.f32.mrf.mxu0
  %v329 = vadd.f32 0.0, %v328
  %v330 = vpop.f32.mrf.mxu0
  %331 = vdwg.mxu0
  %v332 = vpack.c.bf16 %v329, %v326
  %334 = vrot.lane.b32.xlu0 %v203, 112
  %v335 = vpop.permute.xlu0 %334
  %336 = vrot.lane.b32.xlu0 %v204, 80
  %v337 = vpop.permute.xlu0 %336
  %v339 = vsel %vm209, %v335, 0
  %v342 = vsel %vm209, %v337, 0
  %344 = vmatprep.subr.bf16.mxu0 0
  %345 = vmatpush1.bf16.xpose.msra.mxu0 0
  %346 = vmatprep.subr.bf16.mxu0 0
  %347 = vmatpush1.bf16.xpose.msra.mxu0 0
  %348 = vmatprep.subr.bf16.mxu0 0
  %349 = vmatpush1.bf16.xpose.msra.mxu0 0
  %350 = vmatprep.subr.bf16.mxu0 0
  %351 = vmatpush1.bf16.xpose.msra.mxu0 0
  %352 = vmatprep.subr.bf16.mxu0 0
  %353 = vmatpush1.bf16.xpose.msra.mxu0 0
  %354 = vmatprep.subr.bf16.mxu0 0
  %355 = vmatpush1.bf16.xpose.msra.mxu0 0
  %356 = vmatprep.subr.bf16.mxu0 0
  %357 = vmatpush1.bf16.xpose.msra.mxu0 0
  %358 = vmatprep.subr.bf16.mxu0 0
  %359 = vmatpush1.bf16.xpose.msra.mxu0 %v342
  %360 = vmatprep.subr.bf16.mxu0 0
  %361 = vmatpush2.bf16.xpose.msra.mxu0 0
  %362 = vmatprep.subr.bf16.mxu0 0
  %363 = vmatpush2.bf16.xpose.msra.mxu0 0
  %364 = vmatprep.subr.bf16.mxu0 0
  %365 = vmatpush2.bf16.xpose.msra.mxu0 0
  %366 = vmatprep.subr.bf16.mxu0 0
  %367 = vmatpush2.bf16.xpose.msra.mxu0 0
  %368 = vmatprep.subr.bf16.mxu0 0
  %369 = vmatpush2.bf16.xpose.msra.mxu0 0
  %370 = vmatprep.subr.bf16.mxu0 0
  %371 = vmatpush2.bf16.xpose.msra.mxu0 0
  %372 = vmatprep.subr.bf16.mxu0 0
  %373 = vmatpush2.bf16.xpose.msra.mxu0 0
  %374 = vmatprep.subr.bf16.mxu0 0
  %375 = vmatpush2.bf16.xpose.msra.mxu0 0
  %376 = vmatprep.mubr.bf16.mxu0 0
  %377 = vmatmul.mubr.bf16.gmra.mxu0 %v339
  %v378 = vpop.f32.mrf.mxu0
  %v379 = vadd.f32 0.0, %v378
  %v380 = vpop.f32.mrf.mxu0
  %v381 = vpop.f32.mrf.mxu0
  %v382 = vadd.f32 0.0, %v381
  %v383 = vpop.f32.mrf.mxu0
  %384 = vdwg.mxu0
  %v385 = vmul.f32 %v379, 0.25
  %v386 = vmul.f32 %v382, 0.25
  %v387 = vadd.f32 %v385, %v45
  %v388 = vadd.f32 %v386, %v46
  %v389 = vsel %vm209, %v387, -inf
  %390 = vmax.xlane.f32.xlu0 %v389
  %v391 = vpop.xlane.xlu0 %390
  %v392 = vsel %vm209, %v388, -inf
  %393 = vmax.xlane.f32.xlu0 %v392
  %v394 = vpop.xlane.xlu0 %393
  %v395 = vsub.f32 %v387, %v391
  %v396 = vsub.f32 %v388, %v394
  %v397 = vmul.f32 %v395, 1.442695
  %v398 = vpow.pop %v397
  %v399 = vmul.f32 %v396, 1.442695
  %v400 = vpow.pop %v399
  %v401 = vsel %vm209, %v398, 0.0
  %402 = vadd.xlane.f32.xlu0 %v401
  %v403 = vpop.xlane.xlu0 %402
  %v404 = vsel %vm209, %v400, 0.0
  %405 = vadd.xlane.f32.xlu0 %v404
  %v406 = vpop.xlane.xlu0 %405
  %v407 = vrcp.pop %v403
  %v408 = vrcp.pop %v406
  %v409 = vmul.f32 %v398, %v407
  %v410 = vmul.f32 %v400, %v408
  %v411 = vpack.c.bf16 %v410, %v409
  %412 = vrot.lane.b32.xlu0 %v205, 48
  %v413 = vpop.permute.xlu0 %412
  %v416 = vsel %vm209, %v411, 0
  %418 = vmatprep.subr.bf16.mxu0 0
  %419 = vmatpush1.bf16.msra.mxu0 0
  %420 = vmatprep.subr.bf16.mxu0 0
  %421 = vmatpush1.bf16.msra.mxu0 0
  %422 = vmatprep.subr.bf16.mxu0 0
  %423 = vmatpush1.bf16.msra.mxu0 0
  %424 = vmatprep.subr.bf16.mxu0 0
  %425 = vmatpush1.bf16.msra.mxu0 0
  %426 = vmatprep.subr.bf16.mxu0 0
  %427 = vmatpush1.bf16.msra.mxu0 0
  %428 = vmatprep.subr.bf16.mxu0 0
  %429 = vmatpush1.bf16.msra.mxu0 0
  %430 = vmatprep.subr.bf16.mxu0 0
  %431 = vmatpush1.bf16.msra.mxu0 0
  %432 = vmatprep.subr.bf16.mxu0 0
  %433 = vmatpush1.bf16.msra.mxu0 %v413
  %434 = vmatprep.subr.bf16.mxu0 0
  %435 = vmatpush2.bf16.msra.mxu0 0
  %436 = vmatprep.subr.bf16.mxu0 0
  %437 = vmatpush2.bf16.msra.mxu0 0
  %438 = vmatprep.subr.bf16.mxu0 0
  %439 = vmatpush2.bf16.msra.mxu0 0
  %440 = vmatprep.subr.bf16.mxu0 0
  %441 = vmatpush2.bf16.msra.mxu0 0
  %442 = vmatprep.subr.bf16.mxu0 0
  %443 = vmatpush2.bf16.msra.mxu0 0
  %444 = vmatprep.subr.bf16.mxu0 0
  %445 = vmatpush2.bf16.msra.mxu0 0
  %446 = vmatprep.subr.bf16.mxu0 0
  %447 = vmatpush2.bf16.msra.mxu0 0
  %448 = vmatprep.subr.bf16.mxu0 0
  %449 = vmatpush2.bf16.msra.mxu0 0
  %450 = vmatprep.mubr.bf16.mxu0 0
  %451 = vmatmul.mubr.bf16.gmra.mxu0 %v416
  %v452 = vpop.f32.mrf.mxu0
  %v453 = vadd.f32 0.0, %v452
  %v454 = vpop.f32.mrf.mxu0
  %v455 = vpop.f32.mrf.mxu0
  %v456 = vadd.f32 0.0, %v455
  %v457 = vpop.f32.mrf.mxu0
  %458 = vdwg.mxu0
  %v459 = vpack.c.bf16 %v456, %v453
  %v462 = vunpack.c.l.b16 %v201
  %v463 = vunpack.c.l.b16 %v202
  %v464 = vpack.c.b16 %v463, %v462
  %v467 = vsel %vm209, %v459, 0
  %469 = vmatprep.subr.bf16.mxu0 0
  %470 = vmatpush1.bf16.msra.mxu0 0
  %471 = vmatprep.subr.bf16.mxu0 0
  %472 = vmatpush1.bf16.msra.mxu0 0
  %473 = vmatprep.subr.bf16.mxu0 0
  %474 = vmatpush1.bf16.msra.mxu0 0
  %475 = vmatprep.subr.bf16.mxu0 0
  %476 = vmatpush1.bf16.msra.mxu0 0
  %477 = vmatprep.subr.bf16.mxu0 0
  %478 = vmatpush1.bf16.msra.mxu0 0
  %479 = vmatprep.subr.bf16.mxu0 0
  %480 = vmatpush1.bf16.msra.mxu0 0
  %481 = vmatprep.subr.bf16.mxu0 0
  %482 = vmatpush1.bf16.msra.mxu0 0
  %483 = vmatprep.subr.bf16.mxu0 0
  %484 = vmatpush1.bf16.msra.mxu0 %v464
  %485 = vmatprep.subr.bf16.mxu0 0
  %486 = vmatpush2.bf16.msra.mxu0 0
  %487 = vmatprep.subr.bf16.mxu0 0
  %488 = vmatpush2.bf16.msra.mxu0 0
  %489 = vmatprep.subr.bf16.mxu0 0
  %490 = vmatpush2.bf16.msra.mxu0 0
  %491 = vmatprep.subr.bf16.mxu0 0
  %492 = vmatpush2.bf16.msra.mxu0 0
  %493 = vmatprep.subr.bf16.mxu0 0
  %494 = vmatpush2.bf16.msra.mxu0 0
  %495 = vmatprep.subr.bf16.mxu0 0
  %496 = vmatpush2.bf16.msra.mxu0 0
  %497 = vmatprep.subr.bf16.mxu0 0
  %498 = vmatpush2.bf16.msra.mxu0 0
  %499 = vmatprep.subr.bf16.mxu0 0
  %500 = vmatpush2.bf16.msra.mxu0 0
  %501 = vmatprep.mubr.bf16.mxu0 0
  %502 = vmatmul.mubr.bf16.gmra.mxu0 %v467
  %v503 = vpop.f32.mrf.mxu0
  %v504 = vadd.f32 0.0, %v503
  %v505 = vpop.f32.mrf.mxu0
  %v506 = vpop.f32.mrf.mxu0
  %v507 = vadd.f32 0.0, %v506
  %v508 = vpop.f32.mrf.mxu0
  %509 = vdwg.mxu0
  %v512 = vunpack.c.l.b16 %v199
  %v513 = vunpack.c.l.b16 %v200
  %v514 = vpack.c.b16 %v513, %v512
  %v517 = vsel %vm209, %v332, 0
  %519 = vmatprep.subr.bf16.mxu0 0
  %520 = vmatpush1.bf16.msra.mxu0 0
  %521 = vmatprep.subr.bf16.mxu0 0
  %522 = vmatpush1.bf16.msra.mxu0 0
  %523 = vmatprep.subr.bf16.mxu0 0
  %524 = vmatpush1.bf16.msra.mxu0 0
  %525 = vmatprep.subr.bf16.mxu0 0
  %526 = vmatpush1.bf16.msra.mxu0 0
  %527 = vmatprep.subr.bf16.mxu0 0
  %528 = vmatpush1.bf16.msra.mxu0 0
  %529 = vmatprep.subr.bf16.mxu0 0
  %530 = vmatpush1.bf16.msra.mxu0 0
  %531 = vmatprep.subr.bf16.mxu0 0
  %532 = vmatpush1.bf16.msra.mxu0 0
  %533 = vmatprep.subr.bf16.mxu0 0
  %534 = vmatpush1.bf16.msra.mxu0 %v514
  %535 = vmatprep.subr.bf16.mxu0 0
  %536 = vmatpush2.bf16.msra.mxu0 0
  %537 = vmatprep.subr.bf16.mxu0 0
  %538 = vmatpush2.bf16.msra.mxu0 0
  %539 = vmatprep.subr.bf16.mxu0 0
  %540 = vmatpush2.bf16.msra.mxu0 0
  %541 = vmatprep.subr.bf16.mxu0 0
  %542 = vmatpush2.bf16.msra.mxu0 0
  %543 = vmatprep.subr.bf16.mxu0 0
  %544 = vmatpush2.bf16.msra.mxu0 0
  %545 = vmatprep.subr.bf16.mxu0 0
  %546 = vmatpush2.bf16.msra.mxu0 0
  %547 = vmatprep.subr.bf16.mxu0 0
  %548 = vmatpush2.bf16.msra.mxu0 0
  %549 = vmatprep.subr.bf16.mxu0 0
  %550 = vmatpush2.bf16.msra.mxu0 0
  %551 = vmatprep.mubr.bf16.mxu0 0
  %552 = vmatmul.mubr.bf16.gmra.mxu0 %v517
  %v553 = vpop.f32.mrf.mxu0
  %v554 = vadd.f32 %v504, %v553
  %v555 = vpop.f32.mrf.mxu0
  %v556 = vpop.f32.mrf.mxu0
  %v557 = vadd.f32 %v507, %v556
  %v558 = vpop.f32.mrf.mxu0
  %559 = vdwg.mxu0
  %v560 = vadd.f32 %v39, %v554
  %v561 = vadd.f32 %v40, %v557
  %v562 = vld [vmem:[%s7] sm:$0x1]
  %v563 = vsel %vm48, %v560, 0.0
  %564 = vadd.xlane.f32.xlu0 %v563
  %v565 = vpop.xlane.xlu0 %564
  %v566 = vsel %vm48, %v561, 0.0
  %567 = vadd.xlane.f32.xlu0 %v566
  %v568 = vpop.xlane.xlu0 %567
  %v569 = vmul.f32 %v565, %v55
  %v570 = vmul.f32 %v568, %v55
  %v571 = vsub.f32 %v560, %v569
  %v572 = vsub.f32 %v561, %v570
  %v573 = vmul.f32 %v571, %v571
  %v574 = vmul.f32 %v572, %v572
  %v575 = vsel %vm48, %v573, 0.0
  %576 = vadd.xlane.f32.xlu0 %v575
  %v577 = vpop.xlane.xlu0 %576
  %v578 = vsel %vm48, %v574, 0.0
  %579 = vadd.xlane.f32.xlu0 %v578
  %v580 = vpop.xlane.xlu0 %579
  %v581 = vmul.f32 %v577, %v55
  %v582 = vmul.f32 %v580, %v55
  %v583 = vadd.f32 %v581, 1e-05
  %v584 = vadd.f32 %v582, 1e-05
  %v585 = vrsqrt.pop %v583
  %v586 = vrsqrt.pop %v584
  %v587 = vmul.f32 %v571, %v585
  %v588 = vmul.f32 %v572, %v586
  %v590 = vlaneseq
  %v591 = vshrl.u32 %v590, 7
  %v592 = vsub.s32 0, %v591
  %v593 = vrot.slane %v562, %v592
  %v595 = vmul.f32 %v587, %v593
  %v596 = vmul.f32 %v588, %v593
  %v597 = vpack.c.bf16 %v596, %v595
  %v598 = vld [vmem:[%s8] sm:$0xf]
  %v599 = vld [vmem:[%s8 + $0x4] sm:$0xf]
  %v600 = vld [vmem:[%s8 + $0x8] sm:$0xf]
  %v601 = vld [vmem:[%s8 + $0xc] sm:$0xf]
  %v606 = vunpack.c.l.b16 %v598
  %v607 = vunpack.c.l.b16 %v599
  %v608 = vunpack.c.l.b16 %v600
  %v609 = vunpack.c.l.b16 %v601
  %v610 = vpack.c.b16 %v607, %v606
  %v611 = vpack.c.b16 %v609, %v608
  %v615 = vsel %vm48, %v597, 0
  %617 = vmatprep.subr.bf16.mxu0 0
  %618 = vmatpush1.bf16.msra.mxu0 0
  %619 = vmatprep.subr.bf16.mxu0 0
  %620 = vmatpush1.bf16.msra.mxu0 0
  %621 = vmatprep.subr.bf16.mxu0 0
  %622 = vmatpush1.bf16.msra.mxu0 0
  %623 = vmatprep.subr.bf16.mxu0 0
  %624 = vmatpush1.bf16.msra.mxu0 0
  %625 = vmatprep.subr.bf16.mxu0 0
  %626 = vmatpush1.bf16.msra.mxu0 0
  %627 = vmatprep.subr.bf16.mxu0 0
  %628 = vmatpush1.bf16.msra.mxu0 0
  %629 = vmatprep.subr.bf16.mxu0 0
  %630 = vmatpush1.bf16.msra.mxu0 %v611
  %631 = vmatprep.subr.bf16.mxu0 0
  %632 = vmatpush1.bf16.msra.mxu0 %v610
  %633 = vmatprep.subr.bf16.mxu0 0
  %634 = vmatpush2.bf16.msra.mxu0 0
  %635 = vmatprep.subr.bf16.mxu0 0
  %636 = vmatpush2.bf16.msra.mxu0 0
  %637 = vmatprep.subr.bf16.mxu0 0
  %638 = vmatpush2.bf16.msra.mxu0 0
  %639 = vmatprep.subr.bf16.mxu0 0
  %640 = vmatpush2.bf16.msra.mxu0 0
  %641 = vmatprep.subr.bf16.mxu0 0
  %642 = vmatpush2.bf16.msra.mxu0 0
  %643 = vmatprep.subr.bf16.mxu0 0
  %644 = vmatpush2.bf16.msra.mxu0 0
  %645 = vmatprep.subr.bf16.mxu0 0
  %646 = vmatpush2.bf16.msra.mxu0 0
  %647 = vmatprep.subr.bf16.mxu0 0
  %648 = vmatpush2.bf16.msra.mxu0 0
  %649 = vmatprep.mubr.bf16.mxu0 0
  %650 = vmatmul.mubr.bf16.gmra.mxu0 %v615
  %v651 = vpop.f32.mrf.mxu0
  %v652 = vadd.f32 0.0, %v651
  %v653 = vpop.f32.mrf.mxu0
  %v654 = vpop.f32.mrf.mxu0
  %v655 = vadd.f32 0.0, %v654
  %v656 = vpop.f32.mrf.mxu0
  %657 = vdwg.mxu0
  %v658 = vmul.f32 %v652, 0.5
  %v659 = vmul.f32 %v655, 0.5
  %v660 = vmul.f32 %v652, 0.044715
  %v661 = vmul.f32 %v655, 0.044715
  %v662 = vmul.f32 %v660, %v652
  %v663 = vmul.f32 %v661, %v655
  %v664 = vmul.f32 %v662, %v652
  %v665 = vmul.f32 %v663, %v655
  %v666 = vadd.f32 %v652, %v664
  %v667 = vadd.f32 %v655, %v665
  %v668 = vmul.f32 %v666, 0.7978846
  %v669 = vmul.f32 %v667, 0.7978846
  %v670 = vtanh.pop %v668
  %v671 = vtanh.pop %v669
  %v672 = vadd.f32 %v670, 1.0
  %v673 = vadd.f32 %v671, 1.0
  %v674 = vmul.f32 %v658, %v672
  %v675 = vmul.f32 %v659, %v673
  %v676 = vpack.c.bf16 %v675, %v674
  %v677 = vld [vmem:[%s9] sm:$0xf]
  %v678 = vld [vmem:[%s9 + $0x4] sm:$0xf]
  %v679 = vld [vmem:[%s9 + $0x8] sm:$0xf]
  %v680 = vld [vmem:[%s9 + $0xc] sm:$0xf]
  %v681 = vld [vmem:[%s9 + $0x10] sm:$0xf]
  %v682 = vld [vmem:[%s9 + $0x14] sm:$0xf]
  %v683 = vld [vmem:[%s9 + $0x18] sm:$0xf]
  %v684 = vld [vmem:[%s9 + $0x1c] sm:$0xf]
  %v685 = vld [vmem:[%s9 + $0x20] sm:$0xf]
  %v686 = vld [vmem:[%s9 + $0x24] sm:$0xf]
  %v687 = vld [vmem:[%s9 + $0x28] sm:$0xf]
  %v688 = vld [vmem:[%s9 + $0x2c] sm:$0xf]
  %v689 = vld [vmem:[%s9 + $0x30] sm:$0xf]
  %v690 = vld [vmem:[%s9 + $0x34] sm:$0xf]
  %v691 = vld [vmem:[%s9 + $0x38] sm:$0xf]
  %v692 = vld [vmem:[%s9 + $0x3c] sm:$0xf]
  %v709 = vunpack.c.l.b16 %v677
  %v710 = vunpack.c.l.b16 %v678
  %v711 = vunpack.c.l.b16 %v679
  %v712 = vunpack.c.l.b16 %v680
  %v713 = vunpack.c.l.b16 %v681
  %v714 = vunpack.c.l.b16 %v682
  %v715 = vunpack.c.l.b16 %v683
  %v716 = vunpack.c.l.b16 %v684
  %v717 = vunpack.c.l.b16 %v685
  %v718 = vunpack.c.l.b16 %v686
  %v719 = vunpack.c.l.b16 %v687
  %v720 = vunpack.c.l.b16 %v688
  %v721 = vunpack.c.l.b16 %v689
  %v722 = vunpack.c.l.b16 %v690
  %v723 = vunpack.c.l.b16 %v691
  %v724 = vunpack.c.l.b16 %v692
  %v725 = vpack.c.b16 %v710, %v709
  %v726 = vpack.c.b16 %v712, %v711
  %v727 = vpack.c.b16 %v714, %v713
  %v728 = vpack.c.b16 %v716, %v715
  %v729 = vpack.c.b16 %v718, %v717
  %v730 = vpack.c.b16 %v720, %v719
  %v731 = vpack.c.b16 %v722, %v721
  %v732 = vpack.c.b16 %v724, %v723
  %741 = vmatprep.subr.bf16.mxu0 0
  %742 = vmatpush1.bf16.msra.mxu0 %v732
  %743 = vmatprep.subr.bf16.mxu0 0
  %744 = vmatpush1.bf16.msra.mxu0 %v731
  %745 = vmatprep.subr.bf16.mxu0 0
  %746 = vmatpush1.bf16.msra.mxu0 %v730
  %747 = vmatprep.subr.bf16.mxu0 0
  %748 = vmatpush1.bf16.msra.mxu0 %v729
  %749 = vmatprep.subr.bf16.mxu0 0
  %750 = vmatpush1.bf16.msra.mxu0 %v728
  %751 = vmatprep.subr.bf16.mxu0 0
  %752 = vmatpush1.bf16.msra.mxu0 %v727
  %753 = vmatprep.subr.bf16.mxu0 0
  %754 = vmatpush1.bf16.msra.mxu0 %v726
  %755 = vmatprep.subr.bf16.mxu0 0
  %756 = vmatpush1.bf16.msra.mxu0 %v725
  %757 = vmatprep.subr.bf16.mxu0 0
  %758 = vmatpush2.bf16.msra.mxu0 0
  %759 = vmatprep.subr.bf16.mxu0 0
  %760 = vmatpush2.bf16.msra.mxu0 0
  %761 = vmatprep.subr.bf16.mxu0 0
  %762 = vmatpush2.bf16.msra.mxu0 0
  %763 = vmatprep.subr.bf16.mxu0 0
  %764 = vmatpush2.bf16.msra.mxu0 0
  %765 = vmatprep.subr.bf16.mxu0 0
  %766 = vmatpush2.bf16.msra.mxu0 0
  %767 = vmatprep.subr.bf16.mxu0 0
  %768 = vmatpush2.bf16.msra.mxu0 0
  %769 = vmatprep.subr.bf16.mxu0 0
  %770 = vmatpush2.bf16.msra.mxu0 0
  %771 = vmatprep.subr.bf16.mxu0 0
  %772 = vmatpush2.bf16.msra.mxu0 0
  %773 = vmatprep.mubr.bf16.mxu0 0
  %774 = vmatmul.mubr.bf16.gmra.mxu0 %v676
  %v775 = vpop.f32.mrf.mxu0
  %v776 = vadd.f32 0.0, %v775
  %v777 = vpop.f32.mrf.mxu0
  %v778 = vpop.f32.mrf.mxu0
  %v779 = vadd.f32 0.0, %v778
  %v780 = vpop.f32.mrf.mxu0
  %781 = vdwg.mxu0
  %v782 = vadd.f32 %v560, %v776
  %v783 = vadd.f32 %v561, %v779
  %s784 = scalar_lea.vmem %s4, 1
  %v785 = vld [vmem:[%s784] sm:$0x1]
  %v786 = vsel %vm48, %v782, 0.0
  %787 = vadd.xlane.f32.xlu0 %v786
  %v788 = vpop.xlane.xlu0 %787
  %v789 = vsel %vm48, %v783, 0.0
  %790 = vadd.xlane.f32.xlu0 %v789
  %v791 = vpop.xlane.xlu0 %790
  %v792 = vmul.f32 %v788, %v55
  %v793 = vmul.f32 %v791, %v55
  %v794 = vsub.f32 %v782, %v792
  %v795 = vsub.f32 %v783, %v793
  %v796 = vmul.f32 %v794, %v794
  %v797 = vmul.f32 %v795, %v795
  %v798 = vsel %vm48, %v796, 0.0
  %799 = vadd.xlane.f32.xlu0 %v798
  %v800 = vpop.xlane.xlu0 %799
  %v801 = vsel %vm48, %v797, 0.0
  %802 = vadd.xlane.f32.xlu0 %v801
  %v803 = vpop.xlane.xlu0 %802
  %v804 = vmul.f32 %v800, %v55
  %v805 = vmul.f32 %v803, %v55
  %v806 = vadd.f32 %v804, 1e-05
  %v807 = vadd.f32 %v805, 1e-05
  %v808 = vrsqrt.pop %v806
  %v809 = vrsqrt.pop %v807
  %v810 = vmul.f32 %v794, %v808
  %v811 = vmul.f32 %v795, %v809
  %v813 = vlaneseq
  %v814 = vshrl.u32 %v813, 7
  %v815 = vsub.s32 0, %v814
  %v816 = vrot.slane %v785, %v815
  %v818 = vmul.f32 %v810, %v816
  %v819 = vmul.f32 %v811, %v816
  %v820 = vpack.c.bf16 %v819, %v818
  %s821 = scalar_lea.vmem %s5, 32
  %v822 = vld [vmem:[%s821] sm:$0xff]
  %v823 = vld [vmem:[%s821 + $0x8] sm:$0xff]
  %v824 = vld [vmem:[%s821 + $0x10] sm:$0xff]
  %v825 = vld [vmem:[%s821 + $0x18] sm:$0xff]
  %v830 = vunpack.c.l.b16 %v822
  %v831 = vunpack.c.h.b16 %v822
  %v832 = vunpack.c.l.b16 %v823
  %v833 = vunpack.c.h.b16 %v823
  %v834 = vunpack.c.l.b16 %v824
  %v835 = vunpack.c.h.b16 %v824
  %v836 = vunpack.c.l.b16 %v825
  %v837 = vunpack.c.h.b16 %v825
  %v838 = vpack.c.b16 %v832, %v830
  %v839 = vpack.c.b16 %v833, %v831
  %v840 = vpack.c.b16 %v836, %v834
  %v841 = vpack.c.b16 %v837, %v835
  %v847 = vsel %vm48, %v820, 0
  %849 = vmatprep.subr.bf16.mxu0 0
  %850 = vmatpush1.bf16.msra.mxu0 0
  %851 = vmatprep.subr.bf16.mxu0 0
  %852 = vmatpush1.bf16.msra.mxu0 0
  %853 = vmatprep.subr.bf16.mxu0 0
  %854 = vmatpush1.bf16.msra.mxu0 0
  %855 = vmatprep.subr.bf16.mxu0 0
  %856 = vmatpush1.bf16.msra.mxu0 0
  %857 = vmatprep.subr.bf16.mxu0 0
  %858 = vmatpush1.bf16.msra.mxu0 0
  %859 = vmatprep.subr.bf16.mxu0 0
  %860 = vmatpush1.bf16.msra.mxu0 0
  %861 = vmatprep.subr.bf16.mxu0 %v841
  %862 = vmatpush1.bf16.msra.mxu0 %v840
  %863 = vmatprep.subr.bf16.mxu0 %v839
  %864 = vmatpush1.bf16.msra.mxu0 %v838
  %865 = vmatprep.subr.bf16.mxu0 0
  %866 = vmatpush2.bf16.msra.mxu0 0
  %867 = vmatprep.subr.bf16.mxu0 0
  %868 = vmatpush2.bf16.msra.mxu0 0
  %869 = vmatprep.subr.bf16.mxu0 0
  %870 = vmatpush2.bf16.msra.mxu0 0
  %871 = vmatprep.subr.bf16.mxu0 0
  %872 = vmatpush2.bf16.msra.mxu0 0
  %873 = vmatprep.subr.bf16.mxu0 0
  %874 = vmatpush2.bf16.msra.mxu0 0
  %875 = vmatprep.subr.bf16.mxu0 0
  %876 = vmatpush2.bf16.msra.mxu0 0
  %877 = vmatprep.subr.bf16.mxu0 0
  %878 = vmatpush2.bf16.msra.mxu0 0
  %879 = vmatprep.subr.bf16.mxu0 0
  %880 = vmatpush2.bf16.msra.mxu0 0
  %881 = vmatprep.mubr.bf16.mxu0 0
  %882 = vmatmul.mubr.bf16.gmra.mxu0 %v847
  %v883 = vpop.f32.mrf.mxu0
  %v884 = vadd.f32 0.0, %v883
  %v885 = vpop.f32.mrf.mxu0
  %v886 = vadd.f32 0.0, %v885
  %v887 = vpop.f32.mrf.mxu0
  %v888 = vadd.f32 0.0, %v887
  %v889 = vpop.f32.mrf.mxu0
  %v890 = vadd.f32 0.0, %v889
  %891 = vdwg.mxu0
  %v892 = vmul.f32 %v884, %v41
  %v893 = vmul.f32 %v888, %v42
  %v894 = vmul.f32 %v884, %v160
  %v895 = vmul.f32 %v888, %v162
  %898 = vrot.lane.b32.xlu0 %v894, 32
  %v899 = vpop.permute.xlu0 %898
  %900 = vrot.lane.b32.xlu0 %v895, 32
  %v901 = vpop.permute.xlu0 %900
  %v904 = vadd.f32 %v892, %v899
  %v905 = vadd.f32 %v893, %v901
  %v906 = vmul.f32 %v884, %v180
  %v907 = vmul.f32 %v888, %v182
  %v908 = vmul.f32 %v886, %v43
  %v909 = vmul.f32 %v890, %v44
  %912 = vrot.lane.b32.xlu0 %v908, 32
  %v913 = vpop.permute.xlu0 %912
  %914 = vrot.lane.b32.xlu0 %v909, 32
  %v915 = vpop.permute.xlu0 %914
  %v918 = vadd.f32 %v906, %v913
  %v919 = vadd.f32 %v907, %v915
  %s920 = scalar_lea.vmem %s6, 16
  %v921 = vld [vmem:[%s920] sm:$0xf]
  %v922 = vld [vmem:[%s920 + $0x4] sm:$0xf]
  %v923 = vld [vmem:[%s920 + $0x8] sm:$0xf]
  %v924 = vld [vmem:[%s920 + $0xc] sm:$0xf]
  %v925 = vpack.c.bf16 %v905, %v904
  %v926 = vpack.c.bf16 %v919, %v918
  %v927 = vpack.c.bf16 %v888, %v884
  %929 = vrot.lane.b32.xlu0 %v926, 96
  %v930 = vpop.permute.xlu0 %929
  %v932 = vsel %vm209, %v925, 0
  %v935 = vsel %vm209, %v930, 0
  %937 = vmatprep.subr.bf16.mxu0 0
  %938 = vmatpush1.bf16.xpose.msra.mxu0 0
  %939 = vmatprep.subr.bf16.mxu0 0
  %940 = vmatpush1.bf16.xpose.msra.mxu0 0
  %941 = vmatprep.subr.bf16.mxu0 0
  %942 = vmatpush1.bf16.xpose.msra.mxu0 0
  %943 = vmatprep.subr.bf16.mxu0 0
  %944 = vmatpush1.bf16.xpose.msra.mxu0 0
  %945 = vmatprep.subr.bf16.mxu0 0
  %946 = vmatpush1.bf16.xpose.msra.mxu0 0
  %947 = vmatprep.subr.bf16.mxu0 0
  %948 = vmatpush1.bf16.xpose.msra.mxu0 0
  %949 = vmatprep.subr.bf16.mxu0 0
  %950 = vmatpush1.bf16.xpose.msra.mxu0 0
  %951 = vmatprep.subr.bf16.mxu0 0
  %952 = vmatpush1.bf16.xpose.msra.mxu0 %v935
  %953 = vmatprep.subr.bf16.mxu0 0
  %954 = vmatpush2.bf16.xpose.msra.mxu0 0
  %955 = vmatprep.subr.bf16.mxu0 0
  %956 = vmatpush2.bf16.xpose.msra.mxu0 0
  %957 = vmatprep.subr.bf16.mxu0 0
  %958 = vmatpush2.bf16.xpose.msra.mxu0 0
  %959 = vmatprep.subr.bf16.mxu0 0
  %960 = vmatpush2.bf16.xpose.msra.mxu0 0
  %961 = vmatprep.subr.bf16.mxu0 0
  %962 = vmatpush2.bf16.xpose.msra.mxu0 0
  %963 = vmatprep.subr.bf16.mxu0 0
  %964 = vmatpush2.bf16.xpose.msra.mxu0 0
  %965 = vmatprep.subr.bf16.mxu0 0
  %966 = vmatpush2.bf16.xpose.msra.mxu0 0
  %967 = vmatprep.subr.bf16.mxu0 0
  %968 = vmatpush2.bf16.xpose.msra.mxu0 0
  %969 = vmatprep.mubr.bf16.mxu0 0
  %970 = vmatmul.mubr.bf16.gmra.mxu0 %v932
  %v971 = vpop.f32.mrf.mxu0
  %v972 = vadd.f32 0.0, %v971
  %v973 = vpop.f32.mrf.mxu0
  %v974 = vpop.f32.mrf.mxu0
  %v975 = vadd.f32 0.0, %v974
  %v976 = vpop.f32.mrf.mxu0
  %977 = vdwg.mxu0
  %v978 = vmul.f32 %v972, 0.25
  %v979 = vmul.f32 %v975, 0.25
  %v980 = vadd.f32 %v978, %v45
  %v981 = vadd.f32 %v979, %v46
  %v982 = vsel %vm209, %v980, -inf
  %983 = vmax.xlane.f32.xlu0 %v982
  %v984 = vpop.xlane.xlu0 %983
  %v985 = vsel %vm209, %v981, -inf
  %986 = vmax.xlane.f32.xlu0 %v985
  %v987 = vpop.xlane.xlu0 %986
  %v988 = vsub.f32 %v980, %v984
  %v989 = vsub.f32 %v981, %v987
  %v990 = vmul.f32 %v988, 1.442695
  %v991 = vpow.pop %v990
  %v992 = vmul.f32 %v989, 1.442695
  %v993 = vpow.pop %v992
  %v994 = vsel %vm209, %v991, 0.0
  %995 = vadd.xlane.f32.xlu0 %v994
  %v996 = vpop.xlane.xlu0 %995
  %v997 = vsel %vm209, %v993, 0.0
  %998 = vadd.xlane.f32.xlu0 %v997
  %v999 = vpop.xlane.xlu0 %998
  %v1000 = vrcp.pop %v996
  %v1001 = vrcp.pop %v999
  %v1002 = vmul.f32 %v991, %v1000
  %v1003 = vmul.f32 %v993, %v1001
  %v1004 = vpack.c.bf16 %v1003, %v1002
  %1006 = vrot.lane.b32.xlu0 %v927, 64
  %v1007 = vpop.permute.xlu0 %1006
  %v1010 = vsel %vm209, %v1004, 0
  %1012 = vmatprep.subr.bf16.mxu0 0
  %1013 = vmatpush1.bf16.msra.mxu0 0
  %1014 = vmatprep.subr.bf16.mxu0 0
  %1015 = vmatpush1.bf16.msra.mxu0 0
  %1016 = vmatprep.subr.bf16.mxu0 0
  %1017 = vmatpush1.bf16.msra.mxu0 0
  %1018 = vmatprep.subr.bf16.mxu0 0
  %1019 = vmatpush1.bf16.msra.mxu0 0
  %1020 = vmatprep.subr.bf16.mxu0 0
  %1021 = vmatpush1.bf16.msra.mxu0 0
  %1022 = vmatprep.subr.bf16.mxu0 0
  %1023 = vmatpush1.bf16.msra.mxu0 0
  %1024 = vmatprep.subr.bf16.mxu0 0
  %1025 = vmatpush1.bf16.msra.mxu0 0
  %1026 = vmatprep.subr.bf16.mxu0 0
  %1027 = vmatpush1.bf16.msra.mxu0 %v1007
  %1028 = vmatprep.subr.bf16.mxu0 0
  %1029 = vmatpush2.bf16.msra.mxu0 0
  %1030 = vmatprep.subr.bf16.mxu0 0
  %1031 = vmatpush2.bf16.msra.mxu0 0
  %1032 = vmatprep.subr.bf16.mxu0 0
  %1033 = vmatpush2.bf16.msra.mxu0 0
  %1034 = vmatprep.subr.bf16.mxu0 0
  %1035 = vmatpush2.bf16.msra.mxu0 0
  %1036 = vmatprep.subr.bf16.mxu0 0
  %1037 = vmatpush2.bf16.msra.mxu0 0
  %1038 = vmatprep.subr.bf16.mxu0 0
  %1039 = vmatpush2.bf16.msra.mxu0 0
  %1040 = vmatprep.subr.bf16.mxu0 0
  %1041 = vmatpush2.bf16.msra.mxu0 0
  %1042 = vmatprep.subr.bf16.mxu0 0
  %1043 = vmatpush2.bf16.msra.mxu0 0
  %1044 = vmatprep.mubr.bf16.mxu0 0
  %1045 = vmatmul.mubr.bf16.gmra.mxu0 %v1010
  %v1046 = vpop.f32.mrf.mxu0
  %v1047 = vadd.f32 0.0, %v1046
  %v1048 = vpop.f32.mrf.mxu0
  %v1049 = vpop.f32.mrf.mxu0
  %v1050 = vadd.f32 0.0, %v1049
  %v1051 = vpop.f32.mrf.mxu0
  %1052 = vdwg.mxu0
  %v1053 = vpack.c.bf16 %v1050, %v1047
  %1055 = vrot.lane.b32.xlu0 %v925, 112
  %v1056 = vpop.permute.xlu0 %1055
  %1057 = vrot.lane.b32.xlu0 %v926, 80
  %v1058 = vpop.permute.xlu0 %1057
  %v1060 = vsel %vm209, %v1056, 0
  %v1063 = vsel %vm209, %v1058, 0
  %1065 = vmatprep.subr.bf16.mxu0 0
  %1066 = vmatpush1.bf16.xpose.msra.mxu0 0
  %1067 = vmatprep.subr.bf16.mxu0 0
  %1068 = vmatpush1.bf16.xpose.msra.mxu0 0
  %1069 = vmatprep.subr.bf16.mxu0 0
  %1070 = vmatpush1.bf16.xpose.msra.mxu0 0
  %1071 = vmatprep.subr.bf16.mxu0 0
  %1072 = vmatpush1.bf16.xpose.msra.mxu0 0
  %1073 = vmatprep.subr.bf16.mxu0 0
  %1074 = vmatpush1.bf16.xpose.msra.mxu0 0
  %1075 = vmatprep.subr.bf16.mxu0 0
  %1076 = vmatpush1.bf16.xpose.msra.mxu0 0
  %1077 = vmatprep.subr.bf16.mxu0 0
  %1078 = vmatpush1.bf16.xpose.msra.mxu0 0
  %1079 = vmatprep.subr.bf16.mxu0 0
  %1080 = vmatpush1.bf16.xpose.msra.mxu0 %v1063
  %1081 = vmatprep.subr.bf16.mxu0 0
  %1082 = vmatpush2.bf16.xpose.msra.mxu0 0
  %1083 = vmatprep.subr.bf16.mxu0 0
  %1084 = vmatpush2.bf16.xpose.msra.mxu0 0
  %1085 = vmatprep.subr.bf16.mxu0 0
  %1086 = vmatpush2.bf16.xpose.msra.mxu0 0
  %1087 = vmatprep.subr.bf16.mxu0 0
  %1088 = vmatpush2.bf16.xpose.msra.mxu0 0
  %1089 = vmatprep.subr.bf16.mxu0 0
  %1090 = vmatpush2.bf16.xpose.msra.mxu0 0
  %1091 = vmatprep.subr.bf16.mxu0 0
  %1092 = vmatpush2.bf16.xpose.msra.mxu0 0
  %1093 = vmatprep.subr.bf16.mxu0 0
  %1094 = vmatpush2.bf16.xpose.msra.mxu0 0
  %1095 = vmatprep.subr.bf16.mxu0 0
  %1096 = vmatpush2.bf16.xpose.msra.mxu0 0
  %1097 = vmatprep.mubr.bf16.mxu0 0
  %1098 = vmatmul.mubr.bf16.gmra.mxu0 %v1060
  %v1099 = vpop.f32.mrf.mxu0
  %v1100 = vadd.f32 0.0, %v1099
  %v1101 = vpop.f32.mrf.mxu0
  %v1102 = vpop.f32.mrf.mxu0
  %v1103 = vadd.f32 0.0, %v1102
  %v1104 = vpop.f32.mrf.mxu0
  %1105 = vdwg.mxu0
  %v1106 = vmul.f32 %v1100, 0.25
  %v1107 = vmul.f32 %v1103, 0.25
  %v1108 = vadd.f32 %v1106, %v45
  %v1109 = vadd.f32 %v1107, %v46
  %v1110 = vsel %vm209, %v1108, -inf
  %1111 = vmax.xlane.f32.xlu0 %v1110
  %v1112 = vpop.xlane.xlu0 %1111
  %v1113 = vsel %vm209, %v1109, -inf
  %1114 = vmax.xlane.f32.xlu0 %v1113
  %v1115 = vpop.xlane.xlu0 %1114
  %v1116 = vsub.f32 %v1108, %v1112
  %v1117 = vsub.f32 %v1109, %v1115
  %v1118 = vmul.f32 %v1116, 1.442695
  %v1119 = vpow.pop %v1118
  %v1120 = vmul.f32 %v1117, 1.442695
  %v1121 = vpow.pop %v1120
  %v1122 = vsel %vm209, %v1119, 0.0
  %1123 = vadd.xlane.f32.xlu0 %v1122
  %v1124 = vpop.xlane.xlu0 %1123
  %v1125 = vsel %vm209, %v1121, 0.0
  %1126 = vadd.xlane.f32.xlu0 %v1125
  %v1127 = vpop.xlane.xlu0 %1126
  %v1128 = vrcp.pop %v1124
  %v1129 = vrcp.pop %v1127
  %v1130 = vmul.f32 %v1119, %v1128
  %v1131 = vmul.f32 %v1121, %v1129
  %v1132 = vpack.c.bf16 %v1131, %v1130
  %1133 = vrot.lane.b32.xlu0 %v927, 48
  %v1134 = vpop.permute.xlu0 %1133
  %v1137 = vsel %vm209, %v1132, 0
  %1139 = vmatprep.subr.bf16.mxu0 0
  %1140 = vmatpush1.bf16.msra.mxu0 0
  %1141 = vmatprep.subr.bf16.mxu0 0
  %1142 = vmatpush1.bf16.msra.mxu0 0
  %1143 = vmatprep.subr.bf16.mxu0 0
  %1144 = vmatpush1.bf16.msra.mxu0 0
  %1145 = vmatprep.subr.bf16.mxu0 0
  %1146 = vmatpush1.bf16.msra.mxu0 0
  %1147 = vmatprep.subr.bf16.mxu0 0
  %1148 = vmatpush1.bf16.msra.mxu0 0
  %1149 = vmatprep.subr.bf16.mxu0 0
  %1150 = vmatpush1.bf16.msra.mxu0 0
  %1151 = vmatprep.subr.bf16.mxu0 0
  %1152 = vmatpush1.bf16.msra.mxu0 0
  %1153 = vmatprep.subr.bf16.mxu0 0
  %1154 = vmatpush1.bf16.msra.mxu0 %v1134
  %1155 = vmatprep.subr.bf16.mxu0 0
  %1156 = vmatpush2.bf16.msra.mxu0 0
  %1157 = vmatprep.subr.bf16.mxu0 0
  %1158 = vmatpush2.bf16.msra.mxu0 0
  %1159 = vmatprep.subr.bf16.mxu0 0
  %1160 = vmatpush2.bf16.msra.mxu0 0
  %1161 = vmatprep.subr.bf16.mxu0 0
  %1162 = vmatpush2.bf16.msra.mxu0 0
  %1163 = vmatprep.subr.bf16.mxu0 0
  %1164 = vmatpush2.bf16.msra.mxu0 0
  %1165 = vmatprep.subr.bf16.mxu0 0
  %1166 = vmatpush2.bf16.msra.mxu0 0
  %1167 = vmatprep.subr.bf16.mxu0 0
  %1168 = vmatpush2.bf16.msra.mxu0 0
  %1169 = vmatprep.subr.bf16.mxu0 0
  %1170 = vmatpush2.bf16.msra.mxu0 0
  %1171 = vmatprep.mubr.bf16.mxu0 0
  %1172 = vmatmul.mubr.bf16.gmra.mxu0 %v1137
  %v1173 = vpop.f32.mrf.mxu0
  %v1174 = vadd.f32 0.0, %v1173
  %v1175 = vpop.f32.mrf.mxu0
  %v1176 = vpop.f32.mrf.mxu0
  %v1177 = vadd.f32 0.0, %v1176
  %v1178 = vpop.f32.mrf.mxu0
  %1179 = vdwg.mxu0
  %v1180 = vpack.c.bf16 %v1177, %v1174
  %v1183 = vunpack.c.l.b16 %v923
  %v1184 = vunpack.c.l.b16 %v924
  %v1185 = vpack.c.b16 %v1184, %v1183
  %v1188 = vsel %vm209, %v1180, 0
  %1190 = vmatprep.subr.bf16.mxu0 0
  %1191 = vmatpush1.bf16.msra.mxu0 0
  %1192 = vmatprep.subr.bf16.mxu0 0
  %1193 = vmatpush1.bf16.msra.mxu0 0
  %1194 = vmatprep.subr.bf16.mxu0 0
  %1195 = vmatpush1.bf16.msra.mxu0 0
  %1196 = vmatprep.subr.bf16.mxu0 0
  %1197 = vmatpush1.bf16.msra.mxu0 0
  %1198 = vmatprep.subr.bf16.mxu0 0
  %1199 = vmatpush1.bf16.msra.mxu0 0
  %1200 = vmatprep.subr.bf16.mxu0 0
  %1201 = vmatpush1.bf16.msra.mxu0 0
  %1202 = vmatprep.subr.bf16.mxu0 0
  %1203 = vmatpush1.bf16.msra.mxu0 0
  %1204 = vmatprep.subr.bf16.mxu0 0
  %1205 = vmatpush1.bf16.msra.mxu0 %v1185
  %1206 = vmatprep.subr.bf16.mxu0 0
  %1207 = vmatpush2.bf16.msra.mxu0 0
  %1208 = vmatprep.subr.bf16.mxu0 0
  %1209 = vmatpush2.bf16.msra.mxu0 0
  %1210 = vmatprep.subr.bf16.mxu0 0
  %1211 = vmatpush2.bf16.msra.mxu0 0
  %1212 = vmatprep.subr.bf16.mxu0 0
  %1213 = vmatpush2.bf16.msra.mxu0 0
  %1214 = vmatprep.subr.bf16.mxu0 0
  %1215 = vmatpush2.bf16.msra.mxu0 0
  %1216 = vmatprep.subr.bf16.mxu0 0
  %1217 = vmatpush2.bf16.msra.mxu0 0
  %1218 = vmatprep.subr.bf16.mxu0 0
  %1219 = vmatpush2.bf16.msra.mxu0 0
  %1220 = vmatprep.subr.bf16.mxu0 0
  %1221 = vmatpush2.bf16.msra.mxu0 0
  %1222 = vmatprep.mubr.bf16.mxu0 0
  %1223 = vmatmul.mubr.bf16.gmra.mxu0 %v1188
  %v1224 = vpop.f32.mrf.mxu0
  %v1225 = vadd.f32 0.0, %v1224
  %v1226 = vpop.f32.mrf.mxu0
  %v1227 = vpop.f32.mrf.mxu0
  %v1228 = vadd.f32 0.0, %v1227
  %v1229 = vpop.f32.mrf.mxu0
  %1230 = vdwg.mxu0
  %v1233 = vunpack.c.l.b16 %v921
  %v1234 = vunpack.c.l.b16 %v922
  %v1235 = vpack.c.b16 %v1234, %v1233
  %v1238 = vsel %vm209, %v1053, 0
  %1240 = vmatprep.subr.bf16.mxu0 0
  %1241 = vmatpush1.bf16.msra.mxu0 0
  %1242 = vmatprep.subr.bf16.mxu0 0
  %1243 = vmatpush1.bf16.msra.mxu0 0
  %1244 = vmatprep.subr.bf16.mxu0 0
  %1245 = vmatpush1.bf16.msra.mxu0 0
  %1246 = vmatprep.subr.bf16.mxu0 0
  %1247 = vmatpush1.bf16.msra.mxu0 0
  %1248 = vmatprep.subr.bf16.mxu0 0
  %1249 = vmatpush1.bf16.msra.mxu0 0
  %1250 = vmatprep.subr.bf16.mxu0 0
  %1251 = vmatpush1.bf16.msra.mxu0 0
  %1252 = vmatprep.subr.bf16.mxu0 0
  %1253 = vmatpush1.bf16.msra.mxu0 0
  %1254 = vmatprep.subr.bf16.mxu0 0
  %1255 = vmatpush1.bf16.msra.mxu0 %v1235
  %1256 = vmatprep.subr.bf16.mxu0 0
  %1257 = vmatpush2.bf16.msra.mxu0 0
  %1258 = vmatprep.subr.bf16.mxu0 0
  %1259 = vmatpush2.bf16.msra.mxu0 0
  %1260 = vmatprep.subr.bf16.mxu0 0
  %1261 = vmatpush2.bf16.msra.mxu0 0
  %1262 = vmatprep.subr.bf16.mxu0 0
  %1263 = vmatpush2.bf16.msra.mxu0 0
  %1264 = vmatprep.subr.bf16.mxu0 0
  %1265 = vmatpush2.bf16.msra.mxu0 0
  %1266 = vmatprep.subr.bf16.mxu0 0
  %1267 = vmatpush2.bf16.msra.mxu0 0
  %1268 = vmatprep.subr.bf16.mxu0 0
  %1269 = vmatpush2.bf16.msra.mxu0 0
  %1270 = vmatprep.subr.bf16.mxu0 0
  %1271 = vmatpush2.bf16.msra.mxu0 0
  %1272 = vmatprep.mubr.bf16.mxu0 0
  %1273 = vmatmul.mubr.bf16.gmra.mxu0 %v1238
  %v1274 = vpop.f32.mrf.mxu0
  %v1275 = vadd.f32 %v1225, %v1274
  %v1276 = vpop.f32.mrf.mxu0
  %v1277 = vpop.f32.mrf.mxu0
  %v1278 = vadd.f32 %v1228, %v1277
  %v1279 = vpop.f32.mrf.mxu0
  %1280 = vdwg.mxu0
  %v1281 = vadd.f32 %v782, %v1275
  %v1282 = vadd.f32 %v783, %v1278
  %s1283 = scalar_lea.vmem %s7, 1
  %v1284 = vld [vmem:[%s1283] sm:$0x1]
  %v1285 = vsel %vm48, %v1281, 0.0
  %1286 = vadd.xlane.f32.xlu0 %v1285
  %v1287 = vpop.xlane.xlu0 %1286
  %v1288 = vsel %vm48, %v1282, 0.0
  %1289 = vadd.xlane.f32.xlu0 %v1288
  %v1290 = vpop.xlane.xlu0 %1289
  %v1291 = vmul.f32 %v1287, %v55
  %v1292 = vmul.f32 %v1290, %v55
  %v1293 = vsub.f32 %v1281, %v1291
  %v1294 = vsub.f32 %v1282, %v1292
  %v1295 = vmul.f32 %v1293, %v1293
  %v1296 = vmul.f32 %v1294, %v1294
  %v1297 = vsel %vm48, %v1295, 0.0
  %1298 = vadd.xlane.f32.xlu0 %v1297
  %v1299 = vpop.xlane.xlu0 %1298
  %v1300 = vsel %vm48, %v1296, 0.0
  %1301 = vadd.xlane.f32.xlu0 %v1300
  %v1302 = vpop.xlane.xlu0 %1301
  %v1303 = vmul.f32 %v1299, %v55
  %v1304 = vmul.f32 %v1302, %v55
  %v1305 = vadd.f32 %v1303, 1e-05
  %v1306 = vadd.f32 %v1304, 1e-05
  %v1307 = vrsqrt.pop %v1305
  %v1308 = vrsqrt.pop %v1306
  %v1309 = vmul.f32 %v1293, %v1307
  %v1310 = vmul.f32 %v1294, %v1308
  %v1312 = vlaneseq
  %v1313 = vshrl.u32 %v1312, 7
  %v1314 = vsub.s32 0, %v1313
  %v1315 = vrot.slane %v1284, %v1314
  %v1317 = vmul.f32 %v1309, %v1315
  %v1318 = vmul.f32 %v1310, %v1315
  %v1319 = vpack.c.bf16 %v1318, %v1317
  %s1320 = scalar_lea.vmem %s8, 16
  %v1321 = vld [vmem:[%s1320] sm:$0xf]
  %v1322 = vld [vmem:[%s1320 + $0x4] sm:$0xf]
  %v1323 = vld [vmem:[%s1320 + $0x8] sm:$0xf]
  %v1324 = vld [vmem:[%s1320 + $0xc] sm:$0xf]
  %v1329 = vunpack.c.l.b16 %v1321
  %v1330 = vunpack.c.l.b16 %v1322
  %v1331 = vunpack.c.l.b16 %v1323
  %v1332 = vunpack.c.l.b16 %v1324
  %v1333 = vpack.c.b16 %v1330, %v1329
  %v1334 = vpack.c.b16 %v1332, %v1331
  %v1338 = vsel %vm48, %v1319, 0
  %1340 = vmatprep.subr.bf16.mxu0 0
  %1341 = vmatpush1.bf16.msra.mxu0 0
  %1342 = vmatprep.subr.bf16.mxu0 0
  %1343 = vmatpush1.bf16.msra.mxu0 0
  %1344 = vmatprep.subr.bf16.mxu0 0
  %1345 = vmatpush1.bf16.msra.mxu0 0
  %1346 = vmatprep.subr.bf16.mxu0 0
  %1347 = vmatpush1.bf16.msra.mxu0 0
  %1348 = vmatprep.subr.bf16.mxu0 0
  %1349 = vmatpush1.bf16.msra.mxu0 0
  %1350 = vmatprep.subr.bf16.mxu0 0
  %1351 = vmatpush1.bf16.msra.mxu0 0
  %1352 = vmatprep.subr.bf16.mxu0 0
  %1353 = vmatpush1.bf16.msra.mxu0 %v1334
  %1354 = vmatprep.subr.bf16.mxu0 0
  %1355 = vmatpush1.bf16.msra.mxu0 %v1333
  %1356 = vmatprep.subr.bf16.mxu0 0
  %1357 = vmatpush2.bf16.msra.mxu0 0
  %1358 = vmatprep.subr.bf16.mxu0 0
  %1359 = vmatpush2.bf16.msra.mxu0 0
  %1360 = vmatprep.subr.bf16.mxu0 0
  %1361 = vmatpush2.bf16.msra.mxu0 0
  %1362 = vmatprep.subr.bf16.mxu0 0
  %1363 = vmatpush2.bf16.msra.mxu0 0
  %1364 = vmatprep.subr.bf16.mxu0 0
  %1365 = vmatpush2.bf16.msra.mxu0 0
  %1366 = vmatprep.subr.bf16.mxu0 0
  %1367 = vmatpush2.bf16.msra.mxu0 0
  %1368 = vmatprep.subr.bf16.mxu0 0
  %1369 = vmatpush2.bf16.msra.mxu0 0
  %1370 = vmatprep.subr.bf16.mxu0 0
  %1371 = vmatpush2.bf16.msra.mxu0 0
  %1372 = vmatprep.mubr.bf16.mxu0 0
  %1373 = vmatmul.mubr.bf16.gmra.mxu0 %v1338
  %v1374 = vpop.f32.mrf.mxu0
  %v1375 = vadd.f32 0.0, %v1374
  %v1376 = vpop.f32.mrf.mxu0
  %v1377 = vpop.f32.mrf.mxu0
  %v1378 = vadd.f32 0.0, %v1377
  %v1379 = vpop.f32.mrf.mxu0
  %1380 = vdwg.mxu0
  %v1381 = vmul.f32 %v1375, 0.5
  %v1382 = vmul.f32 %v1378, 0.5
  %v1383 = vmul.f32 %v1375, 0.044715
  %v1384 = vmul.f32 %v1378, 0.044715
  %v1385 = vmul.f32 %v1383, %v1375
  %v1386 = vmul.f32 %v1384, %v1378
  %v1387 = vmul.f32 %v1385, %v1375
  %v1388 = vmul.f32 %v1386, %v1378
  %v1389 = vadd.f32 %v1375, %v1387
  %v1390 = vadd.f32 %v1378, %v1388
  %v1391 = vmul.f32 %v1389, 0.7978846
  %v1392 = vmul.f32 %v1390, 0.7978846
  %v1393 = vtanh.pop %v1391
  %v1394 = vtanh.pop %v1392
  %v1395 = vadd.f32 %v1393, 1.0
  %v1396 = vadd.f32 %v1394, 1.0
  %v1397 = vmul.f32 %v1381, %v1395
  %v1398 = vmul.f32 %v1382, %v1396
  %v1399 = vpack.c.bf16 %v1398, %v1397
  %s1400 = scalar_lea.vmem %s9, 64
  %v1401 = vld [vmem:[%s1400] sm:$0xf]
  %v1402 = vld [vmem:[%s1400 + $0x4] sm:$0xf]
  %v1403 = vld [vmem:[%s1400 + $0x8] sm:$0xf]
  %v1404 = vld [vmem:[%s1400 + $0xc] sm:$0xf]
  %v1405 = vld [vmem:[%s1400 + $0x10] sm:$0xf]
  %v1406 = vld [vmem:[%s1400 + $0x14] sm:$0xf]
  %v1407 = vld [vmem:[%s1400 + $0x18] sm:$0xf]
  %v1408 = vld [vmem:[%s1400 + $0x1c] sm:$0xf]
  %v1409 = vld [vmem:[%s1400 + $0x20] sm:$0xf]
  %v1410 = vld [vmem:[%s1400 + $0x24] sm:$0xf]
  %v1411 = vld [vmem:[%s1400 + $0x28] sm:$0xf]
  %v1412 = vld [vmem:[%s1400 + $0x2c] sm:$0xf]
  %v1413 = vld [vmem:[%s1400 + $0x30] sm:$0xf]
  %v1414 = vld [vmem:[%s1400 + $0x34] sm:$0xf]
  %v1415 = vld [vmem:[%s1400 + $0x38] sm:$0xf]
  %v1416 = vld [vmem:[%s1400 + $0x3c] sm:$0xf]
  %v1433 = vunpack.c.l.b16 %v1401
  %v1434 = vunpack.c.l.b16 %v1402
  %v1435 = vunpack.c.l.b16 %v1403
  %v1436 = vunpack.c.l.b16 %v1404
  %v1437 = vunpack.c.l.b16 %v1405
  %v1438 = vunpack.c.l.b16 %v1406
  %v1439 = vunpack.c.l.b16 %v1407
  %v1440 = vunpack.c.l.b16 %v1408
  %v1441 = vunpack.c.l.b16 %v1409
  %v1442 = vunpack.c.l.b16 %v1410
  %v1443 = vunpack.c.l.b16 %v1411
  %v1444 = vunpack.c.l.b16 %v1412
  %v1445 = vunpack.c.l.b16 %v1413
  %v1446 = vunpack.c.l.b16 %v1414
  %v1447 = vunpack.c.l.b16 %v1415
  %v1448 = vunpack.c.l.b16 %v1416
  %v1449 = vpack.c.b16 %v1434, %v1433
  %v1450 = vpack.c.b16 %v1436, %v1435
  %v1451 = vpack.c.b16 %v1438, %v1437
  %v1452 = vpack.c.b16 %v1440, %v1439
  %v1453 = vpack.c.b16 %v1442, %v1441
  %v1454 = vpack.c.b16 %v1444, %v1443
  %v1455 = vpack.c.b16 %v1446, %v1445
  %v1456 = vpack.c.b16 %v1448, %v1447
  %1465 = vmatprep.subr.bf16.mxu0 0
  %1466 = vmatpush1.bf16.msra.mxu0 %v1456
  %1467 = vmatprep.subr.bf16.mxu0 0
  %1468 = vmatpush1.bf16.msra.mxu0 %v1455
  %1469 = vmatprep.subr.bf16.mxu0 0
  %1470 = vmatpush1.bf16.msra.mxu0 %v1454
  %1471 = vmatprep.subr.bf16.mxu0 0
  %1472 = vmatpush1.bf16.msra.mxu0 %v1453
  %1473 = vmatprep.subr.bf16.mxu0 0
  %1474 = vmatpush1.bf16.msra.mxu0 %v1452
  %1475 = vmatprep.subr.bf16.mxu0 0
  %1476 = vmatpush1.bf16.msra.mxu0 %v1451
  %1477 = vmatprep.subr.bf16.mxu0 0
  %1478 = vmatpush1.bf16.msra.mxu0 %v1450
  %1479 = vmatprep.subr.bf16.mxu0 0
  %1480 = vmatpush1.bf16.msra.mxu0 %v1449
  %1481 = vmatprep.subr.bf16.mxu0 0
  %1482 = vmatpush2.bf16.msra.mxu0 0
  %1483 = vmatprep.subr.bf16.mxu0 0
  %1484 = vmatpush2.bf16.msra.mxu0 0
  %1485 = vmatprep.subr.bf16.mxu0 0
  %1486 = vmatpush2.bf16.msra.mxu0 0
  %1487 = vmatprep.subr.bf16.mxu0 0
  %1488 = vmatpush2.bf16.msra.mxu0 0
  %1489 = vmatprep.subr.bf16.mxu0 0
  %1490 = vmatpush2.bf16.msra.mxu0 0
  %1491 = vmatprep.subr.bf16.mxu0 0
  %1492 = vmatpush2.bf16.msra.mxu0 0
  %1493 = vmatprep.subr.bf16.mxu0 0
  %1494 = vmatpush2.bf16.msra.mxu0 0
  %1495 = vmatprep.subr.bf16.mxu0 0
  %1496 = vmatpush2.bf16.msra.mxu0 0
  %1497 = vmatprep.mubr.bf16.mxu0 0
  %1498 = vmatmul.mubr.bf16.gmra.mxu0 %v1399
  %v1499 = vpop.f32.mrf.mxu0
  %v1500 = vadd.f32 0.0, %v1499
  %v1501 = vpop.f32.mrf.mxu0
  %v1502 = vpop.f32.mrf.mxu0
  %v1503 = vadd.f32 0.0, %v1502
  %v1504 = vpop.f32.mrf.mxu0
  %1505 = vdwg.mxu0
  %v1506 = vadd.f32 %v1281, %v1500
  %v1507 = vadd.f32 %v1282, %v1503
  %v1508 = vld [vmem:[%s10] sm:$0x1]
  %v1509 = vsel %vm48, %v1506, 0.0
  %1510 = vadd.xlane.f32.xlu0 %v1509
  %v1511 = vpop.xlane.xlu0 %1510
  %v1512 = vsel %vm48, %v1507, 0.0
  %1513 = vadd.xlane.f32.xlu0 %v1512
  %v1514 = vpop.xlane.xlu0 %1513
  %v1515 = vmul.f32 %v1511, %v55
  %v1516 = vmul.f32 %v1514, %v55
  %v1517 = vsub.f32 %v1506, %v1515
  %v1518 = vsub.f32 %v1507, %v1516
  %v1519 = vmul.f32 %v1517, %v1517
  %v1520 = vmul.f32 %v1518, %v1518
  %v1521 = vsel %vm48, %v1519, 0.0
  %1522 = vadd.xlane.f32.xlu0 %v1521
  %v1523 = vpop.xlane.xlu0 %1522
  %v1524 = vsel %vm48, %v1520, 0.0
  %1525 = vadd.xlane.f32.xlu0 %v1524
  %v1526 = vpop.xlane.xlu0 %1525
  %v1527 = vmul.f32 %v1523, %v55
  %v1528 = vmul.f32 %v1526, %v55
  %v1529 = vadd.f32 %v1527, 1e-05
  %v1530 = vadd.f32 %v1528, 1e-05
  %v1531 = vrsqrt.pop %v1529
  %v1532 = vrsqrt.pop %v1530
  %v1533 = vmul.f32 %v1517, %v1531
  %v1534 = vmul.f32 %v1518, %v1532
  %v1536 = vlaneseq
  %v1537 = vshrl.u32 %v1536, 7
  %v1538 = vsub.s32 0, %v1537
  %v1539 = vrot.slane %v1508, %v1538
  %v1541 = vmul.f32 %v1533, %v1539
  %v1542 = vmul.f32 %v1534, %v1539
  %1543 = vst.msk [vmem:[%s11] sm:$0xff] %vm48, %v1541
  %1544 = vst.msk [vmem:[%s11 + $0x8] sm:$0xff] %vm48, %v1542
  %v1545 = vld [vmem:[%s0] sm:$0xff]
  %v1546 = vld [vmem:[%s0 + $0x8] sm:$0xff]
  %s1547 = scalar_lea.vmem %s1, 16
  %v1548 = vld [vmem:[%s1547] sm:$0xff]
  %v1549 = vld [vmem:[%s1547 + $0x8] sm:$0xff]
  %s1550 = scalar_lea.vmem %s2, 16
  %v1551 = vld [vmem:[%s1550] sm:$0xff]
  %v1552 = vld [vmem:[%s1550 + $0x8] sm:$0xff]
  %s1553 = scalar_lea.vmem %s3, 16
  %v1554 = vld [vmem:[%s1553] sm:$0xff]
  %v1555 = vld [vmem:[%s1553 + $0x8] sm:$0xff]
  %s1556 = scalar_lea.vmem %s4, 2
  %v1557 = vld [vmem:[%s1556] sm:$0x1]
  %v1558 = vsel %vm48, %v1545, 0.0
  %1559 = vadd.xlane.f32.xlu0 %v1558
  %v1560 = vpop.xlane.xlu0 %1559
  %v1561 = vsel %vm48, %v1546, 0.0
  %1562 = vadd.xlane.f32.xlu0 %v1561
  %v1563 = vpop.xlane.xlu0 %1562
  %v1564 = vmul.f32 %v1560, %v55
  %v1565 = vmul.f32 %v1563, %v55
  %v1566 = vsub.f32 %v1545, %v1564
  %v1567 = vsub.f32 %v1546, %v1565
  %v1568 = vmul.f32 %v1566, %v1566
  %v1569 = vmul.f32 %v1567, %v1567
  %v1570 = vsel %vm48, %v1568, 0.0
  %1571 = vadd.xlane.f32.xlu0 %v1570
  %v1572 = vpop.xlane.xlu0 %1571
  %v1573 = vsel %vm48, %v1569, 0.0
  %1574 = vadd.xlane.f32.xlu0 %v1573
  %v1575 = vpop.xlane.xlu0 %1574
  %v1576 = vmul.f32 %v1572, %v55
  %v1577 = vmul.f32 %v1575, %v55
  %v1578 = vadd.f32 %v1576, 1e-05
  %v1579 = vadd.f32 %v1577, 1e-05
  %v1580 = vrsqrt.pop %v1578
  %v1581 = vrsqrt.pop %v1579
  %v1582 = vmul.f32 %v1566, %v1580
  %v1583 = vmul.f32 %v1567, %v1581
  %v1585 = vlaneseq
  %v1586 = vshrl.u32 %v1585, 7
  %v1587 = vsub.s32 0, %v1586
  %v1588 = vrot.slane %v1557, %v1587
  %v1590 = vmul.f32 %v1582, %v1588
  %v1591 = vmul.f32 %v1583, %v1588
  %v1592 = vpack.c.bf16 %v1591, %v1590
  %s1593 = scalar_lea.vmem %s5, 64
  %v1594 = vld [vmem:[%s1593] sm:$0xff]
  %v1595 = vld [vmem:[%s1593 + $0x8] sm:$0xff]
  %v1596 = vld [vmem:[%s1593 + $0x10] sm:$0xff]
  %v1597 = vld [vmem:[%s1593 + $0x18] sm:$0xff]
  %v1602 = vunpack.c.l.b16 %v1594
  %v1603 = vunpack.c.h.b16 %v1594
  %v1604 = vunpack.c.l.b16 %v1595
  %v1605 = vunpack.c.h.b16 %v1595
  %v1606 = vunpack.c.l.b16 %v1596
  %v1607 = vunpack.c.h.b16 %v1596
  %v1608 = vunpack.c.l.b16 %v1597
  %v1609 = vunpack.c.h.b16 %v1597
  %v1610 = vpack.c.b16 %v1604, %v1602
  %v1611 = vpack.c.b16 %v1605, %v1603
  %v1612 = vpack.c.b16 %v1608, %v1606
  %v1613 = vpack.c.b16 %v1609, %v1607
  %v1619 = vsel %vm48, %v1592, 0
  %1621 = vmatprep.subr.bf16.mxu0 0
  %1622 = vmatpush1.bf16.msra.mxu0 0
  %1623 = vmatprep.subr.bf16.mxu0 0
  %1624 = vmatpush1.bf16.msra.mxu0 0
  %1625 = vmatprep.subr.bf16.mxu0 0
  %1626 = vmatpush1.bf16.msra.mxu0 0
  %1627 = vmatprep.subr.bf16.mxu0 0
  %1628 = vmatpush1.bf16.msra.mxu0 0
  %1629 = vmatprep.subr.bf16.mxu0 0
  %1630 = vmatpush1.bf16.msra.mxu0 0
  %1631 = vmatprep.subr.bf16.mxu0 0
  %1632 = vmatpush1.bf16.msra.mxu0 0
  %1633 = vmatprep.subr.bf16.mxu0 %v1613
  %1634 = vmatpush1.bf16.msra.mxu0 %v1612
  %1635 = vmatprep.subr.bf16.mxu0 %v1611
  %1636 = vmatpush1.bf16.msra.mxu0 %v1610
  %1637 = vmatprep.subr.bf16.mxu0 0
  %1638 = vmatpush2.bf16.msra.mxu0 0
  %1639 = vmatprep.subr.bf16.mxu0 0
  %1640 = vmatpush2.bf16.msra.mxu0 0
  %1641 = vmatprep.subr.bf16.mxu0 0
  %1642 = vmatpush2.bf16.msra.mxu0 0
  %1643 = vmatprep.subr.bf16.mxu0 0
  %1644 = vmatpush2.bf16.msra.mxu0 0
  %1645 = vmatprep.subr.bf16.mxu0 0
  %1646 = vmatpush2.bf16.msra.mxu0 0
  %1647 = vmatprep.subr.bf16.mxu0 0
  %1648 = vmatpush2.bf16.msra.mxu0 0
  %1649 = vmatprep.subr.bf16.mxu0 0
  %1650 = vmatpush2.bf16.msra.mxu0 0
  %1651 = vmatprep.subr.bf16.mxu0 0
  %1652 = vmatpush2.bf16.msra.mxu0 0
  %1653 = vmatprep.mubr.bf16.mxu0 0
  %1654 = vmatmul.mubr.bf16.gmra.mxu0 %v1619
  %v1655 = vpop.f32.mrf.mxu0
  %v1656 = vadd.f32 0.0, %v1655
  %v1657 = vpop.f32.mrf.mxu0
  %v1658 = vadd.f32 0.0, %v1657
  %v1659 = vpop.f32.mrf.mxu0
  %v1660 = vadd.f32 0.0, %v1659
  %v1661 = vpop.f32.mrf.mxu0
  %v1662 = vadd.f32 0.0, %v1661
  %1663 = vdwg.mxu0
  %v1664 = vmul.f32 %v1656, %v1548
  %v1665 = vmul.f32 %v1660, %v1549
  %1668 = vrot.lane.b32.xlu0 %v1551, 96
  %v1669 = vpop.permute.xlu0 %1668
  %1670 = vrot.lane.b32.xlu0 %v1552, 96
  %v1671 = vpop.permute.xlu0 %1670
  %v1674 = vmul.f32 %v1656, %v1669
  %v1675 = vmul.f32 %v1660, %v1671
  %1678 = vrot.lane.b32.xlu0 %v1674, 32
  %v1679 = vpop.permute.xlu0 %1678
  %1680 = vrot.lane.b32.xlu0 %v1675, 32
  %v1681 = vpop.permute.xlu0 %1680
  %v1684 = vadd.f32 %v1664, %v1679
  %v1685 = vadd.f32 %v1665, %v1681
  %1688 = vrot.lane.b32.xlu0 %v1548, 32
  %v1689 = vpop.permute.xlu0 %1688
  %1690 = vrot.lane.b32.xlu0 %v1549, 32
  %v1691 = vpop.permute.xlu0 %1690
  %v1694 = vmul.f32 %v1656, %v1689
  %v1695 = vmul.f32 %v1660, %v1691
  %v1696 = vmul.f32 %v1658, %v1551
  %v1697 = vmul.f32 %v1662, %v1552
  %1700 = vrot.lane.b32.xlu0 %v1696, 32
  %v1701 = vpop.permute.xlu0 %1700
  %1702 = vrot.lane.b32.xlu0 %v1697, 32
  %v1703 = vpop.permute.xlu0 %1702
  %v1706 = vadd.f32 %v1694, %v1701
  %v1707 = vadd.f32 %v1695, %v1703
  %s1708 = scalar_lea.vmem %s6, 32
  %v1709 = vld [vmem:[%s1708] sm:$0xf]
  %v1710 = vld [vmem:[%s1708 + $0x4] sm:$0xf]
  %v1711 = vld [vmem:[%s1708 + $0x8] sm:$0xf]
  %v1712 = vld [vmem:[%s1708 + $0xc] sm:$0xf]
  %v1713 = vpack.c.bf16 %v1685, %v1684
  %v1714 = vpack.c.bf16 %v1707, %v1706
  %v1715 = vpack.c.bf16 %v1660, %v1656
  %1717 = vrot.lane.b32.xlu0 %v1714, 96
  %v1718 = vpop.permute.xlu0 %1717
  %v1720 = vsel %vm209, %v1713, 0
  %v1723 = vsel %vm209, %v1718, 0
  %1725 = vmatprep.subr.bf16.mxu0 0
  %1726 = vmatpush1.bf16.xpose.msra.mxu0 0
  %1727 = vmatprep.subr.bf16.mxu0 0
  %1728 = vmatpush1.bf16.xpose.msra.mxu0 0
  %1729 = vmatprep.subr.bf16.mxu0 0
  %1730 = vmatpush1.bf16.xpose.msra.mxu0 0
  %1731 = vmatprep.subr.bf16.mxu0 0
  %1732 = vmatpush1.bf16.xpose.msra.mxu0 0
  %1733 = vmatprep.subr.bf16.mxu0 0
  %1734 = vmatpush1.bf16.xpose.msra.mxu0 0
  %1735 = vmatprep.subr.bf16.mxu0 0
  %1736 = vmatpush1.bf16.xpose.msra.mxu0 0
  %1737 = vmatprep.subr.bf16.mxu0 0
  %1738 = vmatpush1.bf16.xpose.msra.mxu0 0
  %1739 = vmatprep.subr.bf16.mxu0 0
  %1740 = vmatpush1.bf16.xpose.msra.mxu0 %v1723
  %1741 = vmatprep.subr.bf16.mxu0 0
  %1742 = vmatpush2.bf16.xpose.msra.mxu0 0
  %1743 = vmatprep.subr.bf16.mxu0 0
  %1744 = vmatpush2.bf16.xpose.msra.mxu0 0
  %1745 = vmatprep.subr.bf16.mxu0 0
  %1746 = vmatpush2.bf16.xpose.msra.mxu0 0
  %1747 = vmatprep.subr.bf16.mxu0 0
  %1748 = vmatpush2.bf16.xpose.msra.mxu0 0
  %1749 = vmatprep.subr.bf16.mxu0 0
  %1750 = vmatpush2.bf16.xpose.msra.mxu0 0
  %1751 = vmatprep.subr.bf16.mxu0 0
  %1752 = vmatpush2.bf16.xpose.msra.mxu0 0
  %1753 = vmatprep.subr.bf16.mxu0 0
  %1754 = vmatpush2.bf16.xpose.msra.mxu0 0
  %1755 = vmatprep.subr.bf16.mxu0 0
  %1756 = vmatpush2.bf16.xpose.msra.mxu0 0
  %1757 = vmatprep.mubr.bf16.mxu0 0
  %1758 = vmatmul.mubr.bf16.gmra.mxu0 %v1720
  %v1759 = vpop.f32.mrf.mxu0
  %v1760 = vadd.f32 0.0, %v1759
  %v1761 = vpop.f32.mrf.mxu0
  %v1762 = vpop.f32.mrf.mxu0
  %v1763 = vadd.f32 0.0, %v1762
  %v1764 = vpop.f32.mrf.mxu0
  %1765 = vdwg.mxu0
  %v1766 = vmul.f32 %v1760, 0.25
  %v1767 = vmul.f32 %v1763, 0.25
  %v1768 = vadd.f32 %v1766, %v1554
  %v1769 = vadd.f32 %v1767, %v1555
  %v1770 = vsel %vm209, %v1768, -inf
  %1771 = vmax.xlane.f32.xlu0 %v1770
  %v1772 = vpop.xlane.xlu0 %1771
  %v1773 = vsel %vm209, %v1769, -inf
  %1774 = vmax.xlane.f32.xlu0 %v1773
  %v1775 = vpop.xlane.xlu0 %1774
  %v1776 = vsub.f32 %v1768, %v1772
  %v1777 = vsub.f32 %v1769, %v1775
  %v1778 = vmul.f32 %v1776, 1.442695
  %v1779 = vpow.pop %v1778
  %v1780 = vmul.f32 %v1777, 1.442695
  %v1781 = vpow.pop %v1780
  %v1782 = vsel %vm209, %v1779, 0.0
  %1783 = vadd.xlane.f32.xlu0 %v1782
  %v1784 = vpop.xlane.xlu0 %1783
  %v1785 = vsel %vm209, %v1781, 0.0
  %1786 = vadd.xlane.f32.xlu0 %v1785
  %v1787 = vpop.xlane.xlu0 %1786
  %v1788 = vrcp.pop %v1784
  %v1789 = vrcp.pop %v1787
  %v1790 = vmul.f32 %v1779, %v1788
  %v1791 = vmul.f32 %v1781, %v1789
  %v1792 = vpack.c.bf16 %v1791, %v1790
  %1794 = vrot.lane.b32.xlu0 %v1715, 64
  %v1795 = vpop.permute.xlu0 %1794
  %v1798 = vsel %vm209, %v1792, 0
  %1800 = vmatprep.subr.bf16.mxu0 0
  %1801 = vmatpush1.bf16.msra.mxu0 0
  %1802 = vmatprep.subr.bf16.mxu0 0
  %1803 = vmatpush1.bf16.msra.mxu0 0
  %1804 = vmatprep.subr.bf16.mxu0 0
  %1805 = vmatpush1.bf16.msra.mxu0 0
  %1806 = vmatprep.subr.bf16.mxu0 0
  %1807 = vmatpush1.bf16.msra.mxu0 0
  %1808 = vmatprep.subr.bf16.mxu0 0
  %1809 = vmatpush1.bf16.msra.mxu0 0
  %1810 = vmatprep.subr.bf16.mxu0 0
  %1811 = vmatpush1.bf16.msra.mxu0 0
  %1812 = vmatprep.subr.bf16.mxu0 0
  %1813 = vmatpush1.bf16.msra.mxu0 0
  %1814 = vmatprep.subr.bf16.mxu0 0
  %1815 = vmatpush1.bf16.msra.mxu0 %v1795
  %1816 = vmatprep.subr.bf16.mxu0 0
  %1817 = vmatpush2.bf16.msra.mxu0 0
  %1818 = vmatprep.subr.bf16.mxu0 0
  %1819 = vmatpush2.bf16.msra.mxu0 0
  %1820 = vmatprep.subr.bf16.mxu0 0
  %1821 = vmatpush2.bf16.msra.mxu0 0
  %1822 = vmatprep.subr.bf16.mxu0 0
  %1823 = vmatpush2.bf16.msra.mxu0 0
  %1824 = vmatprep.subr.bf16.mxu0 0
  %1825 = vmatpush2.bf16.msra.mxu0 0
  %1826 = vmatprep.subr.bf16.mxu0 0
  %1827 = vmatpush2.bf16.msra.mxu0 0
  %1828 = vmatprep.subr.bf16.mxu0 0
  %1829 = vmatpush2.bf16.msra.mxu0 0
  %1830 = vmatprep.subr.bf16.mxu0 0
  %1831 = vmatpush2.bf16.msra.mxu0 0
  %1832 = vmatprep.mubr.bf16.mxu0 0
  %1833 = vmatmul.mubr.bf16.gmra.mxu0 %v1798
  %v1834 = vpop.f32.mrf.mxu0
  %v1835 = vadd.f32 0.0, %v1834
  %v1836 = vpop.f32.mrf.mxu0
  %v1837 = vpop.f32.mrf.mxu0
  %v1838 = vadd.f32 0.0, %v1837
  %v1839 = vpop.f32.mrf.mxu0
  %1840 = vdwg.mxu0
  %v1841 = vpack.c.bf16 %v1838, %v1835
  %1843 = vrot.lane.b32.xlu0 %v1713, 112
  %v1844 = vpop.permute.xlu0 %1843
  %1845 = vrot.lane.b32.xlu0 %v1714, 80
  %v1846 = vpop.permute.xlu0 %1845
  %v1848 = vsel %vm209, %v1844, 0
  %v1851 = vsel %vm209, %v1846, 0
  %1853 = vmatprep.subr.bf16.mxu0 0
  %1854 = vmatpush1.bf16.xpose.msra.mxu0 0
  %1855 = vmatprep.subr.bf16.mxu0 0
  %1856 = vmatpush1.bf16.xpose.msra.mxu0 0
  %1857 = vmatprep.subr.bf16.mxu0 0
  %1858 = vmatpush1.bf16.xpose.msra.mxu0 0
  %1859 = vmatprep.subr.bf16.mxu0 0
  %1860 = vmatpush1.bf16.xpose.msra.mxu0 0
  %1861 = vmatprep.subr.bf16.mxu0 0
  %1862 = vmatpush1.bf16.xpose.msra.mxu0 0
  %1863 = vmatprep.subr.bf16.mxu0 0
  %1864 = vmatpush1.bf16.xpose.msra.mxu0 0
  %1865 = vmatprep.subr.bf16.mxu0 0
  %1866 = vmatpush1.bf16.xpose.msra.mxu0 0
  %1867 = vmatprep.subr.bf16.mxu0 0
  %1868 = vmatpush1.bf16.xpose.msra.mxu0 %v1851
  %1869 = vmatprep.subr.bf16.mxu0 0
  %1870 = vmatpush2.bf16.xpose.msra.mxu0 0
  %1871 = vmatprep.subr.bf16.mxu0 0
  %1872 = vmatpush2.bf16.xpose.msra.mxu0 0
  %1873 = vmatprep.subr.bf16.mxu0 0
  %1874 = vmatpush2.bf16.xpose.msra.mxu0 0
  %1875 = vmatprep.subr.bf16.mxu0 0
  %1876 = vmatpush2.bf16.xpose.msra.mxu0 0
  %1877 = vmatprep.subr.bf16.mxu0 0
  %1878 = vmatpush2.bf16.xpose.msra.mxu0 0
  %1879 = vmatprep.subr.bf16.mxu0 0
  %1880 = vmatpush2.bf16.xpose.msra.mxu0 0
  %1881 = vmatprep.subr.bf16.mxu0 0
  %1882 = vmatpush2.bf16.xpose.msra.mxu0 0
  %1883 = vmatprep.subr.bf16.mxu0 0
  %1884 = vmatpush2.bf16.xpose.msra.mxu0 0
  %1885 = vmatprep.mubr.bf16.mxu0 0
  %1886 = vmatmul.mubr.bf16.gmra.mxu0 %v1848
  %v1887 = vpop.f32.mrf.mxu0
  %v1888 = vadd.f32 0.0, %v1887
  %v1889 = vpop.f32.mrf.mxu0
  %v1890 = vpop.f32.mrf.mxu0
  %v1891 = vadd.f32 0.0, %v1890
  %v1892 = vpop.f32.mrf.mxu0
  %1893 = vdwg.mxu0
  %v1894 = vmul.f32 %v1888, 0.25
  %v1895 = vmul.f32 %v1891, 0.25
  %v1896 = vadd.f32 %v1894, %v1554
  %v1897 = vadd.f32 %v1895, %v1555
  %v1898 = vsel %vm209, %v1896, -inf
  %1899 = vmax.xlane.f32.xlu0 %v1898
  %v1900 = vpop.xlane.xlu0 %1899
  %v1901 = vsel %vm209, %v1897, -inf
  %1902 = vmax.xlane.f32.xlu0 %v1901
  %v1903 = vpop.xlane.xlu0 %1902
  %v1904 = vsub.f32 %v1896, %v1900
  %v1905 = vsub.f32 %v1897, %v1903
  %v1906 = vmul.f32 %v1904, 1.442695
  %v1907 = vpow.pop %v1906
  %v1908 = vmul.f32 %v1905, 1.442695
  %v1909 = vpow.pop %v1908
  %v1910 = vsel %vm209, %v1907, 0.0
  %1911 = vadd.xlane.f32.xlu0 %v1910
  %v1912 = vpop.xlane.xlu0 %1911
  %v1913 = vsel %vm209, %v1909, 0.0
  %1914 = vadd.xlane.f32.xlu0 %v1913
  %v1915 = vpop.xlane.xlu0 %1914
  %v1916 = vrcp.pop %v1912
  %v1917 = vrcp.pop %v1915
  %v1918 = vmul.f32 %v1907, %v1916
  %v1919 = vmul.f32 %v1909, %v1917
  %v1920 = vpack.c.bf16 %v1919, %v1918
  %1921 = vrot.lane.b32.xlu0 %v1715, 48
  %v1922 = vpop.permute.xlu0 %1921
  %v1925 = vsel %vm209, %v1920, 0
  %1927 = vmatprep.subr.bf16.mxu0 0
  %1928 = vmatpush1.bf16.msra.mxu0 0
  %1929 = vmatprep.subr.bf16.mxu0 0
  %1930 = vmatpush1.bf16.msra.mxu0 0
  %1931 = vmatprep.subr.bf16.mxu0 0
  %1932 = vmatpush1.bf16.msra.mxu0 0
  %1933 = vmatprep.subr.bf16.mxu0 0
  %1934 = vmatpush1.bf16.msra.mxu0 0
  %1935 = vmatprep.subr.bf16.mxu0 0
  %1936 = vmatpush1.bf16.msra.mxu0 0
  %1937 = vmatprep.subr.bf16.mxu0 0
  %1938 = vmatpush1.bf16.msra.mxu0 0
  %1939 = vmatprep.subr.bf16.mxu0 0
  %1940 = vmatpush1.bf16.msra.mxu0 0
  %1941 = vmatprep.subr.bf16.mxu0 0
  %1942 = vmatpush1.bf16.msra.mxu0 %v1922
  %1943 = vmatprep.subr.bf16.mxu0 0
  %1944 = vmatpush2.bf16.msra.mxu0 0
  %1945 = vmatprep.subr.bf16.mxu0 0
  %1946 = vmatpush2.bf16.msra.mxu0 0
  %1947 = vmatprep.subr.bf16.mxu0 0
  %1948 = vmatpush2.bf16.msra.mxu0 0
  %1949 = vmatprep.subr.bf16.mxu0 0
  %1950 = vmatpush2.bf16.msra.mxu0 0
  %1951 = vmatprep.subr.bf16.mxu0 0
  %1952 = vmatpush2.bf16.msra.mxu0 0
  %1953 = vmatprep.subr.bf16.mxu0 0
  %1954 = vmatpush2.bf16.msra.mxu0 0
  %1955 = vmatprep.subr.bf16.mxu0 0
  %1956 = vmatpush2.bf16.msra.mxu0 0
  %1957 = vmatprep.subr.bf16.mxu0 0
  %1958 = vmatpush2.bf16.msra.mxu0 0
  %1959 = vmatprep.mubr.bf16.mxu0 0
  %1960 = vmatmul.mubr.bf16.gmra.mxu0 %v1925
  %v1961 = vpop.f32.mrf.mxu0
  %v1962 = vadd.f32 0.0, %v1961
  %v1963 = vpop.f32.mrf.mxu0
  %v1964 = vpop.f32.mrf.mxu0
  %v1965 = vadd.f32 0.0, %v1964
  %v1966 = vpop.f32.mrf.mxu0
  %1967 = vdwg.mxu0
  %v1968 = vpack.c.bf16 %v1965, %v1962
  %v1971 = vunpack.c.l.b16 %v1711
  %v1972 = vunpack.c.l.b16 %v1712
  %v1973 = vpack.c.b16 %v1972, %v1971
  %v1976 = vsel %vm209, %v1968, 0
  %1978 = vmatprep.subr.bf16.mxu0 0
  %1979 = vmatpush1.bf16.msra.mxu0 0
  %1980 = vmatprep.subr.bf16.mxu0 0
  %1981 = vmatpush1.bf16.msra.mxu0 0
  %1982 = vmatprep.subr.bf16.mxu0 0
  %1983 = vmatpush1.bf16.msra.mxu0 0
  %1984 = vmatprep.subr.bf16.mxu0 0
  %1985 = vmatpush1.bf16.msra.mxu0 0
  %1986 = vmatprep.subr.bf16.mxu0 0
  %1987 = vmatpush1.bf16.msra.mxu0 0
  %1988 = vmatprep.subr.bf16.mxu0 0
  %1989 = vmatpush1.bf16.msra.mxu0 0
  %1990 = vmatprep.subr.bf16.mxu0 0
  %1991 = vmatpush1.bf16.msra.mxu0 0
  %1992 = vmatprep.subr.bf16.mxu0 0
  %1993 = vmatpush1.bf16.msra.mxu0 %v1973
  %1994 = vmatprep.subr.bf16.mxu0 0
  %1995 = vmatpush2.bf16.msra.mxu0 0
  %1996 = vmatprep.subr.bf16.mxu0 0
  %1997 = vmatpush2.bf16.msra.mxu0 0
  %1998 = vmatprep.subr.bf16.mxu0 0
  %1999 = vmatpush2.bf16.msra.mxu0 0
  %2000 = vmatprep.subr.bf16.mxu0 0
  %2001 = vmatpush2.bf16.msra.mxu0 0
  %2002 = vmatprep.subr.bf16.mxu0 0
  %2003 = vmatpush2.bf16.msra.mxu0 0
  %2004 = vmatprep.subr.bf16.mxu0 0
  %2005 = vmatpush2.bf16.msra.mxu0 0
  %2006 = vmatprep.subr.bf16.mxu0 0
  %2007 = vmatpush2.bf16.msra.mxu0 0
  %2008 = vmatprep.subr.bf16.mxu0 0
  %2009 = vmatpush2.bf16.msra.mxu0 0
  %2010 = vmatprep.mubr.bf16.mxu0 0
  %2011 = vmatmul.mubr.bf16.gmra.mxu0 %v1976
  %v2012 = vpop.f32.mrf.mxu0
  %v2013 = vadd.f32 0.0, %v2012
  %v2014 = vpop.f32.mrf.mxu0
  %v2015 = vpop.f32.mrf.mxu0
  %v2016 = vadd.f32 0.0, %v2015
  %v2017 = vpop.f32.mrf.mxu0
  %2018 = vdwg.mxu0
  %v2021 = vunpack.c.l.b16 %v1709
  %v2022 = vunpack.c.l.b16 %v1710
  %v2023 = vpack.c.b16 %v2022, %v2021
  %v2026 = vsel %vm209, %v1841, 0
  %2028 = vmatprep.subr.bf16.mxu0 0
  %2029 = vmatpush1.bf16.msra.mxu0 0
  %2030 = vmatprep.subr.bf16.mxu0 0
  %2031 = vmatpush1.bf16.msra.mxu0 0
  %2032 = vmatprep.subr.bf16.mxu0 0
  %2033 = vmatpush1.bf16.msra.mxu0 0
  %2034 = vmatprep.subr.bf16.mxu0 0
  %2035 = vmatpush1.bf16.msra.mxu0 0
  %2036 = vmatprep.subr.bf16.mxu0 0
  %2037 = vmatpush1.bf16.msra.mxu0 0
  %2038 = vmatprep.subr.bf16.mxu0 0
  %2039 = vmatpush1.bf16.msra.mxu0 0
  %2040 = vmatprep.subr.bf16.mxu0 0
  %2041 = vmatpush1.bf16.msra.mxu0 0
  %2042 = vmatprep.subr.bf16.mxu0 0
  %2043 = vmatpush1.bf16.msra.mxu0 %v2023
  %2044 = vmatprep.subr.bf16.mxu0 0
  %2045 = vmatpush2.bf16.msra.mxu0 0
  %2046 = vmatprep.subr.bf16.mxu0 0
  %2047 = vmatpush2.bf16.msra.mxu0 0
  %2048 = vmatprep.subr.bf16.mxu0 0
  %2049 = vmatpush2.bf16.msra.mxu0 0
  %2050 = vmatprep.subr.bf16.mxu0 0
  %2051 = vmatpush2.bf16.msra.mxu0 0
  %2052 = vmatprep.subr.bf16.mxu0 0
  %2053 = vmatpush2.bf16.msra.mxu0 0
  %2054 = vmatprep.subr.bf16.mxu0 0
  %2055 = vmatpush2.bf16.msra.mxu0 0
  %2056 = vmatprep.subr.bf16.mxu0 0
  %2057 = vmatpush2.bf16.msra.mxu0 0
  %2058 = vmatprep.subr.bf16.mxu0 0
  %2059 = vmatpush2.bf16.msra.mxu0 0
  %2060 = vmatprep.mubr.bf16.mxu0 0
  %2061 = vmatmul.mubr.bf16.gmra.mxu0 %v2026
  %v2062 = vpop.f32.mrf.mxu0
  %v2063 = vadd.f32 %v2013, %v2062
  %v2064 = vpop.f32.mrf.mxu0
  %v2065 = vpop.f32.mrf.mxu0
  %v2066 = vadd.f32 %v2016, %v2065
  %v2067 = vpop.f32.mrf.mxu0
  %2068 = vdwg.mxu0
  %v2069 = vadd.f32 %v1545, %v2063
  %v2070 = vadd.f32 %v1546, %v2066
  %s2071 = scalar_lea.vmem %s7, 2
  %v2072 = vld [vmem:[%s2071] sm:$0x1]
  %v2073 = vsel %vm48, %v2069, 0.0
  %2074 = vadd.xlane.f32.xlu0 %v2073
  %v2075 = vpop.xlane.xlu0 %2074
  %v2076 = vsel %vm48, %v2070, 0.0
  %2077 = vadd.xlane.f32.xlu0 %v2076
  %v2078 = vpop.xlane.xlu0 %2077
  %v2079 = vmul.f32 %v2075, %v55
  %v2080 = vmul.f32 %v2078, %v55
  %v2081 = vsub.f32 %v2069, %v2079
  %v2082 = vsub.f32 %v2070, %v2080
  %v2083 = vmul.f32 %v2081, %v2081
  %v2084 = vmul.f32 %v2082, %v2082
  %v2085 = vsel %vm48, %v2083, 0.0
  %2086 = vadd.xlane.f32.xlu0 %v2085
  %v2087 = vpop.xlane.xlu0 %2086
  %v2088 = vsel %vm48, %v2084, 0.0
  %2089 = vadd.xlane.f32.xlu0 %v2088
  %v2090 = vpop.xlane.xlu0 %2089
  %v2091 = vmul.f32 %v2087, %v55
  %v2092 = vmul.f32 %v2090, %v55
  %v2093 = vadd.f32 %v2091, 1e-05
  %v2094 = vadd.f32 %v2092, 1e-05
  %v2095 = vrsqrt.pop %v2093
  %v2096 = vrsqrt.pop %v2094
  %v2097 = vmul.f32 %v2081, %v2095
  %v2098 = vmul.f32 %v2082, %v2096
  %v2100 = vlaneseq
  %v2101 = vshrl.u32 %v2100, 7
  %v2102 = vsub.s32 0, %v2101
  %v2103 = vrot.slane %v2072, %v2102
  %v2105 = vmul.f32 %v2097, %v2103
  %v2106 = vmul.f32 %v2098, %v2103
  %v2107 = vpack.c.bf16 %v2106, %v2105
  %s2108 = scalar_lea.vmem %s8, 32
  %v2109 = vld [vmem:[%s2108] sm:$0xf]
  %v2110 = vld [vmem:[%s2108 + $0x4] sm:$0xf]
  %v2111 = vld [vmem:[%s2108 + $0x8] sm:$0xf]
  %v2112 = vld [vmem:[%s2108 + $0xc] sm:$0xf]
  %v2117 = vunpack.c.l.b16 %v2109
  %v2118 = vunpack.c.l.b16 %v2110
  %v2119 = vunpack.c.l.b16 %v2111
  %v2120 = vunpack.c.l.b16 %v2112
  %v2121 = vpack.c.b16 %v2118, %v2117
  %v2122 = vpack.c.b16 %v2120, %v2119
  %v2126 = vsel %vm48, %v2107, 0
  %2128 = vmatprep.subr.bf16.mxu0 0
  %2129 = vmatpush1.bf16.msra.mxu0 0
  %2130 = vmatprep.subr.bf16.mxu0 0
  %2131 = vmatpush1.bf16.msra.mxu0 0
  %2132 = vmatprep.subr.bf16.mxu0 0
  %2133 = vmatpush1.bf16.msra.mxu0 0
  %2134 = vmatprep.subr.bf16.mxu0 0
  %2135 = vmatpush1.bf16.msra.mxu0 0
  %2136 = vmatprep.subr.bf16.mxu0 0
  %2137 = vmatpush1.bf16.msra.mxu0 0
  %2138 = vmatprep.subr.bf16.mxu0 0
  %2139 = vmatpush1.bf16.msra.mxu0 0
  %2140 = vmatprep.subr.bf16.mxu0 0
  %2141 = vmatpush1.bf16.msra.mxu0 %v2122
  %2142 = vmatprep.subr.bf16.mxu0 0
  %2143 = vmatpush1.bf16.msra.mxu0 %v2121
  %2144 = vmatprep.subr.bf16.mxu0 0
  %2145 = vmatpush2.bf16.msra.mxu0 0
  %2146 = vmatprep.subr.bf16.mxu0 0
  %2147 = vmatpush2.bf16.msra.mxu0 0
  %2148 = vmatprep.subr.bf16.mxu0 0
  %2149 = vmatpush2.bf16.msra.mxu0 0
  %2150 = vmatprep.subr.bf16.mxu0 0
  %2151 = vmatpush2.bf16.msra.mxu0 0
  %2152 = vmatprep.subr.bf16.mxu0 0
  %2153 = vmatpush2.bf16.msra.mxu0 0
  %2154 = vmatprep.subr.bf16.mxu0 0
  %2155 = vmatpush2.bf16.msra.mxu0 0
  %2156 = vmatprep.subr.bf16.mxu0 0
  %2157 = vmatpush2.bf16.msra.mxu0 0
  %2158 = vmatprep.subr.bf16.mxu0 0
  %2159 = vmatpush2.bf16.msra.mxu0 0
  %2160 = vmatprep.mubr.bf16.mxu0 0
  %2161 = vmatmul.mubr.bf16.gmra.mxu0 %v2126
  %v2162 = vpop.f32.mrf.mxu0
  %v2163 = vadd.f32 0.0, %v2162
  %v2164 = vpop.f32.mrf.mxu0
  %v2165 = vpop.f32.mrf.mxu0
  %v2166 = vadd.f32 0.0, %v2165
  %v2167 = vpop.f32.mrf.mxu0
  %2168 = vdwg.mxu0
  %v2169 = vmul.f32 %v2163, 0.5
  %v2170 = vmul.f32 %v2166, 0.5
  %v2171 = vmul.f32 %v2163, 0.044715
  %v2172 = vmul.f32 %v2166, 0.044715
  %v2173 = vmul.f32 %v2171, %v2163
  %v2174 = vmul.f32 %v2172, %v2166
  %v2175 = vmul.f32 %v2173, %v2163
  %v2176 = vmul.f32 %v2174, %v2166
  %v2177 = vadd.f32 %v2163, %v2175
  %v2178 = vadd.f32 %v2166, %v2176
  %v2179 = vmul.f32 %v2177, 0.7978846
  %v2180 = vmul.f32 %v2178, 0.7978846
  %v2181 = vtanh.pop %v2179
  %v2182 = vtanh.pop %v2180
  %v2183 = vadd.f32 %v2181, 1.0
  %v2184 = vadd.f32 %v2182, 1.0
  %v2185 = vmul.f32 %v2169, %v2183
  %v2186 = vmul.f32 %v2170, %v2184
  %v2187 = vpack.c.bf16 %v2186, %v2185
  %s2188 = scalar_lea.vmem %s9, 128
  %v2189 = vld [vmem:[%s2188] sm:$0xf]
  %v2190 = vld [vmem:[%s2188 + $0x4] sm:$0xf]
  %v2191 = vld [vmem:[%s2188 + $0x8] sm:$0xf]
  %v2192 = vld [vmem:[%s2188 + $0xc] sm:$0xf]
  %v2193 = vld [vmem:[%s2188 + $0x10] sm:$0xf]
  %v2194 = vld [vmem:[%s2188 + $0x14] sm:$0xf]
  %v2195 = vld [vmem:[%s2188 + $0x18] sm:$0xf]
  %v2196 = vld [vmem:[%s2188 + $0x1c] sm:$0xf]
  %v2197 = vld [vmem:[%s2188 + $0x20] sm:$0xf]
  %v2198 = vld [vmem:[%s2188 + $0x24] sm:$0xf]
  %v2199 = vld [vmem:[%s2188 + $0x28] sm:$0xf]
  %v2200 = vld [vmem:[%s2188 + $0x2c] sm:$0xf]
  %v2201 = vld [vmem:[%s2188 + $0x30] sm:$0xf]
  %v2202 = vld [vmem:[%s2188 + $0x34] sm:$0xf]
  %v2203 = vld [vmem:[%s2188 + $0x38] sm:$0xf]
  %v2204 = vld [vmem:[%s2188 + $0x3c] sm:$0xf]
  %v2221 = vunpack.c.l.b16 %v2189
  %v2222 = vunpack.c.l.b16 %v2190
  %v2223 = vunpack.c.l.b16 %v2191
  %v2224 = vunpack.c.l.b16 %v2192
  %v2225 = vunpack.c.l.b16 %v2193
  %v2226 = vunpack.c.l.b16 %v2194
  %v2227 = vunpack.c.l.b16 %v2195
  %v2228 = vunpack.c.l.b16 %v2196
  %v2229 = vunpack.c.l.b16 %v2197
  %v2230 = vunpack.c.l.b16 %v2198
  %v2231 = vunpack.c.l.b16 %v2199
  %v2232 = vunpack.c.l.b16 %v2200
  %v2233 = vunpack.c.l.b16 %v2201
  %v2234 = vunpack.c.l.b16 %v2202
  %v2235 = vunpack.c.l.b16 %v2203
  %v2236 = vunpack.c.l.b16 %v2204
  %v2237 = vpack.c.b16 %v2222, %v2221
  %v2238 = vpack.c.b16 %v2224, %v2223
  %v2239 = vpack.c.b16 %v2226, %v2225
  %v2240 = vpack.c.b16 %v2228, %v2227
  %v2241 = vpack.c.b16 %v2230, %v2229
  %v2242 = vpack.c.b16 %v2232, %v2231
  %v2243 = vpack.c.b16 %v2234, %v2233
  %v2244 = vpack.c.b16 %v2236, %v2235
  %2253 = vmatprep.subr.bf16.mxu0 0
  %2254 = vmatpush1.bf16.msra.mxu0 %v2244
  %2255 = vmatprep.subr.bf16.mxu0 0
  %2256 = vmatpush1.bf16.msra.mxu0 %v2243
  %2257 = vmatprep.subr.bf16.mxu0 0
  %2258 = vmatpush1.bf16.msra.mxu0 %v2242
  %2259 = vmatprep.subr.bf16.mxu0 0
  %2260 = vmatpush1.bf16.msra.mxu0 %v2241
  %2261 = vmatprep.subr.bf16.mxu0 0
  %2262 = vmatpush1.bf16.msra.mxu0 %v2240
  %2263 = vmatprep.subr.bf16.mxu0 0
  %2264 = vmatpush1.bf16.msra.mxu0 %v2239
  %2265 = vmatprep.subr.bf16.mxu0 0
  %2266 = vmatpush1.bf16.msra.mxu0 %v2238
  %2267 = vmatprep.subr.bf16.mxu0 0
  %2268 = vmatpush1.bf16.msra.mxu0 %v2237
  %2269 = vmatprep.subr.bf16.mxu0 0
  %2270 = vmatpush2.bf16.msra.mxu0 0
  %2271 = vmatprep.subr.bf16.mxu0 0
  %2272 = vmatpush2.bf16.msra.mxu0 0
  %2273 = vmatprep.subr.bf16.mxu0 0
  %2274 = vmatpush2.bf16.msra.mxu0 0
  %2275 = vmatprep.subr.bf16.mxu0 0
  %2276 = vmatpush2.bf16.msra.mxu0 0
  %2277 = vmatprep.subr.bf16.mxu0 0
  %2278 = vmatpush2.bf16.msra.mxu0 0
  %2279 = vmatprep.subr.bf16.mxu0 0
  %2280 = vmatpush2.bf16.msra.mxu0 0
  %2281 = vmatprep.subr.bf16.mxu0 0
  %2282 = vmatpush2.bf16.msra.mxu0 0
  %2283 = vmatprep.subr.bf16.mxu0 0
  %2284 = vmatpush2.bf16.msra.mxu0 0
  %2285 = vmatprep.mubr.bf16.mxu0 0
  %2286 = vmatmul.mubr.bf16.gmra.mxu0 %v2187
  %v2287 = vpop.f32.mrf.mxu0
  %v2288 = vadd.f32 0.0, %v2287
  %v2289 = vpop.f32.mrf.mxu0
  %v2290 = vpop.f32.mrf.mxu0
  %v2291 = vadd.f32 0.0, %v2290
  %v2292 = vpop.f32.mrf.mxu0
  %2293 = vdwg.mxu0
  %v2294 = vadd.f32 %v2069, %v2288
  %v2295 = vadd.f32 %v2070, %v2291
  %s2296 = scalar_lea.vmem %s4, 3
  %v2297 = vld [vmem:[%s2296] sm:$0x1]
  %v2298 = vsel %vm48, %v2294, 0.0
  %2299 = vadd.xlane.f32.xlu0 %v2298
  %v2300 = vpop.xlane.xlu0 %2299
  %v2301 = vsel %vm48, %v2295, 0.0
  %2302 = vadd.xlane.f32.xlu0 %v2301
  %v2303 = vpop.xlane.xlu0 %2302
  %v2304 = vmul.f32 %v2300, %v55
  %v2305 = vmul.f32 %v2303, %v55
  %v2306 = vsub.f32 %v2294, %v2304
  %v2307 = vsub.f32 %v2295, %v2305
  %v2308 = vmul.f32 %v2306, %v2306
  %v2309 = vmul.f32 %v2307, %v2307
  %v2310 = vsel %vm48, %v2308, 0.0
  %2311 = vadd.xlane.f32.xlu0 %v2310
  %v2312 = vpop.xlane.xlu0 %2311
  %v2313 = vsel %vm48, %v2309, 0.0
  %2314 = vadd.xlane.f32.xlu0 %v2313
  %v2315 = vpop.xlane.xlu0 %2314
  %v2316 = vmul.f32 %v2312, %v55
  %v2317 = vmul.f32 %v2315, %v55
  %v2318 = vadd.f32 %v2316, 1e-05
  %v2319 = vadd.f32 %v2317, 1e-05
  %v2320 = vrsqrt.pop %v2318
  %v2321 = vrsqrt.pop %v2319
  %v2322 = vmul.f32 %v2306, %v2320
  %v2323 = vmul.f32 %v2307, %v2321
  %v2325 = vlaneseq
  %v2326 = vshrl.u32 %v2325, 7
  %v2327 = vsub.s32 0, %v2326
  %v2328 = vrot.slane %v2297, %v2327
  %v2330 = vmul.f32 %v2322, %v2328
  %v2331 = vmul.f32 %v2323, %v2328
  %v2332 = vpack.c.bf16 %v2331, %v2330
  %s2333 = scalar_lea.vmem %s5, 96
  %v2334 = vld [vmem:[%s2333] sm:$0xff]
  %v2335 = vld [vmem:[%s2333 + $0x8] sm:$0xff]
  %v2336 = vld [vmem:[%s2333 + $0x10] sm:$0xff]
  %v2337 = vld [vmem:[%s2333 + $0x18] sm:$0xff]
  %v2342 = vunpack.c.l.b16 %v2334
  %v2343 = vunpack.c.h.b16 %v2334
  %v2344 = vunpack.c.l.b16 %v2335
  %v2345 = vunpack.c.h.b16 %v2335
  %v2346 = vunpack.c.l.b16 %v2336
  %v2347 = vunpack.c.h.b16 %v2336
  %v2348 = vunpack.c.l.b16 %v2337
  %v2349 = vunpack.c.h.b16 %v2337
  %v2350 = vpack.c.b16 %v2344, %v2342
  %v2351 = vpack.c.b16 %v2345, %v2343
  %v2352 = vpack.c.b16 %v2348, %v2346
  %v2353 = vpack.c.b16 %v2349, %v2347
  %v2359 = vsel %vm48, %v2332, 0
  %2361 = vmatprep.subr.bf16.mxu0 0
  %2362 = vmatpush1.bf16.msra.mxu0 0
  %2363 = vmatprep.subr.bf16.mxu0 0
  %2364 = vmatpush1.bf16.msra.mxu0 0
  %2365 = vmatprep.subr.bf16.mxu0 0
  %2366 = vmatpush1.bf16.msra.mxu0 0
  %2367 = vmatprep.subr.bf16.mxu0 0
  %2368 = vmatpush1.bf16.msra.mxu0 0
  %2369 = vmatprep.subr.bf16.mxu0 0
  %2370 = vmatpush1.bf16.msra.mxu0 0
  %2371 = vmatprep.subr.bf16.mxu0 0
  %2372 = vmatpush1.bf16.msra.mxu0 0
  %2373 = vmatprep.subr.bf16.mxu0 %v2353
  %2374 = vmatpush1.bf16.msra.mxu0 %v2352
  %2375 = vmatprep.subr.bf16.mxu0 %v2351
  %2376 = vmatpush1.bf16.msra.mxu0 %v2350
  %2377 = vmatprep.subr.bf16.mxu0 0
  %2378 = vmatpush2.bf16.msra.mxu0 0
  %2379 = vmatprep.subr.bf16.mxu0 0
  %2380 = vmatpush2.bf16.msra.mxu0 0
  %2381 = vmatprep.subr.bf16.mxu0 0
  %2382 = vmatpush2.bf16.msra.mxu0 0
  %2383 = vmatprep.subr.bf16.mxu0 0
  %2384 = vmatpush2.bf16.msra.mxu0 0
  %2385 = vmatprep.subr.bf16.mxu0 0
  %2386 = vmatpush2.bf16.msra.mxu0 0
  %2387 = vmatprep.subr.bf16.mxu0 0
  %2388 = vmatpush2.bf16.msra.mxu0 0
  %2389 = vmatprep.subr.bf16.mxu0 0
  %2390 = vmatpush2.bf16.msra.mxu0 0
  %2391 = vmatprep.subr.bf16.mxu0 0
  %2392 = vmatpush2.bf16.msra.mxu0 0
  %2393 = vmatprep.mubr.bf16.mxu0 0
  %2394 = vmatmul.mubr.bf16.gmra.mxu0 %v2359
  %v2395 = vpop.f32.mrf.mxu0
  %v2396 = vadd.f32 0.0, %v2395
  %v2397 = vpop.f32.mrf.mxu0
  %v2398 = vadd.f32 0.0, %v2397
  %v2399 = vpop.f32.mrf.mxu0
  %v2400 = vadd.f32 0.0, %v2399
  %v2401 = vpop.f32.mrf.mxu0
  %v2402 = vadd.f32 0.0, %v2401
  %2403 = vdwg.mxu0
  %v2404 = vmul.f32 %v2396, %v1548
  %v2405 = vmul.f32 %v2400, %v1549
  %v2406 = vmul.f32 %v2396, %v1669
  %v2407 = vmul.f32 %v2400, %v1671
  %2410 = vrot.lane.b32.xlu0 %v2406, 32
  %v2411 = vpop.permute.xlu0 %2410
  %2412 = vrot.lane.b32.xlu0 %v2407, 32
  %v2413 = vpop.permute.xlu0 %2412
  %v2416 = vadd.f32 %v2404, %v2411
  %v2417 = vadd.f32 %v2405, %v2413
  %v2418 = vmul.f32 %v2396, %v1689
  %v2419 = vmul.f32 %v2400, %v1691
  %v2420 = vmul.f32 %v2398, %v1551
  %v2421 = vmul.f32 %v2402, %v1552
  %2424 = vrot.lane.b32.xlu0 %v2420, 32
  %v2425 = vpop.permute.xlu0 %2424
  %2426 = vrot.lane.b32.xlu0 %v2421, 32
  %v2427 = vpop.permute.xlu0 %2426
  %v2430 = vadd.f32 %v2418, %v2425
  %v2431 = vadd.f32 %v2419, %v2427
  %s2432 = scalar_lea.vmem %s6, 48
  %v2433 = vld [vmem:[%s2432] sm:$0xf]
  %v2434 = vld [vmem:[%s2432 + $0x4] sm:$0xf]
  %v2435 = vld [vmem:[%s2432 + $0x8] sm:$0xf]
  %v2436 = vld [vmem:[%s2432 + $0xc] sm:$0xf]
  %v2437 = vpack.c.bf16 %v2417, %v2416
  %v2438 = vpack.c.bf16 %v2431, %v2430
  %v2439 = vpack.c.bf16 %v2400, %v2396
  %2441 = vrot.lane.b32.xlu0 %v2438, 96
  %v2442 = vpop.permute.xlu0 %2441
  %v2444 = vsel %vm209, %v2437, 0
  %v2447 = vsel %vm209, %v2442, 0
  %2449 = vmatprep.subr.bf16.mxu0 0
  %2450 = vmatpush1.bf16.xpose.msra.mxu0 0
  %2451 = vmatprep.subr.bf16.mxu0 0
  %2452 = vmatpush1.bf16.xpose.msra.mxu0 0
  %2453 = vmatprep.subr.bf16.mxu0 0
  %2454 = vmatpush1.bf16.xpose.msra.mxu0 0
  %2455 = vmatprep.subr.bf16.mxu0 0
  %2456 = vmatpush1.bf16.xpose.msra.mxu0 0
  %2457 = vmatprep.subr.bf16.mxu0 0
  %2458 = vmatpush1.bf16.xpose.msra.mxu0 0
  %2459 = vmatprep.subr.bf16.mxu0 0
  %2460 = vmatpush1.bf16.xpose.msra.mxu0 0
  %2461 = vmatprep.subr.bf16.mxu0 0
  %2462 = vmatpush1.bf16.xpose.msra.mxu0 0
  %2463 = vmatprep.subr.bf16.mxu0 0
  %2464 = vmatpush1.bf16.xpose.msra.mxu0 %v2447
  %2465 = vmatprep.subr.bf16.mxu0 0
  %2466 = vmatpush2.bf16.xpose.msra.mxu0 0
  %2467 = vmatprep.subr.bf16.mxu0 0
  %2468 = vmatpush2.bf16.xpose.msra.mxu0 0
  %2469 = vmatprep.subr.bf16.mxu0 0
  %2470 = vmatpush2.bf16.xpose.msra.mxu0 0
  %2471 = vmatprep.subr.bf16.mxu0 0
  %2472 = vmatpush2.bf16.xpose.msra.mxu0 0
  %2473 = vmatprep.subr.bf16.mxu0 0
  %2474 = vmatpush2.bf16.xpose.msra.mxu0 0
  %2475 = vmatprep.subr.bf16.mxu0 0
  %2476 = vmatpush2.bf16.xpose.msra.mxu0 0
  %2477 = vmatprep.subr.bf16.mxu0 0
  %2478 = vmatpush2.bf16.xpose.msra.mxu0 0
  %2479 = vmatprep.subr.bf16.mxu0 0
  %2480 = vmatpush2.bf16.xpose.msra.mxu0 0
  %2481 = vmatprep.mubr.bf16.mxu0 0
  %2482 = vmatmul.mubr.bf16.gmra.mxu0 %v2444
  %v2483 = vpop.f32.mrf.mxu0
  %v2484 = vadd.f32 0.0, %v2483
  %v2485 = vpop.f32.mrf.mxu0
  %v2486 = vpop.f32.mrf.mxu0
  %v2487 = vadd.f32 0.0, %v2486
  %v2488 = vpop.f32.mrf.mxu0
  %2489 = vdwg.mxu0
  %v2490 = vmul.f32 %v2484, 0.25
  %v2491 = vmul.f32 %v2487, 0.25
  %v2492 = vadd.f32 %v2490, %v1554
  %v2493 = vadd.f32 %v2491, %v1555
  %v2494 = vsel %vm209, %v2492, -inf
  %2495 = vmax.xlane.f32.xlu0 %v2494
  %v2496 = vpop.xlane.xlu0 %2495
  %v2497 = vsel %vm209, %v2493, -inf
  %2498 = vmax.xlane.f32.xlu0 %v2497
  %v2499 = vpop.xlane.xlu0 %2498
  %v2500 = vsub.f32 %v2492, %v2496
  %v2501 = vsub.f32 %v2493, %v2499
  %v2502 = vmul.f32 %v2500, 1.442695
  %v2503 = vpow.pop %v2502
  %v2504 = vmul.f32 %v2501, 1.442695
  %v2505 = vpow.pop %v2504
  %v2506 = vsel %vm209, %v2503, 0.0
  %2507 = vadd.xlane.f32.xlu0 %v2506
  %v2508 = vpop.xlane.xlu0 %2507
  %v2509 = vsel %vm209, %v2505, 0.0
  %2510 = vadd.xlane.f32.xlu0 %v2509
  %v2511 = vpop.xlane.xlu0 %2510
  %v2512 = vrcp.pop %v2508
  %v2513 = vrcp.pop %v2511
  %v2514 = vmul.f32 %v2503, %v2512
  %v2515 = vmul.f32 %v2505, %v2513
  %v2516 = vpack.c.bf16 %v2515, %v2514
  %2518 = vrot.lane.b32.xlu0 %v2439, 64
  %v2519 = vpop.permute.xlu0 %2518
  %v2522 = vsel %vm209, %v2516, 0
  %2524 = vmatprep.subr.bf16.mxu0 0
  %2525 = vmatpush1.bf16.msra.mxu0 0
  %2526 = vmatprep.subr.bf16.mxu0 0
  %2527 = vmatpush1.bf16.msra.mxu0 0
  %2528 = vmatprep.subr.bf16.mxu0 0
  %2529 = vmatpush1.bf16.msra.mxu0 0
  %2530 = vmatprep.subr.bf16.mxu0 0
  %2531 = vmatpush1.bf16.msra.mxu0 0
  %2532 = vmatprep.subr.bf16.mxu0 0
  %2533 = vmatpush1.bf16.msra.mxu0 0
  %2534 = vmatprep.subr.bf16.mxu0 0
  %2535 = vmatpush1.bf16.msra.mxu0 0
  %2536 = vmatprep.subr.bf16.mxu0 0
  %2537 = vmatpush1.bf16.msra.mxu0 0
  %2538 = vmatprep.subr.bf16.mxu0 0
  %2539 = vmatpush1.bf16.msra.mxu0 %v2519
  %2540 = vmatprep.subr.bf16.mxu0 0
  %2541 = vmatpush2.bf16.msra.mxu0 0
  %2542 = vmatprep.subr.bf16.mxu0 0
  %2543 = vmatpush2.bf16.msra.mxu0 0
  %2544 = vmatprep.subr.bf16.mxu0 0
  %2545 = vmatpush2.bf16.msra.mxu0 0
  %2546 = vmatprep.subr.bf16.mxu0 0
  %2547 = vmatpush2.bf16.msra.mxu0 0
  %2548 = vmatprep.subr.bf16.mxu0 0
  %2549 = vmatpush2.bf16.msra.mxu0 0
  %2550 = vmatprep.subr.bf16.mxu0 0
  %2551 = vmatpush2.bf16.msra.mxu0 0
  %2552 = vmatprep.subr.bf16.mxu0 0
  %2553 = vmatpush2.bf16.msra.mxu0 0
  %2554 = vmatprep.subr.bf16.mxu0 0
  %2555 = vmatpush2.bf16.msra.mxu0 0
  %2556 = vmatprep.mubr.bf16.mxu0 0
  %2557 = vmatmul.mubr.bf16.gmra.mxu0 %v2522
  %v2558 = vpop.f32.mrf.mxu0
  %v2559 = vadd.f32 0.0, %v2558
  %v2560 = vpop.f32.mrf.mxu0
  %v2561 = vpop.f32.mrf.mxu0
  %v2562 = vadd.f32 0.0, %v2561
  %v2563 = vpop.f32.mrf.mxu0
  %2564 = vdwg.mxu0
  %v2565 = vpack.c.bf16 %v2562, %v2559
  %2567 = vrot.lane.b32.xlu0 %v2437, 112
  %v2568 = vpop.permute.xlu0 %2567
  %2569 = vrot.lane.b32.xlu0 %v2438, 80
  %v2570 = vpop.permute.xlu0 %2569
  %v2572 = vsel %vm209, %v2568, 0
  %v2575 = vsel %vm209, %v2570, 0
  %2577 = vmatprep.subr.bf16.mxu0 0
  %2578 = vmatpush1.bf16.xpose.msra.mxu0 0
  %2579 = vmatprep.subr.bf16.mxu0 0
  %2580 = vmatpush1.bf16.xpose.msra.mxu0 0
  %2581 = vmatprep.subr.bf16.mxu0 0
  %2582 = vmatpush1.bf16.xpose.msra.mxu0 0
  %2583 = vmatprep.subr.bf16.mxu0 0
  %2584 = vmatpush1.bf16.xpose.msra.mxu0 0
  %2585 = vmatprep.subr.bf16.mxu0 0
  %2586 = vmatpush1.bf16.xpose.msra.mxu0 0
  %2587 = vmatprep.subr.bf16.mxu0 0
  %2588 = vmatpush1.bf16.xpose.msra.mxu0 0
  %2589 = vmatprep.subr.bf16.mxu0 0
  %2590 = vmatpush1.bf16.xpose.msra.mxu0 0
  %2591 = vmatprep.subr.bf16.mxu0 0
  %2592 = vmatpush1.bf16.xpose.msra.mxu0 %v2575
  %2593 = vmatprep.subr.bf16.mxu0 0
  %2594 = vmatpush2.bf16.xpose.msra.mxu0 0
  %2595 = vmatprep.subr.bf16.mxu0 0
  %2596 = vmatpush2.bf16.xpose.msra.mxu0 0
  %2597 = vmatprep.subr.bf16.mxu0 0
  %2598 = vmatpush2.bf16.xpose.msra.mxu0 0
  %2599 = vmatprep.subr.bf16.mxu0 0
  %2600 = vmatpush2.bf16.xpose.msra.mxu0 0
  %2601 = vmatprep.subr.bf16.mxu0 0
  %2602 = vmatpush2.bf16.xpose.msra.mxu0 0
  %2603 = vmatprep.subr.bf16.mxu0 0
  %2604 = vmatpush2.bf16.xpose.msra.mxu0 0
  %2605 = vmatprep.subr.bf16.mxu0 0
  %2606 = vmatpush2.bf16.xpose.msra.mxu0 0
  %2607 = vmatprep.subr.bf16.mxu0 0
  %2608 = vmatpush2.bf16.xpose.msra.mxu0 0
  %2609 = vmatprep.mubr.bf16.mxu0 0
  %2610 = vmatmul.mubr.bf16.gmra.mxu0 %v2572
  %v2611 = vpop.f32.mrf.mxu0
  %v2612 = vadd.f32 0.0, %v2611
  %v2613 = vpop.f32.mrf.mxu0
  %v2614 = vpop.f32.mrf.mxu0
  %v2615 = vadd.f32 0.0, %v2614
  %v2616 = vpop.f32.mrf.mxu0
  %2617 = vdwg.mxu0
  %v2618 = vmul.f32 %v2612, 0.25
  %v2619 = vmul.f32 %v2615, 0.25
  %v2620 = vadd.f32 %v2618, %v1554
  %v2621 = vadd.f32 %v2619, %v1555
  %v2622 = vsel %vm209, %v2620, -inf
  %2623 = vmax.xlane.f32.xlu0 %v2622
  %v2624 = vpop.xlane.xlu0 %2623
  %v2625 = vsel %vm209, %v2621, -inf
  %2626 = vmax.xlane.f32.xlu0 %v2625
  %v2627 = vpop.xlane.xlu0 %2626
  %v2628 = vsub.f32 %v2620, %v2624
  %v2629 = vsub.f32 %v2621, %v2627
  %v2630 = vmul.f32 %v2628, 1.442695
  %v2631 = vpow.pop %v2630
  %v2632 = vmul.f32 %v2629, 1.442695
  %v2633 = vpow.pop %v2632
  %v2634 = vsel %vm209, %v2631, 0.0
  %2635 = vadd.xlane.f32.xlu0 %v2634
  %v2636 = vpop.xlane.xlu0 %2635
  %v2637 = vsel %vm209, %v2633, 0.0
  %2638 = vadd.xlane.f32.xlu0 %v2637
  %v2639 = vpop.xlane.xlu0 %2638
  %v2640 = vrcp.pop %v2636
  %v2641 = vrcp.pop %v2639
  %v2642 = vmul.f32 %v2631, %v2640
  %v2643 = vmul.f32 %v2633, %v2641
  %v2644 = vpack.c.bf16 %v2643, %v2642
  %2645 = vrot.lane.b32.xlu0 %v2439, 48
  %v2646 = vpop.permute.xlu0 %2645
  %v2649 = vsel %vm209, %v2644, 0
  %2651 = vmatprep.subr.bf16.mxu0 0
  %2652 = vmatpush1.bf16.msra.mxu0 0
  %2653 = vmatprep.subr.bf16.mxu0 0
  %2654 = vmatpush1.bf16.msra.mxu0 0
  %2655 = vmatprep.subr.bf16.mxu0 0
  %2656 = vmatpush1.bf16.msra.mxu0 0
  %2657 = vmatprep.subr.bf16.mxu0 0
  %2658 = vmatpush1.bf16.msra.mxu0 0
  %2659 = vmatprep.subr.bf16.mxu0 0
  %2660 = vmatpush1.bf16.msra.mxu0 0
  %2661 = vmatprep.subr.bf16.mxu0 0
  %2662 = vmatpush1.bf16.msra.mxu0 0
  %2663 = vmatprep.subr.bf16.mxu0 0
  %2664 = vmatpush1.bf16.msra.mxu0 0
  %2665 = vmatprep.subr.bf16.mxu0 0
  %2666 = vmatpush1.bf16.msra.mxu0 %v2646
  %2667 = vmatprep.subr.bf16.mxu0 0
  %2668 = vmatpush2.bf16.msra.mxu0 0
  %2669 = vmatprep.subr.bf16.mxu0 0
  %2670 = vmatpush2.bf16.msra.mxu0 0
  %2671 = vmatprep.subr.bf16.mxu0 0
  %2672 = vmatpush2.bf16.msra.mxu0 0
  %2673 = vmatprep.subr.bf16.mxu0 0
  %2674 = vmatpush2.bf16.msra.mxu0 0
  %2675 = vmatprep.subr.bf16.mxu0 0
  %2676 = vmatpush2.bf16.msra.mxu0 0
  %2677 = vmatprep.subr.bf16.mxu0 0
  %2678 = vmatpush2.bf16.msra.mxu0 0
  %2679 = vmatprep.subr.bf16.mxu0 0
  %2680 = vmatpush2.bf16.msra.mxu0 0
  %2681 = vmatprep.subr.bf16.mxu0 0
  %2682 = vmatpush2.bf16.msra.mxu0 0
  %2683 = vmatprep.mubr.bf16.mxu0 0
  %2684 = vmatmul.mubr.bf16.gmra.mxu0 %v2649
  %v2685 = vpop.f32.mrf.mxu0
  %v2686 = vadd.f32 0.0, %v2685
  %v2687 = vpop.f32.mrf.mxu0
  %v2688 = vpop.f32.mrf.mxu0
  %v2689 = vadd.f32 0.0, %v2688
  %v2690 = vpop.f32.mrf.mxu0
  %2691 = vdwg.mxu0
  %v2692 = vpack.c.bf16 %v2689, %v2686
  %v2695 = vunpack.c.l.b16 %v2435
  %v2696 = vunpack.c.l.b16 %v2436
  %v2697 = vpack.c.b16 %v2696, %v2695
  %v2700 = vsel %vm209, %v2692, 0
  %2702 = vmatprep.subr.bf16.mxu0 0
  %2703 = vmatpush1.bf16.msra.mxu0 0
  %2704 = vmatprep.subr.bf16.mxu0 0
  %2705 = vmatpush1.bf16.msra.mxu0 0
  %2706 = vmatprep.subr.bf16.mxu0 0
  %2707 = vmatpush1.bf16.msra.mxu0 0
  %2708 = vmatprep.subr.bf16.mxu0 0
  %2709 = vmatpush1.bf16.msra.mxu0 0
  %2710 = vmatprep.subr.bf16.mxu0 0
  %2711 = vmatpush1.bf16.msra.mxu0 0
  %2712 = vmatprep.subr.bf16.mxu0 0
  %2713 = vmatpush1.bf16.msra.mxu0 0
  %2714 = vmatprep.subr.bf16.mxu0 0
  %2715 = vmatpush1.bf16.msra.mxu0 0
  %2716 = vmatprep.subr.bf16.mxu0 0
  %2717 = vmatpush1.bf16.msra.mxu0 %v2697
  %2718 = vmatprep.subr.bf16.mxu0 0
  %2719 = vmatpush2.bf16.msra.mxu0 0
  %2720 = vmatprep.subr.bf16.mxu0 0
  %2721 = vmatpush2.bf16.msra.mxu0 0
  %2722 = vmatprep.subr.bf16.mxu0 0
  %2723 = vmatpush2.bf16.msra.mxu0 0
  %2724 = vmatprep.subr.bf16.mxu0 0
  %2725 = vmatpush2.bf16.msra.mxu0 0
  %2726 = vmatprep.subr.bf16.mxu0 0
  %2727 = vmatpush2.bf16.msra.mxu0 0
  %2728 = vmatprep.subr.bf16.mxu0 0
  %2729 = vmatpush2.bf16.msra.mxu0 0
  %2730 = vmatprep.subr.bf16.mxu0 0
  %2731 = vmatpush2.bf16.msra.mxu0 0
  %2732 = vmatprep.subr.bf16.mxu0 0
  %2733 = vmatpush2.bf16.msra.mxu0 0
  %2734 = vmatprep.mubr.bf16.mxu0 0
  %2735 = vmatmul.mubr.bf16.gmra.mxu0 %v2700
  %v2736 = vpop.f32.mrf.mxu0
  %v2737 = vadd.f32 0.0, %v2736
  %v2738 = vpop.f32.mrf.mxu0
  %v2739 = vpop.f32.mrf.mxu0
  %v2740 = vadd.f32 0.0, %v2739
  %v2741 = vpop.f32.mrf.mxu0
  %2742 = vdwg.mxu0
  %v2745 = vunpack.c.l.b16 %v2433
  %v2746 = vunpack.c.l.b16 %v2434
  %v2747 = vpack.c.b16 %v2746, %v2745
  %v2750 = vsel %vm209, %v2565, 0
  %2752 = vmatprep.subr.bf16.mxu0 0
  %2753 = vmatpush1.bf16.msra.mxu0 0
  %2754 = vmatprep.subr.bf16.mxu0 0
  %2755 = vmatpush1.bf16.msra.mxu0 0
  %2756 = vmatprep.subr.bf16.mxu0 0
  %2757 = vmatpush1.bf16.msra.mxu0 0
  %2758 = vmatprep.subr.bf16.mxu0 0
  %2759 = vmatpush1.bf16.msra.mxu0 0
  %2760 = vmatprep.subr.bf16.mxu0 0
  %2761 = vmatpush1.bf16.msra.mxu0 0
  %2762 = vmatprep.subr.bf16.mxu0 0
  %2763 = vmatpush1.bf16.msra.mxu0 0
  %2764 = vmatprep.subr.bf16.mxu0 0
  %2765 = vmatpush1.bf16.msra.mxu0 0
  %2766 = vmatprep.subr.bf16.mxu0 0
  %2767 = vmatpush1.bf16.msra.mxu0 %v2747
  %2768 = vmatprep.subr.bf16.mxu0 0
  %2769 = vmatpush2.bf16.msra.mxu0 0
  %2770 = vmatprep.subr.bf16.mxu0 0
  %2771 = vmatpush2.bf16.msra.mxu0 0
  %2772 = vmatprep.subr.bf16.mxu0 0
  %2773 = vmatpush2.bf16.msra.mxu0 0
  %2774 = vmatprep.subr.bf16.mxu0 0
  %2775 = vmatpush2.bf16.msra.mxu0 0
  %2776 = vmatprep.subr.bf16.mxu0 0
  %2777 = vmatpush2.bf16.msra.mxu0 0
  %2778 = vmatprep.subr.bf16.mxu0 0
  %2779 = vmatpush2.bf16.msra.mxu0 0
  %2780 = vmatprep.subr.bf16.mxu0 0
  %2781 = vmatpush2.bf16.msra.mxu0 0
  %2782 = vmatprep.subr.bf16.mxu0 0
  %2783 = vmatpush2.bf16.msra.mxu0 0
  %2784 = vmatprep.mubr.bf16.mxu0 0
  %2785 = vmatmul.mubr.bf16.gmra.mxu0 %v2750
  %v2786 = vpop.f32.mrf.mxu0
  %v2787 = vadd.f32 %v2737, %v2786
  %v2788 = vpop.f32.mrf.mxu0
  %v2789 = vpop.f32.mrf.mxu0
  %v2790 = vadd.f32 %v2740, %v2789
  %v2791 = vpop.f32.mrf.mxu0
  %2792 = vdwg.mxu0
  %v2793 = vadd.f32 %v2294, %v2787
  %v2794 = vadd.f32 %v2295, %v2790
  %s2795 = scalar_lea.vmem %s7, 3
  %v2796 = vld [vmem:[%s2795] sm:$0x1]
  %v2797 = vsel %vm48, %v2793, 0.0
  %2798 = vadd.xlane.f32.xlu0 %v2797
  %v2799 = vpop.xlane.xlu0 %2798
  %v2800 = vsel %vm48, %v2794, 0.0
  %2801 = vadd.xlane.f32.xlu0 %v2800
  %v2802 = vpop.xlane.xlu0 %2801
  %v2803 = vmul.f32 %v2799, %v55
  %v2804 = vmul.f32 %v2802, %v55
  %v2805 = vsub.f32 %v2793, %v2803
  %v2806 = vsub.f32 %v2794, %v2804
  %v2807 = vmul.f32 %v2805, %v2805
  %v2808 = vmul.f32 %v2806, %v2806
  %v2809 = vsel %vm48, %v2807, 0.0
  %2810 = vadd.xlane.f32.xlu0 %v2809
  %v2811 = vpop.xlane.xlu0 %2810
  %v2812 = vsel %vm48, %v2808, 0.0
  %2813 = vadd.xlane.f32.xlu0 %v2812
  %v2814 = vpop.xlane.xlu0 %2813
  %v2815 = vmul.f32 %v2811, %v55
  %v2816 = vmul.f32 %v2814, %v55
  %v2817 = vadd.f32 %v2815, 1e-05
  %v2818 = vadd.f32 %v2816, 1e-05
  %v2819 = vrsqrt.pop %v2817
  %v2820 = vrsqrt.pop %v2818
  %v2821 = vmul.f32 %v2805, %v2819
  %v2822 = vmul.f32 %v2806, %v2820
  %v2824 = vlaneseq
  %v2825 = vshrl.u32 %v2824, 7
  %v2826 = vsub.s32 0, %v2825
  %v2827 = vrot.slane %v2796, %v2826
  %v2829 = vmul.f32 %v2821, %v2827
  %v2830 = vmul.f32 %v2822, %v2827
  %v2831 = vpack.c.bf16 %v2830, %v2829
  %s2832 = scalar_lea.vmem %s8, 48
  %v2833 = vld [vmem:[%s2832] sm:$0xf]
  %v2834 = vld [vmem:[%s2832 + $0x4] sm:$0xf]
  %v2835 = vld [vmem:[%s2832 + $0x8] sm:$0xf]
  %v2836 = vld [vmem:[%s2832 + $0xc] sm:$0xf]
  %v2841 = vunpack.c.l.b16 %v2833
  %v2842 = vunpack.c.l.b16 %v2834
  %v2843 = vunpack.c.l.b16 %v2835
  %v2844 = vunpack.c.l.b16 %v2836
  %v2845 = vpack.c.b16 %v2842, %v2841
  %v2846 = vpack.c.b16 %v2844, %v2843
  %v2850 = vsel %vm48, %v2831, 0
  %2852 = vmatprep.subr.bf16.mxu0 0
  %2853 = vmatpush1.bf16.msra.mxu0 0
  %2854 = vmatprep.subr.bf16.mxu0 0
  %2855 = vmatpush1.bf16.msra.mxu0 0
  %2856 = vmatprep.subr.bf16.mxu0 0
  %2857 = vmatpush1.bf16.msra.mxu0 0
  %2858 = vmatprep.subr.bf16.mxu0 0
  %2859 = vmatpush1.bf16.msra.mxu0 0
  %2860 = vmatprep.subr.bf16.mxu0 0
  %2861 = vmatpush1.bf16.msra.mxu0 0
  %2862 = vmatprep.subr.bf16.mxu0 0
  %2863 = vmatpush1.bf16.msra.mxu0 0
  %2864 = vmatprep.subr.bf16.mxu0 0
  %2865 = vmatpush1.bf16.msra.mxu0 %v2846
  %2866 = vmatprep.subr.bf16.mxu0 0
  %2867 = vmatpush1.bf16.msra.mxu0 %v2845
  %2868 = vmatprep.subr.bf16.mxu0 0
  %2869 = vmatpush2.bf16.msra.mxu0 0
  %2870 = vmatprep.subr.bf16.mxu0 0
  %2871 = vmatpush2.bf16.msra.mxu0 0
  %2872 = vmatprep.subr.bf16.mxu0 0
  %2873 = vmatpush2.bf16.msra.mxu0 0
  %2874 = vmatprep.subr.bf16.mxu0 0
  %2875 = vmatpush2.bf16.msra.mxu0 0
  %2876 = vmatprep.subr.bf16.mxu0 0
  %2877 = vmatpush2.bf16.msra.mxu0 0
  %2878 = vmatprep.subr.bf16.mxu0 0
  %2879 = vmatpush2.bf16.msra.mxu0 0
  %2880 = vmatprep.subr.bf16.mxu0 0
  %2881 = vmatpush2.bf16.msra.mxu0 0
  %2882 = vmatprep.subr.bf16.mxu0 0
  %2883 = vmatpush2.bf16.msra.mxu0 0
  %2884 = vmatprep.mubr.bf16.mxu0 0
  %2885 = vmatmul.mubr.bf16.gmra.mxu0 %v2850
  %v2886 = vpop.f32.mrf.mxu0
  %v2887 = vadd.f32 0.0, %v2886
  %v2888 = vpop.f32.mrf.mxu0
  %v2889 = vpop.f32.mrf.mxu0
  %v2890 = vadd.f32 0.0, %v2889
  %v2891 = vpop.f32.mrf.mxu0
  %2892 = vdwg.mxu0
  %v2893 = vmul.f32 %v2887, 0.5
  %v2894 = vmul.f32 %v2890, 0.5
  %v2895 = vmul.f32 %v2887, 0.044715
  %v2896 = vmul.f32 %v2890, 0.044715
  %v2897 = vmul.f32 %v2895, %v2887
  %v2898 = vmul.f32 %v2896, %v2890
  %v2899 = vmul.f32 %v2897, %v2887
  %v2900 = vmul.f32 %v2898, %v2890
  %v2901 = vadd.f32 %v2887, %v2899
  %v2902 = vadd.f32 %v2890, %v2900
  %v2903 = vmul.f32 %v2901, 0.7978846
  %v2904 = vmul.f32 %v2902, 0.7978846
  %v2905 = vtanh.pop %v2903
  %v2906 = vtanh.pop %v2904
  %v2907 = vadd.f32 %v2905, 1.0
  %v2908 = vadd.f32 %v2906, 1.0
  %v2909 = vmul.f32 %v2893, %v2907
  %v2910 = vmul.f32 %v2894, %v2908
  %v2911 = vpack.c.bf16 %v2910, %v2909
  %s2912 = scalar_lea.vmem %s9, 192
  %v2913 = vld [vmem:[%s2912] sm:$0xf]
  %v2914 = vld [vmem:[%s2912 + $0x4] sm:$0xf]
  %v2915 = vld [vmem:[%s2912 + $0x8] sm:$0xf]
  %v2916 = vld [vmem:[%s2912 + $0xc] sm:$0xf]
  %v2917 = vld [vmem:[%s2912 + $0x10] sm:$0xf]
  %v2918 = vld [vmem:[%s2912 + $0x14] sm:$0xf]
  %v2919 = vld [vmem:[%s2912 + $0x18] sm:$0xf]
  %v2920 = vld [vmem:[%s2912 + $0x1c] sm:$0xf]
  %v2921 = vld [vmem:[%s2912 + $0x20] sm:$0xf]
  %v2922 = vld [vmem:[%s2912 + $0x24] sm:$0xf]
  %v2923 = vld [vmem:[%s2912 + $0x28] sm:$0xf]
  %v2924 = vld [vmem:[%s2912 + $0x2c] sm:$0xf]
  %v2925 = vld [vmem:[%s2912 + $0x30] sm:$0xf]
  %v2926 = vld [vmem:[%s2912 + $0x34] sm:$0xf]
  %v2927 = vld [vmem:[%s2912 + $0x38] sm:$0xf]
  %v2928 = vld [vmem:[%s2912 + $0x3c] sm:$0xf]
  %v2945 = vunpack.c.l.b16 %v2913
  %v2946 = vunpack.c.l.b16 %v2914
  %v2947 = vunpack.c.l.b16 %v2915
  %v2948 = vunpack.c.l.b16 %v2916
  %v2949 = vunpack.c.l.b16 %v2917
  %v2950 = vunpack.c.l.b16 %v2918
  %v2951 = vunpack.c.l.b16 %v2919
  %v2952 = vunpack.c.l.b16 %v2920
  %v2953 = vunpack.c.l.b16 %v2921
  %v2954 = vunpack.c.l.b16 %v2922
  %v2955 = vunpack.c.l.b16 %v2923
  %v2956 = vunpack.c.l.b16 %v2924
  %v2957 = vunpack.c.l.b16 %v2925
  %v2958 = vunpack.c.l.b16 %v2926
  %v2959 = vunpack.c.l.b16 %v2927
  %v2960 = vunpack.c.l.b16 %v2928
  %v2961 = vpack.c.b16 %v2946, %v2945
  %v2962 = vpack.c.b16 %v2948, %v2947
  %v2963 = vpack.c.b16 %v2950, %v2949
  %v2964 = vpack.c.b16 %v2952, %v2951
  %v2965 = vpack.c.b16 %v2954, %v2953
  %v2966 = vpack.c.b16 %v2956, %v2955
  %v2967 = vpack.c.b16 %v2958, %v2957
  %v2968 = vpack.c.b16 %v2960, %v2959
  %2977 = vmatprep.subr.bf16.mxu0 0
  %2978 = vmatpush1.bf16.msra.mxu0 %v2968
  %2979 = vmatprep.subr.bf16.mxu0 0
  %2980 = vmatpush1.bf16.msra.mxu0 %v2967
  %2981 = vmatprep.subr.bf16.mxu0 0
  %2982 = vmatpush1.bf16.msra.mxu0 %v2966
  %2983 = vmatprep.subr.bf16.mxu0 0
  %2984 = vmatpush1.bf16.msra.mxu0 %v2965
  %2985 = vmatprep.subr.bf16.mxu0 0
  %2986 = vmatpush1.bf16.msra.mxu0 %v2964
  %2987 = vmatprep.subr.bf16.mxu0 0
  %2988 = vmatpush1.bf16.msra.mxu0 %v2963
  %2989 = vmatprep.subr.bf16.mxu0 0
  %2990 = vmatpush1.bf16.msra.mxu0 %v2962
  %2991 = vmatprep.subr.bf16.mxu0 0
  %2992 = vmatpush1.bf16.msra.mxu0 %v2961
  %2993 = vmatprep.subr.bf16.mxu0 0
  %2994 = vmatpush2.bf16.msra.mxu0 0
  %2995 = vmatprep.subr.bf16.mxu0 0
  %2996 = vmatpush2.bf16.msra.mxu0 0
  %2997 = vmatprep.subr.bf16.mxu0 0
  %2998 = vmatpush2.bf16.msra.mxu0 0
  %2999 = vmatprep.subr.bf16.mxu0 0
  %3000 = vmatpush2.bf16.msra.mxu0 0
  %3001 = vmatprep.subr.bf16.mxu0 0
  %3002 = vmatpush2.bf16.msra.mxu0 0
  %3003 = vmatprep.subr.bf16.mxu0 0
  %3004 = vmatpush2.bf16.msra.mxu0 0
  %3005 = vmatprep.subr.bf16.mxu0 0
  %3006 = vmatpush2.bf16.msra.mxu0 0
  %3007 = vmatprep.subr.bf16.mxu0 0
  %3008 = vmatpush2.bf16.msra.mxu0 0
  %3009 = vmatprep.mubr.bf16.mxu0 0
  %3010 = vmatmul.mubr.bf16.gmra.mxu0 %v2911
  %v3011 = vpop.f32.mrf.mxu0
  %v3012 = vadd.f32 0.0, %v3011
  %v3013 = vpop.f32.mrf.mxu0
  %v3014 = vpop.f32.mrf.mxu0
  %v3015 = vadd.f32 0.0, %v3014
  %v3016 = vpop.f32.mrf.mxu0
  %3017 = vdwg.mxu0
  %v3018 = vadd.f32 %v2793, %v3012
  %v3019 = vadd.f32 %v2794, %v3015
  %s3020 = scalar_lea.vmem %s10, 1
  %v3021 = vld [vmem:[%s3020] sm:$0x1]
  %v3022 = vsel %vm48, %v3018, 0.0
  %3023 = vadd.xlane.f32.xlu0 %v3022
  %v3024 = vpop.xlane.xlu0 %3023
  %v3025 = vsel %vm48, %v3019, 0.0
  %3026 = vadd.xlane.f32.xlu0 %v3025
  %v3027 = vpop.xlane.xlu0 %3026
  %v3028 = vmul.f32 %v3024, %v55
  %v3029 = vmul.f32 %v3027, %v55
  %v3030 = vsub.f32 %v3018, %v3028
  %v3031 = vsub.f32 %v3019, %v3029
  %v3032 = vmul.f32 %v3030, %v3030
  %v3033 = vmul.f32 %v3031, %v3031
  %v3034 = vsel %vm48, %v3032, 0.0
  %3035 = vadd.xlane.f32.xlu0 %v3034
  %v3036 = vpop.xlane.xlu0 %3035
  %v3037 = vsel %vm48, %v3033, 0.0
  %3038 = vadd.xlane.f32.xlu0 %v3037
  %v3039 = vpop.xlane.xlu0 %3038
  %v3040 = vmul.f32 %v3036, %v55
  %v3041 = vmul.f32 %v3039, %v55
  %v3042 = vadd.f32 %v3040, 1e-05
  %v3043 = vadd.f32 %v3041, 1e-05
  %v3044 = vrsqrt.pop %v3042
  %v3045 = vrsqrt.pop %v3043
  %v3046 = vmul.f32 %v3030, %v3044
  %v3047 = vmul.f32 %v3031, %v3045
  %v3049 = vlaneseq
  %v3050 = vshrl.u32 %v3049, 7
  %v3051 = vsub.s32 0, %v3050
  %v3052 = vrot.slane %v3021, %v3051
  %v3054 = vmul.f32 %v3046, %v3052
  %v3055 = vmul.f32 %v3047, %v3052
  %s3056 = scalar_lea.vmem %s11, 16
  %3057 = vst.msk [vmem:[%s3056] sm:$0xff] %vm48, %v3054
  %3058 = vst.msk [vmem:[%s3056 + $0x8] sm:$0xff] %vm48, %v3055
  // Predicated region
  $region46: #{transformer_encoder_forward.1} parent=0 // pred_check
    _
  $region47: #{transformer_encoder_forward.1} parent=0 // pred_check_branch
    %3060 = sbr.rel (0) target = $region49
  $region48: #{transformer_encoder_forward.1} parent=0 // pred_region
    _
  $region49: #{transformer_encoder_forward.1} parent=0 // pred_fallthru
    _
  // Predicated region
  $region50: #{transformer_encoder_forward.1} parent=0 // pred_check
    _
  $region51: #{transformer_encoder_forward.1} parent=0 // pred_check_branch
    %3062 = sbr.rel (0) target = $region53
  $region52: #{transformer_encoder_forward.1} parent=0 // pred_region
    _
  $region53: #{transformer_encoder_forward.1} parent=0 // pred_fallthru
    _

</llo_original>
